<compile_context>
chip_gen: v6e
topology: v6e:2x2x1
jax: 0.10.0
libtpu: 0.0.40
codegen_flags: <defaults>
</compile_context>

<pallas_src>
import functools

import jax
import jax.numpy as jnp
import numpy as np
from jax.experimental import pallas as pl
from jax.experimental.pallas import tpu as pltpu

MAT_DIFF_LOSS_SCALE = 0.001


def _get_loss_kernel(pred_ref, target_ref, trans_ref, out_ref, *, batch, block_b, scale):
    pred = pred_ref[...].astype(jnp.float32)        # (TB, C) log-probs
    tgt = target_ref[...]                           # (TB, 1) int32 class ids
    trans = trans_ref[...]                          # (TB, d, d) bf16 / f32

    tb, num_classes = pred.shape
    d = trans.shape[-1]

    # --- F.nll_loss term: gather pred[b, target[b]] via one-hot lane mask ---
    lane = jax.lax.broadcasted_iota(jnp.int32, (tb, num_classes), 1)
    onehot = (lane == tgt).astype(jnp.float32)
    nll = -jnp.sum(pred * onehot, axis=1, keepdims=True)                          # (TB, 1)

    # --- feature-transform regularizer: ||A A^T - I||_F per sample (stable form) ---
    # MXU-friendly "nt" contraction; f32 accumulation.
    mm = jnp.einsum("bij,bkj->bik", trans, trans,
                    preferred_element_type=jnp.float32)                           # (TB, d, d) f32
    # Hoisted (d, d) identity mask, broadcast over the batch dim.
    ri = jax.lax.broadcasted_iota(jnp.int32, (d, d), 0)
    ci = jax.lax.broadcasted_iota(jnp.int32, (d, d), 1)
    eye = (ri == ci).astype(jnp.float32)                                          # (d, d)
    diff = mm - eye[None]                                                         # (TB, d, d)
    fro_sq = jnp.sum(jnp.sum(diff * diff, axis=2), axis=1, keepdims=True)         # (TB, 1)
    fro = jnp.sqrt(fro_sq)                                                        # (TB, 1)

    per_sample = nll + scale * fro                                                # (TB, 1)

    # Mask rows beyond the true batch (last block may be padded past B) BEFORE the
    # block reduction, so unspecified pad contents can never leak into the loss.
    i = pl.program_id(0)
    row = jax.lax.broadcasted_iota(jnp.int32, (tb, 1), 0)
    valid = (i * block_b + row) < batch
    per_sample = jnp.where(valid, per_sample, 0.0)

    # Per-block partial sum -> this block's own (1,1,1) output tile (keeps axis 'parallel').
    out_ref[...] = jnp.sum(per_sample, axis=0, keepdims=True)[None]


def get_loss(pred, target, trans_feat, mat_diff_loss_scale=MAT_DIFF_LOSS_SCALE, block_b=None):
    """Pallas implementation of PointNet get_loss.forward."""
    B, C = pred.shape
    d = trans_feat.shape[-1]

    pred = pred.astype(jnp.float32)
    target2d = target.astype(jnp.int32).reshape(B, 1)
    # trans_feat dtype is preserved (bf16 input halves HBM traffic; MXU accumulates in f32).
    tf_bytes = jnp.dtype(trans_feat.dtype).itemsize

    if block_b is None:
        # Live VMEM per row:
        #   2x double-buffered inputs: 2 * (d*d*tf_bytes + C*4 + 4)
        #   f32 intermediates (mm + diff + diff^2 worst case): ~3 * d*d*4
        # Budget 12 MiB -> stays inside v5e's 16 MiB default scoped VMEM with headroom,
        # and well inside v6e/v7x's 32 MiB defaults.
        budget = 12 * 1024 * 1024
        per_row = 2 * (d * d * tf_bytes + C * 4 + 4) + 3 * d * d * 4
        block_b = max(8, budget // per_row)

    # The kernel is MXU-push bound at these shapes; keep blocks modest (<=256).
    tb = min(B, int(block_b), 256)
    # Ensure >= 2 grid blocks whenever B permits, so the 'parallel' axis can be
    # sharded across both v7x TensorCores.
    if B > 8:
        half = (((B + 1) // 2) + 7) // 8 * 8
        tb = min(tb, half)
    if tb < B:
        tb = max(8, (tb // 8) * 8)  # sublane-dim block constraint when not covering full B
    nb = pl.cdiv(B, tb)

    kernel = functools.partial(_get_loss_kernel, batch=B, block_b=tb,
                               scale=float(mat_diff_loss_scale))

    partials = pl.pallas_call(
        kernel,
        out_shape=jax.ShapeDtypeStruct((nb, 1, 1), jnp.float32),
        grid=(nb,),
        in_specs=[
            pl.BlockSpec((tb, C), lambda i: (i, 0)),
            pl.BlockSpec((tb, 1), lambda i: (i, 0)),
            pl.BlockSpec((tb, d, d), lambda i: (i, 0, 0)),
        ],
        out_specs=pl.BlockSpec((1, 1, 1), lambda i: (i, 0, 0)),
        compiler_params=pltpu.CompilerParams(
            dimension_semantics=("parallel",),
        ),
        cost_estimate=pl.CostEstimate(
            flops=2 * B * d * d * d + 3 * B * d * d,
            transcendentals=B,
            bytes_accessed=B * d * d * tf_bytes + B * C * 4 + B * 4 + nb * 4,
        ),
    )(pred, target2d, trans_feat)

    return jnp.sum(partials) * (1.0 / B)


def _reference(pred, target, trans_feat):
    # Pure-JAX reference matching the PyTorch semantics (f32).
    B = pred.shape[0]
    d = trans_feat.shape[-1]
    nll = -jnp.mean(pred[jnp.arange(B), target])
    mm = jnp.einsum("bij,bkj->bik", trans_feat, trans_feat)
    diff = mm - jnp.eye(d, dtype=jnp.float32)[None]
    fro = jnp.sqrt(jnp.sum(diff * diff, axis=(1, 2)))
    return nll + MAT_DIFF_LOSS_SCALE * jnp.mean(fro)


if __name__ == "__main__":
    key = jax.random.PRNGKey(0)
    # Small shapes: batch=20 (exercises the padded last block and the >=2-block grid),
    # 16 classes, 64x64 feature transform (PointNet feat-transform size).
    B, C, d = 20, 16, 64

    k1, k2, k3 = jax.random.split(key, 3)
    logits = jax.random.normal(k1, (B, C), dtype=jnp.float32)
    pred = jax.nn.log_softmax(logits, axis=-1)           # log-probabilities, as F.nll_loss expects
    target = jax.random.randint(k2, (B,), 0, C, dtype=jnp.int32)
    # NOTE: trans_feat is consumed in bf16, so the regularizer differs from an f32
    # reference by bf16 input rounding; rtol=1e-3 is appropriate for a loss value.
    trans_feat = (0.1 * jax.random.normal(k3, (B, d, d), dtype=jnp.float32)).astype(jnp.bfloat16)

    total = get_loss(pred, target, trans_feat)
    jax.block_until_ready(total)

    ref = _reference(pred, target, trans_feat.astype(jnp.float32))
    np.testing.assert_allclose(np.asarray(total), np.asarray(ref), rtol=1e-3, atol=1e-3)

    print("KERNEL_OK")
</pallas_src>

<mosaic_0001>
module attributes {stable_mosaic.version = 11 : i64} {
  func.func @_get_loss_kernel(%arg0: i32, %arg1: memref<16x16xf32, #tpu.memory_space<vmem>>, %arg2: memref<16x1xi32, #tpu.memory_space<vmem>>, %arg3: memref<16x64x64xbf16, #tpu.memory_space<vmem>>, %arg4: memref<1x1x1xf32, #tpu.memory_space<vmem>>) attributes {dimension_semantics = [#tpu.dimension_semantics<parallel>], iteration_bounds = array<i64: 2>, scalar_prefetch = 0 : i64, scratch_operands = 0 : i64, tpu.core_type = #tpu.core_type<tc>, window_params = [{transform_indices = @transform_0, window_bounds = array<i64: 16, 16>}, {transform_indices = @transform_1, window_bounds = array<i64: 16, 1>}, {transform_indices = @transform_2, window_bounds = array<i64: 16, 64, 64>}, {transform_indices = @transform_3, window_bounds = array<i64: 1, 1, 1>}]} {
    %c0 = arith.constant 0 : index
    %c0_0 = arith.constant 0 : index
    %0 = vector.load %arg1[%c0, %c0_0] : memref<16x16xf32, #tpu.memory_space<vmem>>, vector<16x16xf32>
    %c0_1 = arith.constant 0 : index
    %c0_2 = arith.constant 0 : index
    %1 = vector.load %arg2[%c0_1, %c0_2] : memref<16x1xi32, #tpu.memory_space<vmem>>, vector<16x1xi32>
    %c0_3 = arith.constant 0 : index
    %c0_4 = arith.constant 0 : index
    %c0_5 = arith.constant 0 : index
    %2 = vector.load %arg3[%c0_3, %c0_4, %c0_5] : memref<16x64x64xbf16, #tpu.memory_space<vmem>>, vector<16x64x64xbf16>
    %3 = tpu.iota {dimensions = array<i32: 1>} : vector<16x16xi32>
    %4 = vector.broadcast %1 : vector<16x1xi32> to vector<16x16xi32>
    %5 = arith.cmpi eq, %3, %4 : vector<16x16xi32>
    %6 = arith.extui %5 : vector<16x16xi1> to vector<16x16xi32>
    %7 = arith.sitofp %6 : vector<16x16xi32> to vector<16x16xf32>
    %8 = arith.mulf %0, %7 : vector<16x16xf32>
    %cst = arith.constant dense<0.000000e+00> : vector<16xf32>
    %9 = vector.multi_reduction <add>, %8, %cst [1] : vector<16x16xf32> to vector<16xf32>
    %10 = vector.shape_cast %9 : vector<16xf32> to vector<16x1xf32>
    %cst_6 = arith.constant 0.000000e+00 : f32
    %11 = vector.broadcast %cst_6 : f32 to vector<16x1xf32>
    %12 = arith.subf %11, %10 : vector<16x1xf32>
    "tpu.trace_start"() <{level = 10 : i32, message = "bij,bkj->bik"}> : () -> ()
    %cst_7 = arith.constant dense<0.000000e+00> : vector<16x64x64xf32>
    %13 = tpu.matmul %2, %2, %cst_7 {dimension_numbers = #tpu.dot_dimension_numbers<[2], [2], [1], [1], [0, 0, 0, 1, 1, 1], [0], [0]>} : vector<16x64x64xbf16>, vector<16x64x64xbf16>, vector<16x64x64xf32> -> vector<16x64x64xf32>
    "tpu.trace_stop"() : () -> ()
    %14 = tpu.iota {dimensions = array<i32: 0>} : vector<64x64xi32>
    %15 = tpu.iota {dimensions = array<i32: 1>} : vector<64x64xi32>
    %16 = arith.cmpi eq, %14, %15 : vector<64x64xi32>
    %17 = arith.extui %16 : vector<64x64xi1> to vector<64x64xi32>
    %18 = arith.sitofp %17 : vector<64x64xi32> to vector<64x64xf32>
    %19 = vector.shape_cast %18 : vector<64x64xf32> to vector<1x64x64xf32>
    %20 = vector.broadcast %19 : vector<1x64x64xf32> to vector<16x64x64xf32>
    %21 = arith.subf %13, %20 : vector<16x64x64xf32>
    %22 = arith.mulf %21, %21 : vector<16x64x64xf32>
    %cst_8 = arith.constant dense<0.000000e+00> : vector<16x64xf32>
    %23 = vector.multi_reduction <add>, %22, %cst_8 [2] : vector<16x64x64xf32> to vector<16x64xf32>
    %cst_9 = arith.constant dense<0.000000e+00> : vector<16xf32>
    %24 = vector.multi_reduction <add>, %23, %cst_9 [1] : vector<16x64xf32> to vector<16xf32>
    %25 = vector.shape_cast %24 : vector<16xf32> to vector<16x1xf32>
    %26 = math.sqrt %25 : vector<16x1xf32>
    %cst_10 = arith.constant 1.000000e-03 : f32
    %27 = vector.broadcast %cst_10 : f32 to vector<16x1xf32>
    %28 = arith.mulf %27, %26 : vector<16x1xf32>
    %29 = arith.addf %12, %28 : vector<16x1xf32>
    %30 = tpu.iota {dimensions = array<i32: 0>} : vector<16x1xi32>
    %c16_i32 = arith.constant 16 : i32
    %31 = arith.muli %arg0, %c16_i32 : i32
    %32 = vector.broadcast %31 : i32 to vector<16x1xi32>
    %33 = arith.addi %32, %30 : vector<16x1xi32>
    %c20_i32 = arith.constant 20 : i32
    %34 = vector.broadcast %c20_i32 : i32 to vector<16x1xi32>
    %35 = arith.cmpi slt, %33, %34 : vector<16x1xi32>
    %cst_11 = arith.constant 0.000000e+00 : f32
    %36 = vector.broadcast %cst_11 : f32 to vector<16x1xf32>
    %37 = arith.select %35, %29, %36 : vector<16x1xi1>, vector<16x1xf32>
    %cst_12 = arith.constant dense<0.000000e+00> : vector<1xf32>
    %38 = vector.multi_reduction <add>, %37, %cst_12 [0] : vector<16x1xf32> to vector<1xf32>
    %39 = vector.shape_cast %38 : vector<1xf32> to vector<1x1xf32>
    %40 = vector.shape_cast %39 : vector<1x1xf32> to vector<1x1x1xf32>
    %c0_13 = arith.constant 0 : index
    %c0_14 = arith.constant 0 : index
    %c0_15 = arith.constant 0 : index
    %41 = vector.load %arg4[%c0_13, %c0_14, %c0_15] : memref<1x1x1xf32, #tpu.memory_space<vmem>>, vector<1x1x1xf32>
    tpu.vector_store %arg4[%c0_13, %c0_14, %c0_15], %40 {strides = array<i32>} : memref<1x1x1xf32, #tpu.memory_space<vmem>>, vector<1x1x1xf32>,
    return
  }
  func.func @transform_0(%arg0: i32) -> (i32, i32) {
    %c0_i32 = arith.constant 0 : i32
    %c0_i32_0 = arith.constant 0 : i32
    return %arg0, %c0_i32 : i32, i32
  }
  func.func @transform_1(%arg0: i32) -> (i32, i32) {
    %c0_i32 = arith.constant 0 : i32
    %c0_i32_0 = arith.constant 0 : i32
    return %arg0, %c0_i32 : i32, i32
  }
  func.func @transform_2(%arg0: i32) -> (i32, i32, i32) {
    %c0_i32 = arith.constant 0 : i32
    %c0_i32_0 = arith.constant 0 : i32
    %c0_i32_1 = arith.constant 0 : i32
    return %arg0, %c0_i32, %c0_i32_0 : i32, i32, i32
  }
  func.func @transform_3(%arg0: i32) -> (i32, i32, i32) {
    %c0_i32 = arith.constant 0 : i32
    %c0_i32_0 = arith.constant 0 : i32
    %c0_i32_1 = arith.constant 0 : i32
    return %arg0, %c0_i32, %c0_i32_0 : i32, i32, i32
  }
}

</mosaic_0001>

<llo_original>
// kernel: tpu_custom_call.1
$region0: #{tpu_custom_call.1}
  #allocation0 [shape = 'u32[]', space=smem, size = 0x4, offset = 0x4, fixed_abs, tag = 'smem constant byte address 0x4 - core index']
  #allocation1 [shape = 'u32[144,128]{1,0:T(1,128)}', space=vmem, size = 0x12000, scoped, tag = 'internal scratch']
  %s0 = inlined_call_operand.vmem [shape: f32[20,16], index: 0, kind: input, shape index: {}]
  %s1 = inlined_call_operand.vmem [shape: s32[20,1], index: 1, kind: input, shape index: {}]
  %s2 = inlined_call_operand.hbm [shape: bf16[20,64,64], index: 2, kind: input, shape index: {}]
  %s3 = inlined_call_operand.vmem [shape: f32[2,1,1], index: 3, kind: output, shape index: {}]
  %s4 = sld [smem:[#allocation0]]
  $region49: #{tpu_custom_call.1} parent=0
    _
  %s6 = ssub.s32 1, %s4
  %s7 = scalar_select 0, %s6, %s4
  $region1: #{tpu_custom_call.1} parent=0
    #allocation2 [shape = 'u8[524288]{0}', space=vmem, size = 0x80000, scoped, tag = 'input window, operand 2']
    #allocation3 [shape = 's32[2]{0}', space=sflag, size = 0x8, scoped, tag = 'scoped memory for tpu_custom_call.1']
    %8 = vsyncpa [#allocation3], 0
    %s9 = scalar_lea.sflag [#allocation3], 1
    %10 = vsyncpa %s9, 0
    loop: start=0, step=1, limit=4
    $region2: #{tpu_custom_call.1} parent=1 // loop_pre_header
      _
    $region3: #{tpu_custom_call.1} parent=1 // loop_header
      %s12 = sphi 0, %s16
      %p13 = scmp.ge.s32.totalorder %s12, 4
      %s22 = sphi 0, %s24
      %s25 = sphi 0, %s22
      %s26 = sphi 0, %s25
      %s42 = sphi 0, %s26
      %s48 = sphi 0, %s50
      %s51 = sphi 0, %s48
      %s52 = sphi 0, %s51
      %s68 = sphi 0, %s52
      %s74 = sphi 0, %s76
      %s77 = sphi 0, %s74
      %s78 = sphi 0, %s77
      %s94 = sphi 0, %s78
      %s100 = sphi 0, %s102
      %s103 = sphi 0, %s100
      %s104 = sphi 0, %s103
      %s120 = sphi 0, %s104
    $region4: #{tpu_custom_call.1} parent=1 // loop_header_branch
      %15 = sbr.rel (%p13) target = $region8
    $region5: #{tpu_custom_call.1} parent=1 // loop_body
      %s17 = ssub.s32 %s12, 1
      %s18 = ssub.s32 %s12, 2
      %s19 = sadd.s32 %s12, 1
      %s20 = ssub.s32 %s12, %s19
      %p21 = scmp.eq.s32.totalorder %s20, 0
      %s23 = sadd.s32 %s22, 1
      %s24 = scalar_select %p21, %s22, %s23
      %p27 = pneg %p21
      %p28 = scmp.eq.s32.totalorder %s12, 1
      %p29 = por %p27, %p28
      %p30 = scmp.ne.s32.totalorder %s22, %s25
      %p31 = scmp.eq.s32.totalorder %s12, 0
      %p32 = por %p30, %p31
      %p33 = scmp.ne.s32.totalorder %s22, %s25
      %p34 = scmp.eq.s32.totalorder %s17, 1
      %p35 = por %p33, %p34
      %p36 = scmp.ne.s32.totalorder %s25, %s26
      %p37 = scmp.eq.s32.totalorder %s17, 0
      %p38 = por %p36, %p37
      %p39 = scmp.ne.s32.totalorder %s25, %s26
      %p40 = scmp.eq.s32.totalorder %s18, 1
      %p41 = por %p39, %p40
      %p43 = scmp.ne.s32.totalorder %s26, %s42
      %p44 = scmp.eq.s32.totalorder %s18, 0
      %p45 = por %p43, %p44
      %s46 = ssub.s32 %s12, %s19
      %p47 = scmp.eq.s32.totalorder %s46, 0
      %s49 = sadd.s32 %s48, 1
      %s50 = scalar_select %p47, %s48, %s49
      %p53 = pneg %p47
      %p54 = scmp.eq.s32.totalorder %s12, 1
      %p55 = por %p53, %p54
      %p56 = scmp.ne.s32.totalorder %s48, %s51
      %p57 = scmp.eq.s32.totalorder %s12, 0
      %p58 = por %p56, %p57
      %p59 = scmp.ne.s32.totalorder %s48, %s51
      %p60 = scmp.eq.s32.totalorder %s17, 1
      %p61 = por %p59, %p60
      %p62 = scmp.ne.s32.totalorder %s51, %s52
      %p63 = scmp.eq.s32.totalorder %s17, 0
      %p64 = por %p62, %p63
      %p65 = scmp.ne.s32.totalorder %s51, %s52
      %p66 = scmp.eq.s32.totalorder %s18, 1
      %p67 = por %p65, %p66
      %p69 = scmp.ne.s32.totalorder %s52, %s68
      %p70 = scmp.eq.s32.totalorder %s18, 0
      %p71 = por %p69, %p70
      %s72 = ssub.s32 %s12, %s19
      %p73 = scmp.eq.s32.totalorder %s72, 0
      %s75 = sadd.s32 %s74, 1
      %s76 = scalar_select %p73, %s74, %s75
      %p79 = pneg %p73
      %p80 = scmp.eq.s32.totalorder %s12, 1
      %p81 = por %p79, %p80
      %p82 = scmp.ne.s32.totalorder %s74, %s77
      %p83 = scmp.eq.s32.totalorder %s12, 0
      %p84 = por %p82, %p83
      %p85 = scmp.ne.s32.totalorder %s74, %s77
      %p86 = scmp.eq.s32.totalorder %s17, 1
      %p87 = por %p85, %p86
      %p88 = scmp.ne.s32.totalorder %s77, %s78
      %p89 = scmp.eq.s32.totalorder %s17, 0
      %p90 = por %p88, %p89
      %p91 = scmp.ne.s32.totalorder %s77, %s78
      %p92 = scmp.eq.s32.totalorder %s18, 1
      %p93 = por %p91, %p92
      %p95 = scmp.ne.s32.totalorder %s78, %s94
      %p96 = scmp.eq.s32.totalorder %s18, 0
      %p97 = por %p95, %p96
      %s98 = ssub.s32 %s12, %s19
      %p99 = scmp.eq.s32.totalorder %s98, 0
      %s101 = sadd.s32 %s100, 1
      %s102 = scalar_select %p99, %s100, %s101
      %p105 = pneg %p99
      %p106 = scmp.eq.s32.totalorder %s12, 1
      %p107 = por %p105, %p106
      %p108 = scmp.ne.s32.totalorder %s100, %s103
      %p109 = scmp.eq.s32.totalorder %s12, 0
      %p110 = por %p108, %p109
      %p111 = scmp.ne.s32.totalorder %s100, %s103
      %p112 = scmp.eq.s32.totalorder %s17, 1
      %p113 = por %p111, %p112
      %p114 = scmp.ne.s32.totalorder %s103, %s104
      %p115 = scmp.eq.s32.totalorder %s17, 0
      %p116 = por %p114, %p115
      %p117 = scmp.ne.s32.totalorder %s103, %s104
      %p118 = scmp.eq.s32.totalorder %s18, 1
      %p119 = por %p117, %p118
      %p121 = scmp.ne.s32.totalorder %s104, %s120
      %p122 = scmp.eq.s32.totalorder %s18, 0
      %p123 = por %p121, %p122
      %p124 = scmp.le.s32.totalorder 1, %s12
      %p125 = scmp.lt.s32.totalorder %s12, 3
      %p126 = pnand %p124, %p125
      %p127 = pneg %p126
      // Predicated region
      $region9: #{tpu_custom_call.1} parent=5 // pred_check
        _
      $region10: #{tpu_custom_call.1} parent=5 // pred_check_branch
        %129 = sbr.rel (%p126) target = $region12
      $region11: #{tpu_custom_call.1} parent=5 // pred_region
        %s130 = ssub.s32 %s12, 1
      $region12: #{tpu_custom_call.1} parent=5 // pred_fallthru
        _
      %p131 = scmp.lt.s32.totalorder %s12, 2
      // Predicated region
      $region13: #{tpu_custom_call.1} parent=5 // pred_check
        %p132 = pneg %p131
      $region14: #{tpu_custom_call.1} parent=5 // pred_check_branch
        %134 = sbr.rel (%p132) target = $region16
      $region15: #{tpu_custom_call.1} parent=5 // pred_region
        // Predicated region
        $region17: #{tpu_custom_call.1} parent=15 // pred_check
          %p135 = pneg %p32
        $region18: #{tpu_custom_call.1} parent=15 // pred_check_branch
          %137 = sbr.rel (%p135) target = $region20
        $region19: #{tpu_custom_call.1} parent=15 // pred_region
          %s138 = smul.u32 2, %s12
          %s139 = ssub.s32 3, %s138
          %p140 = scmp.lt.s32.totalorder %s139, 2
          %s141 = scalar_select %p140, %s139, 2
          %s142 = smul.u32 128, %s141
          %p143 = scmp.lt.s32.totalorder %s138, 2
          %s144 = scalar_select %p143, %s138, 2
          %s145 = smul.addr %s144, 8
          %s146 = scalar_lea.vmem %s0, %s145
          %s147 = smul.u32 2, %s12
          %s148 = ssub.s32 3, %s147
          %p149 = scmp.lt.s32.totalorder %s148, 2
          %s150 = scalar_select %p149, %s148, 2
          %s151 = smul.u32 128, %s150
        $region20: #{tpu_custom_call.1} parent=15 // pred_fallthru
          _
        // Predicated region
        $region21: #{tpu_custom_call.1} parent=15 // pred_check
          %p152 = pneg %p58
        $region22: #{tpu_custom_call.1} parent=15 // pred_check_branch
          %154 = sbr.rel (%p152) target = $region24
        $region23: #{tpu_custom_call.1} parent=15 // pred_region
          %s155 = smul.u32 2, %s12
          %s156 = ssub.s32 3, %s155
          %p157 = scmp.lt.s32.totalorder %s156, 2
          %s158 = scalar_select %p157, %s156, 2
          %s159 = smul.u32 128, %s158
          %p160 = scmp.lt.s32.totalorder %s155, 2
          %s161 = scalar_select %p160, %s155, 2
          %s162 = smul.addr %s161, 8
          %s163 = scalar_lea.vmem %s1, %s162
          %s164 = smul.u32 2, %s12
          %s165 = ssub.s32 3, %s164
          %p166 = scmp.lt.s32.totalorder %s165, 2
          %s167 = scalar_select %p166, %s165, 2
          %s168 = smul.u32 128, %s167
        $region24: #{tpu_custom_call.1} parent=15 // pred_fallthru
          _
        // Predicated region
        $region25: #{tpu_custom_call.1} parent=15 // pred_check
          %p169 = pneg %p84
        $region26: #{tpu_custom_call.1} parent=15 // pred_check_branch
          %171 = sbr.rel (%p169) target = $region28
        $region27: #{tpu_custom_call.1} parent=15 // pred_region
          %s172 = sand.u32 %s74, 1
          %s173 = scalar_lea.sflag [#allocation3], %s172
          %s174 = sand.u32 %s74, 1
          %s175 = smul.addr %s174, 512
          %s176 = scalar_lea.vmem [#allocation2], %s175
          %s177 = smul.u32 16, %s12
          %s178 = ssub.s32 20, %s177
          %p179 = scmp.lt.s32.totalorder %s178, 16
          %s180 = scalar_select %p179, %s178, 16
          %s181 = smul.u32 64, %s180
          %s182 = smul.u32 %s181, 8
          %s184 = ssub.s32 8192, %s182
          %185 = vsyncadd %s173, %s184
          %p186 = scmp.ne.s32.totalorder 0, %s182
          %s187 = smul.addr %s177, 8
          %s188 = smul.addr %s187, 64
          %s189 = scalar_lea.hbm %s2, %s188
          %s190 = smul.u32 %s180, 8
          %s191 = smul.u32 4, %s190
          %s192 = sshll.u32 %s176, 4
          %s193 = int_to_ptr.vmem [resolvable:$true] %s192
          %s194 = sshll.u32 %s191, 4
          %198 = dma.hbm_to_vmem [thread:$0]  (%p186), %s189, %s194, %s193, %s173, 64, 64, 4
        $region28: #{tpu_custom_call.1} parent=15 // pred_fallthru
          _
      $region16: #{tpu_custom_call.1} parent=5 // pred_fallthru
        _
      %p199 = scmp.le.s32.totalorder 1, %s12
      %p200 = scmp.lt.s32.totalorder %s12, 3
      %p201 = pnand %p199, %p200
      %p202 = pneg %p201
      // Predicated region
      $region29: #{tpu_custom_call.1} parent=5 // pred_check
        _
      $region30: #{tpu_custom_call.1} parent=5 // pred_check_branch
        %204 = sbr.rel (%p201) target = $region32
      $region31: #{tpu_custom_call.1} parent=5 // pred_region
        %s205 = ssub.s32 %s12, 1
        %s206 = sand.u32 %s77, 1
        %s207 = scalar_lea.sflag [#allocation3], %s206
        %s208 = sand.u32 %s77, 1
        %s209 = smul.addr %s208, 512
        %s210 = scalar_lea.vmem [#allocation2], %s209
        // Predicated region
        $region33: #{tpu_custom_call.1} parent=31 // pred_check
          %p211 = pneg %p90
        $region34: #{tpu_custom_call.1} parent=31 // pred_check_branch
          %213 = sbr.rel (%p211) target = $region36
        $region35: #{tpu_custom_call.1} parent=31 // pred_region
          %214 = dma.done %s207, 8192
        $region36: #{tpu_custom_call.1} parent=31 // pred_fallthru
          _
        %s215 = smul.u32 2, %s17
        %s216 = ssub.s32 3, %s215
        %p217 = scmp.lt.s32.totalorder %s216, 2
        %s218 = scalar_select %p217, %s216, 2
        %s219 = smul.u32 128, %s218
        %p220 = scmp.lt.s32.totalorder %s215, 2
        %s221 = scalar_select %p220, %s215, 2
        %s222 = smul.addr %s221, 8
        %s223 = scalar_lea.vmem %s0, %s222
        %p224 = pneg %p38
        %p225 = pneg %p35
        %s226 = smul.u32 2, %s17
        %s227 = ssub.s32 3, %s226
        %p228 = scmp.lt.s32.totalorder %s227, 2
        %s229 = scalar_select %p228, %s227, 2
        %s230 = smul.u32 128, %s229
        %p231 = scmp.lt.s32.totalorder %s226, 2
        %s232 = scalar_select %p231, %s226, 2
        %s233 = smul.addr %s232, 8
        %s234 = scalar_lea.vmem %s1, %s233
        %p235 = pneg %p64
        %p236 = pneg %p61
        %s237 = sand.u32 %s77, 1
        %s238 = scalar_lea.sflag [#allocation3], %s237
        %s239 = sand.u32 %s77, 1
        %s240 = smul.addr %s239, 512
        %s241 = scalar_lea.vmem [#allocation2], %s240
        %p242 = pneg %p90
        %p243 = pneg %p87
        %p244 = pneg %p116
        %p245 = pneg %p113
        %p246 = scmp.lt.s32.totalorder %s17, 1
        %s247 = scalar_select %p246, %s17, 1
        %s248 = scalar_lea.vmem %s3, %s247
        %s249 = smul.u32 2, %s17
        %s250 = ssub.s32 3, %s249
        %p251 = scmp.lt.s32.totalorder %s250, 2
        %s252 = scalar_select %p251, %s250, 2
        %s253 = smul.u32 128, %s252
        %p254 = scmp.lt.s32.totalorder %s249, 2
        %s255 = scalar_select %p254, %s249, 2
        %s256 = smul.addr %s255, 8
        %s257 = scalar_lea.vmem %s0, %s256
        %s258 = smul.u32 2, %s17
        %s259 = ssub.s32 3, %s258
        %p260 = scmp.lt.s32.totalorder %s259, 2
        %s261 = scalar_select %p260, %s259, 2
        %s262 = smul.u32 128, %s261
        %s263 = smul.u32 2, %s17
        %s264 = ssub.s32 3, %s263
        %p265 = scmp.lt.s32.totalorder %s264, 2
        %s266 = scalar_select %p265, %s264, 2
        %s267 = smul.u32 128, %s266
        %p268 = scmp.lt.s32.totalorder %s263, 2
        %s269 = scalar_select %p268, %s263, 2
        %s270 = smul.addr %s269, 8
        %s271 = scalar_lea.vmem %s1, %s270
        %s272 = smul.u32 2, %s17
        %s273 = ssub.s32 3, %s272
        %p274 = scmp.lt.s32.totalorder %s273, 2
        %s275 = scalar_select %p274, %s273, 2
        %s276 = smul.u32 128, %s275
        %s277 = smul.u32 16, %s17
        %s278 = ssub.s32 20, %s277
        %p279 = scmp.lt.s32.totalorder %s278, 16
        %s280 = scalar_select %p279, %s278, 16
        %s281 = smul.u32 64, %s280
        %s282 = smul.u32 %s281, 8
        %p283 = scmp.lt.s32.totalorder %s17, 1
        %s284 = scalar_select %p283, %s17, 1
        %s285 = scalar_lea.vmem %s3, %s284
        %v287 = vld [vmem:[%s257] sm:$0xff]
        %v288 = vld [vmem:[%s257 + $0x8] sm:$0xff]
        %v289 = vld [vmem:[%s271] sm:$0xff]
        %v290 = vld [vmem:[%s271 + $0x8] sm:$0xff]
        %v291 = vld [vmem:[%s210] sm:$0xf]
        %v292 = vld [vmem:[%s210 + $0x4] sm:$0xf]
        %v293 = vld [vmem:[%s210 + $0x8] sm:$0xf]
        %v294 = vld [vmem:[%s210 + $0xc] sm:$0xf]
        %v295 = vld [vmem:[%s210 + $0x10] sm:$0xf]
        %v296 = vld [vmem:[%s210 + $0x14] sm:$0xf]
        %v297 = vld [vmem:[%s210 + $0x18] sm:$0xf]
        %v298 = vld [vmem:[%s210 + $0x1c] sm:$0xf]
        %v299 = vld [vmem:[%s210 + $0x20] sm:$0xf]
        %v300 = vld [vmem:[%s210 + $0x24] sm:$0xf]
        %v301 = vld [vmem:[%s210 + $0x28] sm:$0xf]
        %v302 = vld [vmem:[%s210 + $0x2c] sm:$0xf]
        %v303 = vld [vmem:[%s210 + $0x30] sm:$0xf]
        %v304 = vld [vmem:[%s210 + $0x34] sm:$0xf]
        %v305 = vld [vmem:[%s210 + $0x38] sm:$0xf]
        %v306 = vld [vmem:[%s210 + $0x3c] sm:$0xf]
        %v307 = vld [vmem:[%s210 + $0x40] sm:$0xf]
        %v308 = vld [vmem:[%s210 + $0x44] sm:$0xf]
        %v309 = vld [vmem:[%s210 + $0x48] sm:$0xf]
        %v310 = vld [vmem:[%s210 + $0x4c] sm:$0xf]
        %v311 = vld [vmem:[%s210 + $0x50] sm:$0xf]
        %v312 = vld [vmem:[%s210 + $0x54] sm:$0xf]
        %v313 = vld [vmem:[%s210 + $0x58] sm:$0xf]
        %v314 = vld [vmem:[%s210 + $0x5c] sm:$0xf]
        %v315 = vld [vmem:[%s210 + $0x60] sm:$0xf]
        %v316 = vld [vmem:[%s210 + $0x64] sm:$0xf]
        %v317 = vld [vmem:[%s210 + $0x68] sm:$0xf]
        %v318 = vld [vmem:[%s210 + $0x6c] sm:$0xf]
        %v319 = vld [vmem:[%s210 + $0x70] sm:$0xf]
        %v320 = vld [vmem:[%s210 + $0x74] sm:$0xf]
        %v321 = vld [vmem:[%s210 + $0x78] sm:$0xf]
        %v322 = vld [vmem:[%s210 + $0x7c] sm:$0xf]
        %v323 = vld [vmem:[%s210 + $0x80] sm:$0xf]
        %v324 = vld [vmem:[%s210 + $0x84] sm:$0xf]
        %v325 = vld [vmem:[%s210 + $0x88] sm:$0xf]
        %v326 = vld [vmem:[%s210 + $0x8c] sm:$0xf]
        %v327 = vld [vmem:[%s210 + $0x90] sm:$0xf]
        %v328 = vld [vmem:[%s210 + $0x94] sm:$0xf]
        %v329 = vld [vmem:[%s210 + $0x98] sm:$0xf]
        %v330 = vld [vmem:[%s210 + $0x9c] sm:$0xf]
        %v331 = vld [vmem:[%s210 + $0xa0] sm:$0xf]
        %v332 = vld [vmem:[%s210 + $0xa4] sm:$0xf]
        %v333 = vld [vmem:[%s210 + $0xa8] sm:$0xf]
        %v334 = vld [vmem:[%s210 + $0xac] sm:$0xf]
        %v335 = vld [vmem:[%s210 + $0xb0] sm:$0xf]
        %v336 = vld [vmem:[%s210 + $0xb4] sm:$0xf]
        %v337 = vld [vmem:[%s210 + $0xb8] sm:$0xf]
        %v338 = vld [vmem:[%s210 + $0xbc] sm:$0xf]
        %v339 = vld [vmem:[%s210 + $0xc0] sm:$0xf]
        %v340 = vld [vmem:[%s210 + $0xc4] sm:$0xf]
        %v341 = vld [vmem:[%s210 + $0xc8] sm:$0xf]
        %v342 = vld [vmem:[%s210 + $0xcc] sm:$0xf]
        %v343 = vld [vmem:[%s210 + $0xd0] sm:$0xf]
        %v344 = vld [vmem:[%s210 + $0xd4] sm:$0xf]
        %v345 = vld [vmem:[%s210 + $0xd8] sm:$0xf]
        %v346 = vld [vmem:[%s210 + $0xdc] sm:$0xf]
        %v347 = vld [vmem:[%s210 + $0xe0] sm:$0xf]
        %v348 = vld [vmem:[%s210 + $0xe4] sm:$0xf]
        %v349 = vld [vmem:[%s210 + $0xe8] sm:$0xf]
        %v350 = vld [vmem:[%s210 + $0xec] sm:$0xf]
        %v351 = vld [vmem:[%s210 + $0xf0] sm:$0xf]
        %v352 = vld [vmem:[%s210 + $0xf4] sm:$0xf]
        %v353 = vld [vmem:[%s210 + $0xf8] sm:$0xf]
        %v354 = vld [vmem:[%s210 + $0xfc] sm:$0xf]
        %v355 = vld [vmem:[%s210 + $0x100] sm:$0xf]
        %v356 = vld [vmem:[%s210 + $0x104] sm:$0xf]
        %v357 = vld [vmem:[%s210 + $0x108] sm:$0xf]
        %v358 = vld [vmem:[%s210 + $0x10c] sm:$0xf]
        %v359 = vld [vmem:[%s210 + $0x110] sm:$0xf]
        %v360 = vld [vmem:[%s210 + $0x114] sm:$0xf]
        %v361 = vld [vmem:[%s210 + $0x118] sm:$0xf]
        %v362 = vld [vmem:[%s210 + $0x11c] sm:$0xf]
        %v363 = vld [vmem:[%s210 + $0x120] sm:$0xf]
        %v364 = vld [vmem:[%s210 + $0x124] sm:$0xf]
        %v365 = vld [vmem:[%s210 + $0x128] sm:$0xf]
        %v366 = vld [vmem:[%s210 + $0x12c] sm:$0xf]
        %v367 = vld [vmem:[%s210 + $0x130] sm:$0xf]
        %v368 = vld [vmem:[%s210 + $0x134] sm:$0xf]
        %v369 = vld [vmem:[%s210 + $0x138] sm:$0xf]
        %v370 = vld [vmem:[%s210 + $0x13c] sm:$0xf]
        %v371 = vld [vmem:[%s210 + $0x140] sm:$0xf]
        %v372 = vld [vmem:[%s210 + $0x144] sm:$0xf]
        %v373 = vld [vmem:[%s210 + $0x148] sm:$0xf]
        %v374 = vld [vmem:[%s210 + $0x14c] sm:$0xf]
        %v375 = vld [vmem:[%s210 + $0x150] sm:$0xf]
        %v376 = vld [vmem:[%s210 + $0x154] sm:$0xf]
        %v377 = vld [vmem:[%s210 + $0x158] sm:$0xf]
        %v378 = vld [vmem:[%s210 + $0x15c] sm:$0xf]
        %v379 = vld [vmem:[%s210 + $0x160] sm:$0xf]
        %v380 = vld [vmem:[%s210 + $0x164] sm:$0xf]
        %v381 = vld [vmem:[%s210 + $0x168] sm:$0xf]
        %v382 = vld [vmem:[%s210 + $0x16c] sm:$0xf]
        %v383 = vld [vmem:[%s210 + $0x170] sm:$0xf]
        %v384 = vld [vmem:[%s210 + $0x174] sm:$0xf]
        %v385 = vld [vmem:[%s210 + $0x178] sm:$0xf]
        %v386 = vld [vmem:[%s210 + $0x17c] sm:$0xf]
        %v387 = vld [vmem:[%s210 + $0x180] sm:$0xf]
        %v388 = vld [vmem:[%s210 + $0x184] sm:$0xf]
        %v389 = vld [vmem:[%s210 + $0x188] sm:$0xf]
        %v390 = vld [vmem:[%s210 + $0x18c] sm:$0xf]
        %v391 = vld [vmem:[%s210 + $0x190] sm:$0xf]
        %v392 = vld [vmem:[%s210 + $0x194] sm:$0xf]
        %v393 = vld [vmem:[%s210 + $0x198] sm:$0xf]
        %v394 = vld [vmem:[%s210 + $0x19c] sm:$0xf]
        %v395 = vld [vmem:[%s210 + $0x1a0] sm:$0xf]
        %v396 = vld [vmem:[%s210 + $0x1a4] sm:$0xf]
        %v397 = vld [vmem:[%s210 + $0x1a8] sm:$0xf]
        %v398 = vld [vmem:[%s210 + $0x1ac] sm:$0xf]
        %v399 = vld [vmem:[%s210 + $0x1b0] sm:$0xf]
        %v400 = vld [vmem:[%s210 + $0x1b4] sm:$0xf]
        %v401 = vld [vmem:[%s210 + $0x1b8] sm:$0xf]
        %v402 = vld [vmem:[%s210 + $0x1bc] sm:$0xf]
        %v403 = vld [vmem:[%s210 + $0x1c0] sm:$0xf]
        %v404 = vld [vmem:[%s210 + $0x1c4] sm:$0xf]
        %v405 = vld [vmem:[%s210 + $0x1c8] sm:$0xf]
        %v406 = vld [vmem:[%s210 + $0x1cc] sm:$0xf]
        %v407 = vld [vmem:[%s210 + $0x1d0] sm:$0xf]
        %v408 = vld [vmem:[%s210 + $0x1d4] sm:$0xf]
        %v409 = vld [vmem:[%s210 + $0x1d8] sm:$0xf]
        %v410 = vld [vmem:[%s210 + $0x1dc] sm:$0xf]
        %v411 = vld [vmem:[%s210 + $0x1e0] sm:$0xf]
        %v412 = vld [vmem:[%s210 + $0x1e4] sm:$0xf]
        %v413 = vld [vmem:[%s210 + $0x1e8] sm:$0xf]
        %v414 = vld [vmem:[%s210 + $0x1ec] sm:$0xf]
        %v415 = vld [vmem:[%s210 + $0x1f0] sm:$0xf]
        %v416 = vld [vmem:[%s210 + $0x1f4] sm:$0xf]
        %v417 = vld [vmem:[%s210 + $0x1f8] sm:$0xf]
        %v418 = vld [vmem:[%s210 + $0x1fc] sm:$0xf]
        %v419 = vlaneseq
        %v420 = vand.u32 %v419, 127
        %421 = vset.pattern.permute.xlu0 0
        %422 = vperm.xlu0 %421, %v289
        %v423 = vpop.permute.xlu0 %422
        %424 = vset.pattern.permute.xlu0 0
        %425 = vperm.xlu0 %424, %v290
        %v426 = vpop.permute.xlu0 %425
        %vm427 = vcmp.eq.s32.totalorder %v420, %v423
        %vm428 = vcmp.eq.s32.totalorder %v420, %v426
        %v429 = vsel %vm427, 1, 0
        %v430 = vsel %vm428, 1, 0
        %v431 = vcvt.s32.f32 %v429
        %v432 = vcvt.s32.f32 %v430
        %v433 = vmul.f32 %v287, %v431
        %v434 = vmul.f32 %v288, %v432
        %vm435 = vcmask 130048
        %v436 = vsel %vm435, %v433, 0.0
        %437 = vadd.xlane.f32.xlu0 %v436
        %v438 = vpop.xlane.xlu0 %437
        %v439 = vsel %vm435, %v434, 0.0
        %440 = vadd.xlane.f32.xlu0 %v439
        %v441 = vpop.xlane.xlu0 %440
        %v442 = vsub.f32 0.0, %v438
        %v443 = vsub.f32 0.0, %v441
        %v452 = vunpack.c.l.b16 %v291
        %v453 = vunpack.c.l.b16 %v292
        %v454 = vunpack.c.l.b16 %v293
        %v455 = vunpack.c.l.b16 %v294
        %v456 = vunpack.c.l.b16 %v295
        %v457 = vunpack.c.l.b16 %v296
        %v458 = vunpack.c.l.b16 %v297
        %v459 = vunpack.c.l.b16 %v298
        %v460 = vpack.c.b16 %v453, %v452
        %v461 = vpack.c.b16 %v455, %v454
        %v462 = vpack.c.b16 %v457, %v456
        %v463 = vpack.c.b16 %v459, %v458
        %vm464 = vcmask 523264
        %v466 = vsel %vm464, %v460, 0
        %v469 = vsel %vm464, %v461, 0
        %v472 = vsel %vm464, %v462, 0
        %v475 = vsel %vm464, %v463, 0
        %477 = vmatprep.subr.bf16.mxu0 0
        %478 = vmatpush1.bf16.xpose.msra.mxu0 0
        %479 = vmatprep.subr.bf16.mxu0 0
        %480 = vmatpush1.bf16.xpose.msra.mxu0 0
        %481 = vmatprep.subr.bf16.mxu0 0
        %482 = vmatpush1.bf16.xpose.msra.mxu0 0
        %483 = vmatprep.subr.bf16.mxu0 0
        %484 = vmatpush1.bf16.xpose.msra.mxu0 0
        %485 = vmatprep.subr.bf16.mxu0 0
        %486 = vmatpush1.bf16.xpose.msra.mxu0 %v475
        %487 = vmatprep.subr.bf16.mxu0 0
        %488 = vmatpush1.bf16.xpose.msra.mxu0 %v472
        %489 = vmatprep.subr.bf16.mxu0 0
        %490 = vmatpush1.bf16.xpose.msra.mxu0 %v469
        %491 = vmatprep.subr.bf16.mxu0 0
        %492 = vmatpush1.bf16.xpose.msra.mxu0 %v466
        %493 = vmatprep.subr.bf16.mxu0 0
        %494 = vmatpush2.bf16.xpose.msra.mxu0 0
        %495 = vmatprep.subr.bf16.mxu0 0
        %496 = vmatpush2.bf16.xpose.msra.mxu0 0
        %497 = vmatprep.subr.bf16.mxu0 0
        %498 = vmatpush2.bf16.xpose.msra.mxu0 0
        %499 = vmatprep.subr.bf16.mxu0 0
        %500 = vmatpush2.bf16.xpose.msra.mxu0 0
        %501 = vmatprep.subr.bf16.mxu0 0
        %502 = vmatpush2.bf16.xpose.msra.mxu0 0
        %503 = vmatprep.subr.bf16.mxu0 0
        %504 = vmatpush2.bf16.xpose.msra.mxu0 0
        %505 = vmatprep.subr.bf16.mxu0 0
        %506 = vmatpush2.bf16.xpose.msra.mxu0 0
        %507 = vmatprep.subr.bf16.mxu0 0
        %508 = vmatpush2.bf16.xpose.msra.mxu0 0
        %509 = vmatprep.mubr.bf16.mxu0 0
        %510 = vmatmul.mubr.bf16.gmra.mxu0 %v466
        %v511 = vpop.f32.mrf.mxu0
        %v512 = vadd.f32 0.0, %v511
        %v513 = vpop.f32.mrf.mxu0
        %v514 = vpop.f32.mrf.mxu0
        %v515 = vadd.f32 0.0, %v514
        %v516 = vpop.f32.mrf.mxu0
        %517 = vmatprep.mubr.bf16.mxu0 0
        %518 = vmatmul.mubr.bf16.gmra.mxu0 %v469
        %v519 = vpop.f32.mrf.mxu0
        %v520 = vadd.f32 0.0, %v519
        %v521 = vpop.f32.mrf.mxu0
        %v522 = vpop.f32.mrf.mxu0
        %v523 = vadd.f32 0.0, %v522
        %v524 = vpop.f32.mrf.mxu0
        %525 = vmatprep.mubr.bf16.mxu0 0
        %526 = vmatmul.mubr.bf16.gmra.mxu0 %v472
        %v527 = vpop.f32.mrf.mxu0
        %v528 = vadd.f32 0.0, %v527
        %v529 = vpop.f32.mrf.mxu0
        %v530 = vpop.f32.mrf.mxu0
        %v531 = vadd.f32 0.0, %v530
        %v532 = vpop.f32.mrf.mxu0
        %533 = vmatprep.mubr.bf16.mxu0 0
        %534 = vmatmul.mubr.bf16.gmra.mxu0 %v475
        %v535 = vpop.f32.mrf.mxu0
        %v536 = vadd.f32 0.0, %v535
        %v537 = vpop.f32.mrf.mxu0
        %v538 = vpop.f32.mrf.mxu0
        %v539 = vadd.f32 0.0, %v538
        %v540 = vpop.f32.mrf.mxu0
        %541 = vdwg.mxu0
        %v550 = vunpack.c.l.b16 %v299
        %v551 = vunpack.c.l.b16 %v300
        %v552 = vunpack.c.l.b16 %v301
        %v553 = vunpack.c.l.b16 %v302
        %v554 = vunpack.c.l.b16 %v303
        %v555 = vunpack.c.l.b16 %v304
        %v556 = vunpack.c.l.b16 %v305
        %v557 = vunpack.c.l.b16 %v306
        %v558 = vpack.c.b16 %v551, %v550
        %v559 = vpack.c.b16 %v553, %v552
        %v560 = vpack.c.b16 %v555, %v554
        %v561 = vpack.c.b16 %v557, %v556
        %v563 = vsel %vm464, %v558, 0
        %v566 = vsel %vm464, %v559, 0
        %v569 = vsel %vm464, %v560, 0
        %v572 = vsel %vm464, %v561, 0
        %574 = vmatprep.subr.bf16.mxu0 0
        %575 = vmatpush1.bf16.xpose.msra.mxu0 0
        %576 = vmatprep.subr.bf16.mxu0 0
        %577 = vmatpush1.bf16.xpose.msra.mxu0 0
        %578 = vmatprep.subr.bf16.mxu0 0
        %579 = vmatpush1.bf16.xpose.msra.mxu0 0
        %580 = vmatprep.subr.bf16.mxu0 0
        %581 = vmatpush1.bf16.xpose.msra.mxu0 0
        %582 = vmatprep.subr.bf16.mxu0 0
        %583 = vmatpush1.bf16.xpose.msra.mxu0 %v572
        %584 = vmatprep.subr.bf16.mxu0 0
        %585 = vmatpush1.bf16.xpose.msra.mxu0 %v569
        %586 = vmatprep.subr.bf16.mxu0 0
        %587 = vmatpush1.bf16.xpose.msra.mxu0 %v566
        %588 = vmatprep.subr.bf16.mxu0 0
        %589 = vmatpush1.bf16.xpose.msra.mxu0 %v563
        %590 = vmatprep.subr.bf16.mxu0 0
        %591 = vmatpush2.bf16.xpose.msra.mxu0 0
        %592 = vmatprep.subr.bf16.mxu0 0
        %593 = vmatpush2.bf16.xpose.msra.mxu0 0
        %594 = vmatprep.subr.bf16.mxu0 0
        %595 = vmatpush2.bf16.xpose.msra.mxu0 0
        %596 = vmatprep.subr.bf16.mxu0 0
        %597 = vmatpush2.bf16.xpose.msra.mxu0 0
        %598 = vmatprep.subr.bf16.mxu0 0
        %599 = vmatpush2.bf16.xpose.msra.mxu0 0
        %600 = vmatprep.subr.bf16.mxu0 0
        %601 = vmatpush2.bf16.xpose.msra.mxu0 0
        %602 = vmatprep.subr.bf16.mxu0 0
        %603 = vmatpush2.bf16.xpose.msra.mxu0 0
        %604 = vmatprep.subr.bf16.mxu0 0
        %605 = vmatpush2.bf16.xpose.msra.mxu0 0
        %606 = vmatprep.mubr.bf16.mxu0 0
        %607 = vmatmul.mubr.bf16.gmra.mxu0 %v563
        %v608 = vpop.f32.mrf.mxu0
        %v609 = vadd.f32 0.0, %v608
        %v610 = vpop.f32.mrf.mxu0
        %v611 = vpop.f32.mrf.mxu0
        %v612 = vadd.f32 0.0, %v611
        %v613 = vpop.f32.mrf.mxu0
        %614 = vmatprep.mubr.bf16.mxu0 0
        %615 = vmatmul.mubr.bf16.gmra.mxu0 %v566
        %v616 = vpop.f32.mrf.mxu0
        %v617 = vadd.f32 0.0, %v616
        %v618 = vpop.f32.mrf.mxu0
        %v619 = vpop.f32.mrf.mxu0
        %v620 = vadd.f32 0.0, %v619
        %v621 = vpop.f32.mrf.mxu0
        %622 = vmatprep.mubr.bf16.mxu0 0
        %623 = vmatmul.mubr.bf16.gmra.mxu0 %v569
        %v624 = vpop.f32.mrf.mxu0
        %v625 = vadd.f32 0.0, %v624
        %v626 = vpop.f32.mrf.mxu0
        %v627 = vpop.f32.mrf.mxu0
        %v628 = vadd.f32 0.0, %v627
        %v629 = vpop.f32.mrf.mxu0
        %630 = vmatprep.mubr.bf16.mxu0 0
        %631 = vmatmul.mubr.bf16.gmra.mxu0 %v572
        %v632 = vpop.f32.mrf.mxu0
        %v633 = vadd.f32 0.0, %v632
        %v634 = vpop.f32.mrf.mxu0
        %v635 = vpop.f32.mrf.mxu0
        %v636 = vadd.f32 0.0, %v635
        %v637 = vpop.f32.mrf.mxu0
        %638 = vdwg.mxu0
        %v647 = vunpack.c.l.b16 %v307
        %v648 = vunpack.c.l.b16 %v308
        %v649 = vunpack.c.l.b16 %v309
        %v650 = vunpack.c.l.b16 %v310
        %v651 = vunpack.c.l.b16 %v311
        %v652 = vunpack.c.l.b16 %v312
        %v653 = vunpack.c.l.b16 %v313
        %v654 = vunpack.c.l.b16 %v314
        %v655 = vpack.c.b16 %v648, %v647
        %v656 = vpack.c.b16 %v650, %v649
        %v657 = vpack.c.b16 %v652, %v651
        %v658 = vpack.c.b16 %v654, %v653
        %v660 = vsel %vm464, %v655, 0
        %v663 = vsel %vm464, %v656, 0
        %v666 = vsel %vm464, %v657, 0
        %v669 = vsel %vm464, %v658, 0
        %671 = vmatprep.subr.bf16.mxu0 0
        %672 = vmatpush1.bf16.xpose.msra.mxu0 0
        %673 = vmatprep.subr.bf16.mxu0 0
        %674 = vmatpush1.bf16.xpose.msra.mxu0 0
        %675 = vmatprep.subr.bf16.mxu0 0
        %676 = vmatpush1.bf16.xpose.msra.mxu0 0
        %677 = vmatprep.subr.bf16.mxu0 0
        %678 = vmatpush1.bf16.xpose.msra.mxu0 0
        %679 = vmatprep.subr.bf16.mxu0 0
        %680 = vmatpush1.bf16.xpose.msra.mxu0 %v669
        %681 = vmatprep.subr.bf16.mxu0 0
        %682 = vmatpush1.bf16.xpose.msra.mxu0 %v666
        %683 = vmatprep.subr.bf16.mxu0 0
        %684 = vmatpush1.bf16.xpose.msra.mxu0 %v663
        %685 = vmatprep.subr.bf16.mxu0 0
        %686 = vmatpush1.bf16.xpose.msra.mxu0 %v660
        %687 = vmatprep.subr.bf16.mxu0 0
        %688 = vmatpush2.bf16.xpose.msra.mxu0 0
        %689 = vmatprep.subr.bf16.mxu0 0
        %690 = vmatpush2.bf16.xpose.msra.mxu0 0
        %691 = vmatprep.subr.bf16.mxu0 0
        %692 = vmatpush2.bf16.xpose.msra.mxu0 0
        %693 = vmatprep.subr.bf16.mxu0 0
        %694 = vmatpush2.bf16.xpose.msra.mxu0 0
        %695 = vmatprep.subr.bf16.mxu0 0
        %696 = vmatpush2.bf16.xpose.msra.mxu0 0
        %697 = vmatprep.subr.bf16.mxu0 0
        %698 = vmatpush2.bf16.xpose.msra.mxu0 0
        %699 = vmatprep.subr.bf16.mxu0 0
        %700 = vmatpush2.bf16.xpose.msra.mxu0 0
        %701 = vmatprep.subr.bf16.mxu0 0
        %702 = vmatpush2.bf16.xpose.msra.mxu0 0
        %703 = vmatprep.mubr.bf16.mxu0 0
        %704 = vmatmul.mubr.bf16.gmra.mxu0 %v660
        %v705 = vpop.f32.mrf.mxu0
        %v706 = vadd.f32 0.0, %v705
        %v707 = vpop.f32.mrf.mxu0
        %v708 = vpop.f32.mrf.mxu0
        %v709 = vadd.f32 0.0, %v708
        %v710 = vpop.f32.mrf.mxu0
        %711 = vmatprep.mubr.bf16.mxu0 0
        %712 = vmatmul.mubr.bf16.gmra.mxu0 %v663
        %v713 = vpop.f32.mrf.mxu0
        %v714 = vadd.f32 0.0, %v713
        %v715 = vpop.f32.mrf.mxu0
        %v716 = vpop.f32.mrf.mxu0
        %v717 = vadd.f32 0.0, %v716
        %v718 = vpop.f32.mrf.mxu0
        %719 = vmatprep.mubr.bf16.mxu0 0
        %720 = vmatmul.mubr.bf16.gmra.mxu0 %v666
        %v721 = vpop.f32.mrf.mxu0
        %v722 = vadd.f32 0.0, %v721
        %v723 = vpop.f32.mrf.mxu0
        %v724 = vpop.f32.mrf.mxu0
        %v725 = vadd.f32 0.0, %v724
        %v726 = vpop.f32.mrf.mxu0
        %727 = vmatprep.mubr.bf16.mxu0 0
        %728 = vmatmul.mubr.bf16.gmra.mxu0 %v669
        %v729 = vpop.f32.mrf.mxu0
        %v730 = vadd.f32 0.0, %v729
        %v731 = vpop.f32.mrf.mxu0
        %v732 = vpop.f32.mrf.mxu0
        %v733 = vadd.f32 0.0, %v732
        %v734 = vpop.f32.mrf.mxu0
        %735 = vdwg.mxu0
        %v744 = vunpack.c.l.b16 %v315
        %v745 = vunpack.c.l.b16 %v316
        %v746 = vunpack.c.l.b16 %v317
        %v747 = vunpack.c.l.b16 %v318
        %v748 = vunpack.c.l.b16 %v319
        %v749 = vunpack.c.l.b16 %v320
        %v750 = vunpack.c.l.b16 %v321
        %v751 = vunpack.c.l.b16 %v322
        %v752 = vpack.c.b16 %v745, %v744
        %v753 = vpack.c.b16 %v747, %v746
        %v754 = vpack.c.b16 %v749, %v748
        %v755 = vpack.c.b16 %v751, %v750
        %v757 = vsel %vm464, %v752, 0
        %v760 = vsel %vm464, %v753, 0
        %v763 = vsel %vm464, %v754, 0
        %v766 = vsel %vm464, %v755, 0
        %768 = vmatprep.subr.bf16.mxu0 0
        %769 = vmatpush1.bf16.xpose.msra.mxu0 0
        %770 = vmatprep.subr.bf16.mxu0 0
        %771 = vmatpush1.bf16.xpose.msra.mxu0 0
        %772 = vmatprep.subr.bf16.mxu0 0
        %773 = vmatpush1.bf16.xpose.msra.mxu0 0
        %774 = vmatprep.subr.bf16.mxu0 0
        %775 = vmatpush1.bf16.xpose.msra.mxu0 0
        %776 = vmatprep.subr.bf16.mxu0 0
        %777 = vmatpush1.bf16.xpose.msra.mxu0 %v766
        %778 = vmatprep.subr.bf16.mxu0 0
        %779 = vmatpush1.bf16.xpose.msra.mxu0 %v763
        %780 = vmatprep.subr.bf16.mxu0 0
        %781 = vmatpush1.bf16.xpose.msra.mxu0 %v760
        %782 = vmatprep.subr.bf16.mxu0 0
        %783 = vmatpush1.bf16.xpose.msra.mxu0 %v757
        %784 = vmatprep.subr.bf16.mxu0 0
        %785 = vmatpush2.bf16.xpose.msra.mxu0 0
        %786 = vmatprep.subr.bf16.mxu0 0
        %787 = vmatpush2.bf16.xpose.msra.mxu0 0
        %788 = vmatprep.subr.bf16.mxu0 0
        %789 = vmatpush2.bf16.xpose.msra.mxu0 0
        %790 = vmatprep.subr.bf16.mxu0 0
        %791 = vmatpush2.bf16.xpose.msra.mxu0 0
        %792 = vmatprep.subr.bf16.mxu0 0
        %793 = vmatpush2.bf16.xpose.msra.mxu0 0
        %794 = vmatprep.subr.bf16.mxu0 0
        %795 = vmatpush2.bf16.xpose.msra.mxu0 0
        %796 = vmatprep.subr.bf16.mxu0 0
        %797 = vmatpush2.bf16.xpose.msra.mxu0 0
        %798 = vmatprep.subr.bf16.mxu0 0
        %799 = vmatpush2.bf16.xpose.msra.mxu0 0
        %800 = vmatprep.mubr.bf16.mxu0 0
        %801 = vmatmul.mubr.bf16.gmra.mxu0 %v757
        %v802 = vpop.f32.mrf.mxu0
        %v803 = vadd.f32 0.0, %v802
        %v804 = vpop.f32.mrf.mxu0
        %v805 = vpop.f32.mrf.mxu0
        %v806 = vadd.f32 0.0, %v805
        %v807 = vpop.f32.mrf.mxu0
        %808 = vmatprep.mubr.bf16.mxu0 0
        %809 = vmatmul.mubr.bf16.gmra.mxu0 %v760
        %v810 = vpop.f32.mrf.mxu0
        %v811 = vadd.f32 0.0, %v810
        %v812 = vpop.f32.mrf.mxu0
        %v813 = vpop.f32.mrf.mxu0
        %v814 = vadd.f32 0.0, %v813
        %v815 = vpop.f32.mrf.mxu0
        %816 = vmatprep.mubr.bf16.mxu0 0
        %817 = vmatmul.mubr.bf16.gmra.mxu0 %v763
        %v818 = vpop.f32.mrf.mxu0
        %v819 = vadd.f32 0.0, %v818
        %v820 = vpop.f32.mrf.mxu0
        %v821 = vpop.f32.mrf.mxu0
        %v822 = vadd.f32 0.0, %v821
        %v823 = vpop.f32.mrf.mxu0
        %824 = vmatprep.mubr.bf16.mxu0 0
        %825 = vmatmul.mubr.bf16.gmra.mxu0 %v766
        %v826 = vpop.f32.mrf.mxu0
        %v827 = vadd.f32 0.0, %v826
        %v828 = vpop.f32.mrf.mxu0
        %v829 = vpop.f32.mrf.mxu0
        %v830 = vadd.f32 0.0, %v829
        %v831 = vpop.f32.mrf.mxu0
        %832 = vdwg.mxu0
        %v841 = vunpack.c.l.b16 %v323
        %v842 = vunpack.c.l.b16 %v324
        %v843 = vunpack.c.l.b16 %v325
        %v844 = vunpack.c.l.b16 %v326
        %v845 = vunpack.c.l.b16 %v327
        %v846 = vunpack.c.l.b16 %v328
        %v847 = vunpack.c.l.b16 %v329
        %v848 = vunpack.c.l.b16 %v330
        %v849 = vpack.c.b16 %v842, %v841
        %v850 = vpack.c.b16 %v844, %v843
        %v851 = vpack.c.b16 %v846, %v845
        %v852 = vpack.c.b16 %v848, %v847
        %v854 = vsel %vm464, %v849, 0
        %v857 = vsel %vm464, %v850, 0
        %v860 = vsel %vm464, %v851, 0
        %v863 = vsel %vm464, %v852, 0
        %865 = vmatprep.subr.bf16.mxu0 0
        %866 = vmatpush1.bf16.xpose.msra.mxu0 0
        %867 = vmatprep.subr.bf16.mxu0 0
        %868 = vmatpush1.bf16.xpose.msra.mxu0 0
        %869 = vmatprep.subr.bf16.mxu0 0
        %870 = vmatpush1.bf16.xpose.msra.mxu0 0
        %871 = vmatprep.subr.bf16.mxu0 0
        %872 = vmatpush1.bf16.xpose.msra.mxu0 0
        %873 = vmatprep.subr.bf16.mxu0 0
        %874 = vmatpush1.bf16.xpose.msra.mxu0 %v863
        %875 = vmatprep.subr.bf16.mxu0 0
        %876 = vmatpush1.bf16.xpose.msra.mxu0 %v860
        %877 = vmatprep.subr.bf16.mxu0 0
        %878 = vmatpush1.bf16.xpose.msra.mxu0 %v857
        %879 = vmatprep.subr.bf16.mxu0 0
        %880 = vmatpush1.bf16.xpose.msra.mxu0 %v854
        %881 = vmatprep.subr.bf16.mxu0 0
        %882 = vmatpush2.bf16.xpose.msra.mxu0 0
        %883 = vmatprep.subr.bf16.mxu0 0
        %884 = vmatpush2.bf16.xpose.msra.mxu0 0
        %885 = vmatprep.subr.bf16.mxu0 0
        %886 = vmatpush2.bf16.xpose.msra.mxu0 0
        %887 = vmatprep.subr.bf16.mxu0 0
        %888 = vmatpush2.bf16.xpose.msra.mxu0 0
        %889 = vmatprep.subr.bf16.mxu0 0
        %890 = vmatpush2.bf16.xpose.msra.mxu0 0
        %891 = vmatprep.subr.bf16.mxu0 0
        %892 = vmatpush2.bf16.xpose.msra.mxu0 0
        %893 = vmatprep.subr.bf16.mxu0 0
        %894 = vmatpush2.bf16.xpose.msra.mxu0 0
        %895 = vmatprep.subr.bf16.mxu0 0
        %896 = vmatpush2.bf16.xpose.msra.mxu0 0
        %897 = vmatprep.mubr.bf16.mxu0 0
        %898 = vmatmul.mubr.bf16.gmra.mxu0 %v854
        %v899 = vpop.f32.mrf.mxu0
        %v900 = vadd.f32 0.0, %v899
        %v901 = vpop.f32.mrf.mxu0
        %v902 = vpop.f32.mrf.mxu0
        %v903 = vadd.f32 0.0, %v902
        %v904 = vpop.f32.mrf.mxu0
        %905 = vmatprep.mubr.bf16.mxu0 0
        %906 = vmatmul.mubr.bf16.gmra.mxu0 %v857
        %v907 = vpop.f32.mrf.mxu0
        %v908 = vadd.f32 0.0, %v907
        %v909 = vpop.f32.mrf.mxu0
        %v910 = vpop.f32.mrf.mxu0
        %v911 = vadd.f32 0.0, %v910
        %v912 = vpop.f32.mrf.mxu0
        %913 = vmatprep.mubr.bf16.mxu0 0
        %914 = vmatmul.mubr.bf16.gmra.mxu0 %v860
        %v915 = vpop.f32.mrf.mxu0
        %v916 = vadd.f32 0.0, %v915
        %v917 = vpop.f32.mrf.mxu0
        %v918 = vpop.f32.mrf.mxu0
        %v919 = vadd.f32 0.0, %v918
        %v920 = vpop.f32.mrf.mxu0
        %921 = vmatprep.mubr.bf16.mxu0 0
        %922 = vmatmul.mubr.bf16.gmra.mxu0 %v863
        %v923 = vpop.f32.mrf.mxu0
        %v924 = vadd.f32 0.0, %v923
        %v925 = vpop.f32.mrf.mxu0
        %v926 = vpop.f32.mrf.mxu0
        %v927 = vadd.f32 0.0, %v926
        %v928 = vpop.f32.mrf.mxu0
        %929 = vdwg.mxu0
        %v938 = vunpack.c.l.b16 %v331
        %v939 = vunpack.c.l.b16 %v332
        %v940 = vunpack.c.l.b16 %v333
        %v941 = vunpack.c.l.b16 %v334
        %v942 = vunpack.c.l.b16 %v335
        %v943 = vunpack.c.l.b16 %v336
        %v944 = vunpack.c.l.b16 %v337
        %v945 = vunpack.c.l.b16 %v338
        %v946 = vpack.c.b16 %v939, %v938
        %v947 = vpack.c.b16 %v941, %v940
        %v948 = vpack.c.b16 %v943, %v942
        %v949 = vpack.c.b16 %v945, %v944
        %v951 = vsel %vm464, %v946, 0
        %v954 = vsel %vm464, %v947, 0
        %v957 = vsel %vm464, %v948, 0
        %v960 = vsel %vm464, %v949, 0
        %962 = vmatprep.subr.bf16.mxu0 0
        %963 = vmatpush1.bf16.xpose.msra.mxu0 0
        %964 = vmatprep.subr.bf16.mxu0 0
        %965 = vmatpush1.bf16.xpose.msra.mxu0 0
        %966 = vmatprep.subr.bf16.mxu0 0
        %967 = vmatpush1.bf16.xpose.msra.mxu0 0
        %968 = vmatprep.subr.bf16.mxu0 0
        %969 = vmatpush1.bf16.xpose.msra.mxu0 0
        %970 = vmatprep.subr.bf16.mxu0 0
        %971 = vmatpush1.bf16.xpose.msra.mxu0 %v960
        %972 = vmatprep.subr.bf16.mxu0 0
        %973 = vmatpush1.bf16.xpose.msra.mxu0 %v957
        %974 = vmatprep.subr.bf16.mxu0 0
        %975 = vmatpush1.bf16.xpose.msra.mxu0 %v954
        %976 = vmatprep.subr.bf16.mxu0 0
        %977 = vmatpush1.bf16.xpose.msra.mxu0 %v951
        %978 = vmatprep.subr.bf16.mxu0 0
        %979 = vmatpush2.bf16.xpose.msra.mxu0 0
        %980 = vmatprep.subr.bf16.mxu0 0
        %981 = vmatpush2.bf16.xpose.msra.mxu0 0
        %982 = vmatprep.subr.bf16.mxu0 0
        %983 = vmatpush2.bf16.xpose.msra.mxu0 0
        %984 = vmatprep.subr.bf16.mxu0 0
        %985 = vmatpush2.bf16.xpose.msra.mxu0 0
        %986 = vmatprep.subr.bf16.mxu0 0
        %987 = vmatpush2.bf16.xpose.msra.mxu0 0
        %988 = vmatprep.subr.bf16.mxu0 0
        %989 = vmatpush2.bf16.xpose.msra.mxu0 0
        %990 = vmatprep.subr.bf16.mxu0 0
        %991 = vmatpush2.bf16.xpose.msra.mxu0 0
        %992 = vmatprep.subr.bf16.mxu0 0
        %993 = vmatpush2.bf16.xpose.msra.mxu0 0
        %994 = vmatprep.mubr.bf16.mxu0 0
        %995 = vmatmul.mubr.bf16.gmra.mxu0 %v951
        %v996 = vpop.f32.mrf.mxu0
        %v997 = vadd.f32 0.0, %v996
        %v998 = vpop.f32.mrf.mxu0
        %v999 = vpop.f32.mrf.mxu0
        %v1000 = vadd.f32 0.0, %v999
        %v1001 = vpop.f32.mrf.mxu0
        %1002 = vmatprep.mubr.bf16.mxu0 0
        %1003 = vmatmul.mubr.bf16.gmra.mxu0 %v954
        %v1004 = vpop.f32.mrf.mxu0
        %v1005 = vadd.f32 0.0, %v1004
        %v1006 = vpop.f32.mrf.mxu0
        %v1007 = vpop.f32.mrf.mxu0
        %v1008 = vadd.f32 0.0, %v1007
        %v1009 = vpop.f32.mrf.mxu0
        %1010 = vmatprep.mubr.bf16.mxu0 0
        %1011 = vmatmul.mubr.bf16.gmra.mxu0 %v957
        %v1012 = vpop.f32.mrf.mxu0
        %v1013 = vadd.f32 0.0, %v1012
        %v1014 = vpop.f32.mrf.mxu0
        %v1015 = vpop.f32.mrf.mxu0
        %v1016 = vadd.f32 0.0, %v1015
        %v1017 = vpop.f32.mrf.mxu0
        %1018 = vmatprep.mubr.bf16.mxu0 0
        %1019 = vmatmul.mubr.bf16.gmra.mxu0 %v960
        %v1020 = vpop.f32.mrf.mxu0
        %v1021 = vadd.f32 0.0, %v1020
        %v1022 = vpop.f32.mrf.mxu0
        %v1023 = vpop.f32.mrf.mxu0
        %v1024 = vadd.f32 0.0, %v1023
        %v1025 = vpop.f32.mrf.mxu0
        %1026 = vdwg.mxu0
        %v1035 = vunpack.c.l.b16 %v339
        %v1036 = vunpack.c.l.b16 %v340
        %v1037 = vunpack.c.l.b16 %v341
        %v1038 = vunpack.c.l.b16 %v342
        %v1039 = vunpack.c.l.b16 %v343
        %v1040 = vunpack.c.l.b16 %v344
        %v1041 = vunpack.c.l.b16 %v345
        %v1042 = vunpack.c.l.b16 %v346
        %v1043 = vpack.c.b16 %v1036, %v1035
        %v1044 = vpack.c.b16 %v1038, %v1037
        %v1045 = vpack.c.b16 %v1040, %v1039
        %v1046 = vpack.c.b16 %v1042, %v1041
        %v1048 = vsel %vm464, %v1043, 0
        %v1051 = vsel %vm464, %v1044, 0
        %v1054 = vsel %vm464, %v1045, 0
        %v1057 = vsel %vm464, %v1046, 0
        %1059 = vmatprep.subr.bf16.mxu0 0
        %1060 = vmatpush1.bf16.xpose.msra.mxu0 0
        %1061 = vmatprep.subr.bf16.mxu0 0
        %1062 = vmatpush1.bf16.xpose.msra.mxu0 0
        %1063 = vmatprep.subr.bf16.mxu0 0
        %1064 = vmatpush1.bf16.xpose.msra.mxu0 0
        %1065 = vmatprep.subr.bf16.mxu0 0
        %1066 = vmatpush1.bf16.xpose.msra.mxu0 0
        %1067 = vmatprep.subr.bf16.mxu0 0
        %1068 = vmatpush1.bf16.xpose.msra.mxu0 %v1057
        %1069 = vmatprep.subr.bf16.mxu0 0
        %1070 = vmatpush1.bf16.xpose.msra.mxu0 %v1054
        %1071 = vmatprep.subr.bf16.mxu0 0
        %1072 = vmatpush1.bf16.xpose.msra.mxu0 %v1051
        %1073 = vmatprep.subr.bf16.mxu0 0
        %1074 = vmatpush1.bf16.xpose.msra.mxu0 %v1048
        %1075 = vmatprep.subr.bf16.mxu0 0
        %1076 = vmatpush2.bf16.xpose.msra.mxu0 0
        %1077 = vmatprep.subr.bf16.mxu0 0
        %1078 = vmatpush2.bf16.xpose.msra.mxu0 0
        %1079 = vmatprep.subr.bf16.mxu0 0
        %1080 = vmatpush2.bf16.xpose.msra.mxu0 0
        %1081 = vmatprep.subr.bf16.mxu0 0
        %1082 = vmatpush2.bf16.xpose.msra.mxu0 0
        %1083 = vmatprep.subr.bf16.mxu0 0
        %1084 = vmatpush2.bf16.xpose.msra.mxu0 0
        %1085 = vmatprep.subr.bf16.mxu0 0
        %1086 = vmatpush2.bf16.xpose.msra.mxu0 0
        %1087 = vmatprep.subr.bf16.mxu0 0
        %1088 = vmatpush2.bf16.xpose.msra.mxu0 0
        %1089 = vmatprep.subr.bf16.mxu0 0
        %1090 = vmatpush2.bf16.xpose.msra.mxu0 0
        %1091 = vmatprep.mubr.bf16.mxu0 0
        %1092 = vmatmul.mubr.bf16.gmra.mxu0 %v1048
        %v1093 = vpop.f32.mrf.mxu0
        %v1094 = vadd.f32 0.0, %v1093
        %v1095 = vpop.f32.mrf.mxu0
        %v1096 = vpop.f32.mrf.mxu0
        %v1097 = vadd.f32 0.0, %v1096
        %v1098 = vpop.f32.mrf.mxu0
        %1099 = vmatprep.mubr.bf16.mxu0 0
        %1100 = vmatmul.mubr.bf16.gmra.mxu0 %v1051
        %v1101 = vpop.f32.mrf.mxu0
        %v1102 = vadd.f32 0.0, %v1101
        %v1103 = vpop.f32.mrf.mxu0
        %v1104 = vpop.f32.mrf.mxu0
        %v1105 = vadd.f32 0.0, %v1104
        %v1106 = vpop.f32.mrf.mxu0
        %1107 = vmatprep.mubr.bf16.mxu0 0
        %1108 = vmatmul.mubr.bf16.gmra.mxu0 %v1054
        %v1109 = vpop.f32.mrf.mxu0
        %v1110 = vadd.f32 0.0, %v1109
        %v1111 = vpop.f32.mrf.mxu0
        %v1112 = vpop.f32.mrf.mxu0
        %v1113 = vadd.f32 0.0, %v1112
        %v1114 = vpop.f32.mrf.mxu0
        %1115 = vmatprep.mubr.bf16.mxu0 0
        %1116 = vmatmul.mubr.bf16.gmra.mxu0 %v1057
        %v1117 = vpop.f32.mrf.mxu0
        %v1118 = vadd.f32 0.0, %v1117
        %v1119 = vpop.f32.mrf.mxu0
        %v1120 = vpop.f32.mrf.mxu0
        %v1121 = vadd.f32 0.0, %v1120
        %v1122 = vpop.f32.mrf.mxu0
        %1123 = vdwg.mxu0
        %v1132 = vunpack.c.l.b16 %v347
        %v1133 = vunpack.c.l.b16 %v348
        %v1134 = vunpack.c.l.b16 %v349
        %v1135 = vunpack.c.l.b16 %v350
        %v1136 = vunpack.c.l.b16 %v351
        %v1137 = vunpack.c.l.b16 %v352
        %v1138 = vunpack.c.l.b16 %v353
        %v1139 = vunpack.c.l.b16 %v354
        %v1140 = vpack.c.b16 %v1133, %v1132
        %v1141 = vpack.c.b16 %v1135, %v1134
        %v1142 = vpack.c.b16 %v1137, %v1136
        %v1143 = vpack.c.b16 %v1139, %v1138
        %v1145 = vsel %vm464, %v1140, 0
        %v1148 = vsel %vm464, %v1141, 0
        %v1151 = vsel %vm464, %v1142, 0
        %v1154 = vsel %vm464, %v1143, 0
        %1156 = vmatprep.subr.bf16.mxu0 0
        %1157 = vmatpush1.bf16.xpose.msra.mxu0 0
        %1158 = vmatprep.subr.bf16.mxu0 0
        %1159 = vmatpush1.bf16.xpose.msra.mxu0 0
        %1160 = vmatprep.subr.bf16.mxu0 0
        %1161 = vmatpush1.bf16.xpose.msra.mxu0 0
        %1162 = vmatprep.subr.bf16.mxu0 0
        %1163 = vmatpush1.bf16.xpose.msra.mxu0 0
        %1164 = vmatprep.subr.bf16.mxu0 0
        %1165 = vmatpush1.bf16.xpose.msra.mxu0 %v1154
        %1166 = vmatprep.subr.bf16.mxu0 0
        %1167 = vmatpush1.bf16.xpose.msra.mxu0 %v1151
        %1168 = vmatprep.subr.bf16.mxu0 0
        %1169 = vmatpush1.bf16.xpose.msra.mxu0 %v1148
        %1170 = vmatprep.subr.bf16.mxu0 0
        %1171 = vmatpush1.bf16.xpose.msra.mxu0 %v1145
        %1172 = vmatprep.subr.bf16.mxu0 0
        %1173 = vmatpush2.bf16.xpose.msra.mxu0 0
        %1174 = vmatprep.subr.bf16.mxu0 0
        %1175 = vmatpush2.bf16.xpose.msra.mxu0 0
        %1176 = vmatprep.subr.bf16.mxu0 0
        %1177 = vmatpush2.bf16.xpose.msra.mxu0 0
        %1178 = vmatprep.subr.bf16.mxu0 0
        %1179 = vmatpush2.bf16.xpose.msra.mxu0 0
        %1180 = vmatprep.subr.bf16.mxu0 0
        %1181 = vmatpush2.bf16.xpose.msra.mxu0 0
        %1182 = vmatprep.subr.bf16.mxu0 0
        %1183 = vmatpush2.bf16.xpose.msra.mxu0 0
        %1184 = vmatprep.subr.bf16.mxu0 0
        %1185 = vmatpush2.bf16.xpose.msra.mxu0 0
        %1186 = vmatprep.subr.bf16.mxu0 0
        %1187 = vmatpush2.bf16.xpose.msra.mxu0 0
        %1188 = vmatprep.mubr.bf16.mxu0 0
        %1189 = vmatmul.mubr.bf16.gmra.mxu0 %v1145
        %v1190 = vpop.f32.mrf.mxu0
        %v1191 = vadd.f32 0.0, %v1190
        %v1192 = vpop.f32.mrf.mxu0
        %v1193 = vpop.f32.mrf.mxu0
        %v1194 = vadd.f32 0.0, %v1193
        %v1195 = vpop.f32.mrf.mxu0
        %1196 = vmatprep.mubr.bf16.mxu0 0
        %1197 = vmatmul.mubr.bf16.gmra.mxu0 %v1148
        %v1198 = vpop.f32.mrf.mxu0
        %v1199 = vadd.f32 0.0, %v1198
        %v1200 = vpop.f32.mrf.mxu0
        %v1201 = vpop.f32.mrf.mxu0
        %v1202 = vadd.f32 0.0, %v1201
        %v1203 = vpop.f32.mrf.mxu0
        %1204 = vmatprep.mubr.bf16.mxu0 0
        %1205 = vmatmul.mubr.bf16.gmra.mxu0 %v1151
        %v1206 = vpop.f32.mrf.mxu0
        %v1207 = vadd.f32 0.0, %v1206
        %v1208 = vpop.f32.mrf.mxu0
        %v1209 = vpop.f32.mrf.mxu0
        %v1210 = vadd.f32 0.0, %v1209
        %v1211 = vpop.f32.mrf.mxu0
        %1212 = vmatprep.mubr.bf16.mxu0 0
        %1213 = vmatmul.mubr.bf16.gmra.mxu0 %v1154
        %v1214 = vpop.f32.mrf.mxu0
        %v1215 = vadd.f32 0.0, %v1214
        %v1216 = vpop.f32.mrf.mxu0
        %v1217 = vpop.f32.mrf.mxu0
        %v1218 = vadd.f32 0.0, %v1217
        %v1219 = vpop.f32.mrf.mxu0
        %1220 = vdwg.mxu0
        %v1229 = vunpack.c.l.b16 %v355
        %v1230 = vunpack.c.l.b16 %v356
        %v1231 = vunpack.c.l.b16 %v357
        %v1232 = vunpack.c.l.b16 %v358
        %v1233 = vunpack.c.l.b16 %v359
        %v1234 = vunpack.c.l.b16 %v360
        %v1235 = vunpack.c.l.b16 %v361
        %v1236 = vunpack.c.l.b16 %v362
        %v1237 = vpack.c.b16 %v1230, %v1229
        %v1238 = vpack.c.b16 %v1232, %v1231
        %v1239 = vpack.c.b16 %v1234, %v1233
        %v1240 = vpack.c.b16 %v1236, %v1235
        %v1242 = vsel %vm464, %v1237, 0
        %v1245 = vsel %vm464, %v1238, 0
        %v1248 = vsel %vm464, %v1239, 0
        %v1251 = vsel %vm464, %v1240, 0
        %1253 = vmatprep.subr.bf16.mxu0 0
        %1254 = vmatpush1.bf16.xpose.msra.mxu0 0
        %1255 = vmatprep.subr.bf16.mxu0 0
        %1256 = vmatpush1.bf16.xpose.msra.mxu0 0
        %1257 = vmatprep.subr.bf16.mxu0 0
        %1258 = vmatpush1.bf16.xpose.msra.mxu0 0
        %1259 = vmatprep.subr.bf16.mxu0 0
        %1260 = vmatpush1.bf16.xpose.msra.mxu0 0
        %1261 = vmatprep.subr.bf16.mxu0 0
        %1262 = vmatpush1.bf16.xpose.msra.mxu0 %v1251
        %1263 = vmatprep.subr.bf16.mxu0 0
        %1264 = vmatpush1.bf16.xpose.msra.mxu0 %v1248
        %1265 = vmatprep.subr.bf16.mxu0 0
        %1266 = vmatpush1.bf16.xpose.msra.mxu0 %v1245
        %1267 = vmatprep.subr.bf16.mxu0 0
        %1268 = vmatpush1.bf16.xpose.msra.mxu0 %v1242
        %1269 = vmatprep.subr.bf16.mxu0 0
        %1270 = vmatpush2.bf16.xpose.msra.mxu0 0
        %1271 = vmatprep.subr.bf16.mxu0 0
        %1272 = vmatpush2.bf16.xpose.msra.mxu0 0
        %1273 = vmatprep.subr.bf16.mxu0 0
        %1274 = vmatpush2.bf16.xpose.msra.mxu0 0
        %1275 = vmatprep.subr.bf16.mxu0 0
        %1276 = vmatpush2.bf16.xpose.msra.mxu0 0
        %1277 = vmatprep.subr.bf16.mxu0 0
        %1278 = vmatpush2.bf16.xpose.msra.mxu0 0
        %1279 = vmatprep.subr.bf16.mxu0 0
        %1280 = vmatpush2.bf16.xpose.msra.mxu0 0
        %1281 = vmatprep.subr.bf16.mxu0 0
        %1282 = vmatpush2.bf16.xpose.msra.mxu0 0
        %1283 = vmatprep.subr.bf16.mxu0 0
        %1284 = vmatpush2.bf16.xpose.msra.mxu0 0
        %1285 = vmatprep.mubr.bf16.mxu0 0
        %1286 = vmatmul.mubr.bf16.gmra.mxu0 %v1242
        %v1287 = vpop.f32.mrf.mxu0
        %v1288 = vadd.f32 0.0, %v1287
        %v1289 = vpop.f32.mrf.mxu0
        %v1290 = vpop.f32.mrf.mxu0
        %v1291 = vadd.f32 0.0, %v1290
        %v1292 = vpop.f32.mrf.mxu0
        %1293 = vmatprep.mubr.bf16.mxu0 0
        %1294 = vmatmul.mubr.bf16.gmra.mxu0 %v1245
        %v1295 = vpop.f32.mrf.mxu0
        %v1296 = vadd.f32 0.0, %v1295
        %v1297 = vpop.f32.mrf.mxu0
        %v1298 = vpop.f32.mrf.mxu0
        %v1299 = vadd.f32 0.0, %v1298
        %v1300 = vpop.f32.mrf.mxu0
        %1301 = vmatprep.mubr.bf16.mxu0 0
        %1302 = vmatmul.mubr.bf16.gmra.mxu0 %v1248
        %v1303 = vpop.f32.mrf.mxu0
        %v1304 = vadd.f32 0.0, %v1303
        %v1305 = vpop.f32.mrf.mxu0
        %v1306 = vpop.f32.mrf.mxu0
        %v1307 = vadd.f32 0.0, %v1306
        %v1308 = vpop.f32.mrf.mxu0
        %1309 = vmatprep.mubr.bf16.mxu0 0
        %1310 = vmatmul.mubr.bf16.gmra.mxu0 %v1251
        %v1311 = vpop.f32.mrf.mxu0
        %v1312 = vadd.f32 0.0, %v1311
        %v1313 = vpop.f32.mrf.mxu0
        %v1314 = vpop.f32.mrf.mxu0
        %v1315 = vadd.f32 0.0, %v1314
        %v1316 = vpop.f32.mrf.mxu0
        %1317 = vdwg.mxu0
        %v1326 = vunpack.c.l.b16 %v363
        %v1327 = vunpack.c.l.b16 %v364
        %v1328 = vunpack.c.l.b16 %v365
        %v1329 = vunpack.c.l.b16 %v366
        %v1330 = vunpack.c.l.b16 %v367
        %v1331 = vunpack.c.l.b16 %v368
        %v1332 = vunpack.c.l.b16 %v369
        %v1333 = vunpack.c.l.b16 %v370
        %v1334 = vpack.c.b16 %v1327, %v1326
        %v1335 = vpack.c.b16 %v1329, %v1328
        %v1336 = vpack.c.b16 %v1331, %v1330
        %v1337 = vpack.c.b16 %v1333, %v1332
        %v1339 = vsel %vm464, %v1334, 0
        %v1342 = vsel %vm464, %v1335, 0
        %v1345 = vsel %vm464, %v1336, 0
        %v1348 = vsel %vm464, %v1337, 0
        %1350 = vmatprep.subr.bf16.mxu0 0
        %1351 = vmatpush1.bf16.xpose.msra.mxu0 0
        %1352 = vmatprep.subr.bf16.mxu0 0
        %1353 = vmatpush1.bf16.xpose.msra.mxu0 0
        %1354 = vmatprep.subr.bf16.mxu0 0
        %1355 = vmatpush1.bf16.xpose.msra.mxu0 0
        %1356 = vmatprep.subr.bf16.mxu0 0
        %1357 = vmatpush1.bf16.xpose.msra.mxu0 0
        %1358 = vmatprep.subr.bf16.mxu0 0
        %1359 = vmatpush1.bf16.xpose.msra.mxu0 %v1348
        %1360 = vmatprep.subr.bf16.mxu0 0
        %1361 = vmatpush1.bf16.xpose.msra.mxu0 %v1345
        %1362 = vmatprep.subr.bf16.mxu0 0
        %1363 = vmatpush1.bf16.xpose.msra.mxu0 %v1342
        %1364 = vmatprep.subr.bf16.mxu0 0
        %1365 = vmatpush1.bf16.xpose.msra.mxu0 %v1339
        %1366 = vmatprep.subr.bf16.mxu0 0
        %1367 = vmatpush2.bf16.xpose.msra.mxu0 0
        %1368 = vmatprep.subr.bf16.mxu0 0
        %1369 = vmatpush2.bf16.xpose.msra.mxu0 0
        %1370 = vmatprep.subr.bf16.mxu0 0
        %1371 = vmatpush2.bf16.xpose.msra.mxu0 0
        %1372 = vmatprep.subr.bf16.mxu0 0
        %1373 = vmatpush2.bf16.xpose.msra.mxu0 0
        %1374 = vmatprep.subr.bf16.mxu0 0
        %1375 = vmatpush2.bf16.xpose.msra.mxu0 0
        %1376 = vmatprep.subr.bf16.mxu0 0
        %1377 = vmatpush2.bf16.xpose.msra.mxu0 0
        %1378 = vmatprep.subr.bf16.mxu0 0
        %1379 = vmatpush2.bf16.xpose.msra.mxu0 0
        %1380 = vmatprep.subr.bf16.mxu0 0
        %1381 = vmatpush2.bf16.xpose.msra.mxu0 0
        %1382 = vmatprep.mubr.bf16.mxu0 0
        %1383 = vmatmul.mubr.bf16.gmra.mxu0 %v1339
        %v1384 = vpop.f32.mrf.mxu0
        %v1385 = vadd.f32 0.0, %v1384
        %v1386 = vpop.f32.mrf.mxu0
        %v1387 = vpop.f32.mrf.mxu0
        %v1388 = vadd.f32 0.0, %v1387
        %v1389 = vpop.f32.mrf.mxu0
        %1390 = vmatprep.mubr.bf16.mxu0 0
        %1391 = vmatmul.mubr.bf16.gmra.mxu0 %v1342
        %v1392 = vpop.f32.mrf.mxu0
        %v1393 = vadd.f32 0.0, %v1392
        %v1394 = vpop.f32.mrf.mxu0
        %v1395 = vpop.f32.mrf.mxu0
        %v1396 = vadd.f32 0.0, %v1395
        %v1397 = vpop.f32.mrf.mxu0
        %1398 = vmatprep.mubr.bf16.mxu0 0
        %1399 = vmatmul.mubr.bf16.gmra.mxu0 %v1345
        %v1400 = vpop.f32.mrf.mxu0
        %v1401 = vadd.f32 0.0, %v1400
        %v1402 = vpop.f32.mrf.mxu0
        %v1403 = vpop.f32.mrf.mxu0
        %v1404 = vadd.f32 0.0, %v1403
        %v1405 = vpop.f32.mrf.mxu0
        %1406 = vmatprep.mubr.bf16.mxu0 0
        %1407 = vmatmul.mubr.bf16.gmra.mxu0 %v1348
        %v1408 = vpop.f32.mrf.mxu0
        %v1409 = vadd.f32 0.0, %v1408
        %v1410 = vpop.f32.mrf.mxu0
        %v1411 = vpop.f32.mrf.mxu0
        %v1412 = vadd.f32 0.0, %v1411
        %v1413 = vpop.f32.mrf.mxu0
        %1414 = vdwg.mxu0
        %v1423 = vunpack.c.l.b16 %v371
        %v1424 = vunpack.c.l.b16 %v372
        %v1425 = vunpack.c.l.b16 %v373
        %v1426 = vunpack.c.l.b16 %v374
        %v1427 = vunpack.c.l.b16 %v375
        %v1428 = vunpack.c.l.b16 %v376
        %v1429 = vunpack.c.l.b16 %v377
        %v1430 = vunpack.c.l.b16 %v378
        %v1431 = vpack.c.b16 %v1424, %v1423
        %v1432 = vpack.c.b16 %v1426, %v1425
        %v1433 = vpack.c.b16 %v1428, %v1427
        %v1434 = vpack.c.b16 %v1430, %v1429
        %v1436 = vsel %vm464, %v1431, 0
        %v1439 = vsel %vm464, %v1432, 0
        %v1442 = vsel %vm464, %v1433, 0
        %v1445 = vsel %vm464, %v1434, 0
        %1447 = vmatprep.subr.bf16.mxu0 0
        %1448 = vmatpush1.bf16.xpose.msra.mxu0 0
        %1449 = vmatprep.subr.bf16.mxu0 0
        %1450 = vmatpush1.bf16.xpose.msra.mxu0 0
        %1451 = vmatprep.subr.bf16.mxu0 0
        %1452 = vmatpush1.bf16.xpose.msra.mxu0 0
        %1453 = vmatprep.subr.bf16.mxu0 0
        %1454 = vmatpush1.bf16.xpose.msra.mxu0 0
        %1455 = vmatprep.subr.bf16.mxu0 0
        %1456 = vmatpush1.bf16.xpose.msra.mxu0 %v1445
        %1457 = vmatprep.subr.bf16.mxu0 0
        %1458 = vmatpush1.bf16.xpose.msra.mxu0 %v1442
        %1459 = vmatprep.subr.bf16.mxu0 0
        %1460 = vmatpush1.bf16.xpose.msra.mxu0 %v1439
        %1461 = vmatprep.subr.bf16.mxu0 0
        %1462 = vmatpush1.bf16.xpose.msra.mxu0 %v1436
        %1463 = vmatprep.subr.bf16.mxu0 0
        %1464 = vmatpush2.bf16.xpose.msra.mxu0 0
        %1465 = vmatprep.subr.bf16.mxu0 0
        %1466 = vmatpush2.bf16.xpose.msra.mxu0 0
        %1467 = vmatprep.subr.bf16.mxu0 0
        %1468 = vmatpush2.bf16.xpose.msra.mxu0 0
        %1469 = vmatprep.subr.bf16.mxu0 0
        %1470 = vmatpush2.bf16.xpose.msra.mxu0 0
        %1471 = vmatprep.subr.bf16.mxu0 0
        %1472 = vmatpush2.bf16.xpose.msra.mxu0 0
        %1473 = vmatprep.subr.bf16.mxu0 0
        %1474 = vmatpush2.bf16.xpose.msra.mxu0 0
        %1475 = vmatprep.subr.bf16.mxu0 0
        %1476 = vmatpush2.bf16.xpose.msra.mxu0 0
        %1477 = vmatprep.subr.bf16.mxu0 0
        %1478 = vmatpush2.bf16.xpose.msra.mxu0 0
        %1479 = vmatprep.mubr.bf16.mxu0 0
        %1480 = vmatmul.mubr.bf16.gmra.mxu0 %v1436
        %v1481 = vpop.f32.mrf.mxu0
        %v1482 = vadd.f32 0.0, %v1481
        %v1483 = vpop.f32.mrf.mxu0
        %v1484 = vpop.f32.mrf.mxu0
        %v1485 = vadd.f32 0.0, %v1484
        %v1486 = vpop.f32.mrf.mxu0
        %1487 = vmatprep.mubr.bf16.mxu0 0
        %1488 = vmatmul.mubr.bf16.gmra.mxu0 %v1439
        %v1489 = vpop.f32.mrf.mxu0
        %v1490 = vadd.f32 0.0, %v1489
        %v1491 = vpop.f32.mrf.mxu0
        %v1492 = vpop.f32.mrf.mxu0
        %v1493 = vadd.f32 0.0, %v1492
        %v1494 = vpop.f32.mrf.mxu0
        %1495 = vmatprep.mubr.bf16.mxu0 0
        %1496 = vmatmul.mubr.bf16.gmra.mxu0 %v1442
        %v1497 = vpop.f32.mrf.mxu0
        %v1498 = vadd.f32 0.0, %v1497
        %v1499 = vpop.f32.mrf.mxu0
        %v1500 = vpop.f32.mrf.mxu0
        %v1501 = vadd.f32 0.0, %v1500
        %v1502 = vpop.f32.mrf.mxu0
        %1503 = vmatprep.mubr.bf16.mxu0 0
        %1504 = vmatmul.mubr.bf16.gmra.mxu0 %v1445
        %v1505 = vpop.f32.mrf.mxu0
        %v1506 = vadd.f32 0.0, %v1505
        %v1507 = vpop.f32.mrf.mxu0
        %v1508 = vpop.f32.mrf.mxu0
        %v1509 = vadd.f32 0.0, %v1508
        %v1510 = vpop.f32.mrf.mxu0
        %1511 = vdwg.mxu0
        %v1520 = vunpack.c.l.b16 %v379
        %v1521 = vunpack.c.l.b16 %v380
        %v1522 = vunpack.c.l.b16 %v381
        %v1523 = vunpack.c.l.b16 %v382
        %v1524 = vunpack.c.l.b16 %v383
        %v1525 = vunpack.c.l.b16 %v384
        %v1526 = vunpack.c.l.b16 %v385
        %v1527 = vunpack.c.l.b16 %v386
        %v1528 = vpack.c.b16 %v1521, %v1520
        %v1529 = vpack.c.b16 %v1523, %v1522
        %v1530 = vpack.c.b16 %v1525, %v1524
        %v1531 = vpack.c.b16 %v1527, %v1526
        %v1533 = vsel %vm464, %v1528, 0
        %v1536 = vsel %vm464, %v1529, 0
        %v1539 = vsel %vm464, %v1530, 0
        %v1542 = vsel %vm464, %v1531, 0
        %1544 = vmatprep.subr.bf16.mxu0 0
        %1545 = vmatpush1.bf16.xpose.msra.mxu0 0
        %1546 = vmatprep.subr.bf16.mxu0 0
        %1547 = vmatpush1.bf16.xpose.msra.mxu0 0
        %1548 = vmatprep.subr.bf16.mxu0 0
        %1549 = vmatpush1.bf16.xpose.msra.mxu0 0
        %1550 = vmatprep.subr.bf16.mxu0 0
        %1551 = vmatpush1.bf16.xpose.msra.mxu0 0
        %1552 = vmatprep.subr.bf16.mxu0 0
        %1553 = vmatpush1.bf16.xpose.msra.mxu0 %v1542
        %1554 = vmatprep.subr.bf16.mxu0 0
        %1555 = vmatpush1.bf16.xpose.msra.mxu0 %v1539
        %1556 = vmatprep.subr.bf16.mxu0 0
        %1557 = vmatpush1.bf16.xpose.msra.mxu0 %v1536
        %1558 = vmatprep.subr.bf16.mxu0 0
        %1559 = vmatpush1.bf16.xpose.msra.mxu0 %v1533
        %1560 = vmatprep.subr.bf16.mxu0 0
        %1561 = vmatpush2.bf16.xpose.msra.mxu0 0
        %1562 = vmatprep.subr.bf16.mxu0 0
        %1563 = vmatpush2.bf16.xpose.msra.mxu0 0
        %1564 = vmatprep.subr.bf16.mxu0 0
        %1565 = vmatpush2.bf16.xpose.msra.mxu0 0
        %1566 = vmatprep.subr.bf16.mxu0 0
        %1567 = vmatpush2.bf16.xpose.msra.mxu0 0
        %1568 = vmatprep.subr.bf16.mxu0 0
        %1569 = vmatpush2.bf16.xpose.msra.mxu0 0
        %1570 = vmatprep.subr.bf16.mxu0 0
        %1571 = vmatpush2.bf16.xpose.msra.mxu0 0
        %1572 = vmatprep.subr.bf16.mxu0 0
        %1573 = vmatpush2.bf16.xpose.msra.mxu0 0
        %1574 = vmatprep.subr.bf16.mxu0 0
        %1575 = vmatpush2.bf16.xpose.msra.mxu0 0
        %1576 = vmatprep.mubr.bf16.mxu0 0
        %1577 = vmatmul.mubr.bf16.gmra.mxu0 %v1533
        %v1578 = vpop.f32.mrf.mxu0
        %v1579 = vadd.f32 0.0, %v1578
        %v1580 = vpop.f32.mrf.mxu0
        %v1581 = vpop.f32.mrf.mxu0
        %v1582 = vadd.f32 0.0, %v1581
        %v1583 = vpop.f32.mrf.mxu0
        %1584 = vmatprep.mubr.bf16.mxu0 0
        %1585 = vmatmul.mubr.bf16.gmra.mxu0 %v1536
        %v1586 = vpop.f32.mrf.mxu0
        %v1587 = vadd.f32 0.0, %v1586
        %v1588 = vpop.f32.mrf.mxu0
        %v1589 = vpop.f32.mrf.mxu0
        %v1590 = vadd.f32 0.0, %v1589
        %v1591 = vpop.f32.mrf.mxu0
        %1592 = vmatprep.mubr.bf16.mxu0 0
        %1593 = vmatmul.mubr.bf16.gmra.mxu0 %v1539
        %v1594 = vpop.f32.mrf.mxu0
        %v1595 = vadd.f32 0.0, %v1594
        %v1596 = vpop.f32.mrf.mxu0
        %v1597 = vpop.f32.mrf.mxu0
        %v1598 = vadd.f32 0.0, %v1597
        %v1599 = vpop.f32.mrf.mxu0
        %1600 = vmatprep.mubr.bf16.mxu0 0
        %1601 = vmatmul.mubr.bf16.gmra.mxu0 %v1542
        %v1602 = vpop.f32.mrf.mxu0
        %v1603 = vadd.f32 0.0, %v1602
        %v1604 = vpop.f32.mrf.mxu0
        %v1605 = vpop.f32.mrf.mxu0
        %v1606 = vadd.f32 0.0, %v1605
        %v1607 = vpop.f32.mrf.mxu0
        %1608 = vdwg.mxu0
        %v1617 = vunpack.c.l.b16 %v387
        %v1618 = vunpack.c.l.b16 %v388
        %v1619 = vunpack.c.l.b16 %v389
        %v1620 = vunpack.c.l.b16 %v390
        %v1621 = vunpack.c.l.b16 %v391
        %v1622 = vunpack.c.l.b16 %v392
        %v1623 = vunpack.c.l.b16 %v393
        %v1624 = vunpack.c.l.b16 %v394
        %v1625 = vpack.c.b16 %v1618, %v1617
        %v1626 = vpack.c.b16 %v1620, %v1619
        %v1627 = vpack.c.b16 %v1622, %v1621
        %v1628 = vpack.c.b16 %v1624, %v1623
        %v1630 = vsel %vm464, %v1625, 0
        %v1633 = vsel %vm464, %v1626, 0
        %v1636 = vsel %vm464, %v1627, 0
        %v1639 = vsel %vm464, %v1628, 0
        %1641 = vmatprep.subr.bf16.mxu0 0
        %1642 = vmatpush1.bf16.xpose.msra.mxu0 0
        %1643 = vmatprep.subr.bf16.mxu0 0
        %1644 = vmatpush1.bf16.xpose.msra.mxu0 0
        %1645 = vmatprep.subr.bf16.mxu0 0
        %1646 = vmatpush1.bf16.xpose.msra.mxu0 0
        %1647 = vmatprep.subr.bf16.mxu0 0
        %1648 = vmatpush1.bf16.xpose.msra.mxu0 0
        %1649 = vmatprep.subr.bf16.mxu0 0
        %1650 = vmatpush1.bf16.xpose.msra.mxu0 %v1639
        %1651 = vmatprep.subr.bf16.mxu0 0
        %1652 = vmatpush1.bf16.xpose.msra.mxu0 %v1636
        %1653 = vmatprep.subr.bf16.mxu0 0
        %1654 = vmatpush1.bf16.xpose.msra.mxu0 %v1633
        %1655 = vmatprep.subr.bf16.mxu0 0
        %1656 = vmatpush1.bf16.xpose.msra.mxu0 %v1630
        %1657 = vmatprep.subr.bf16.mxu0 0
        %1658 = vmatpush2.bf16.xpose.msra.mxu0 0
        %1659 = vmatprep.subr.bf16.mxu0 0
        %1660 = vmatpush2.bf16.xpose.msra.mxu0 0
        %1661 = vmatprep.subr.bf16.mxu0 0
        %1662 = vmatpush2.bf16.xpose.msra.mxu0 0
        %1663 = vmatprep.subr.bf16.mxu0 0
        %1664 = vmatpush2.bf16.xpose.msra.mxu0 0
        %1665 = vmatprep.subr.bf16.mxu0 0
        %1666 = vmatpush2.bf16.xpose.msra.mxu0 0
        %1667 = vmatprep.subr.bf16.mxu0 0
        %1668 = vmatpush2.bf16.xpose.msra.mxu0 0
        %1669 = vmatprep.subr.bf16.mxu0 0
        %1670 = vmatpush2.bf16.xpose.msra.mxu0 0
        %1671 = vmatprep.subr.bf16.mxu0 0
        %1672 = vmatpush2.bf16.xpose.msra.mxu0 0
        %1673 = vmatprep.mubr.bf16.mxu0 0
        %1674 = vmatmul.mubr.bf16.gmra.mxu0 %v1630
        %v1675 = vpop.f32.mrf.mxu0
        %v1676 = vadd.f32 0.0, %v1675
        %v1677 = vpop.f32.mrf.mxu0
        %v1678 = vpop.f32.mrf.mxu0
        %v1679 = vadd.f32 0.0, %v1678
        %v1680 = vpop.f32.mrf.mxu0
        %1681 = vmatprep.mubr.bf16.mxu0 0
        %1682 = vmatmul.mubr.bf16.gmra.mxu0 %v1633
        %v1683 = vpop.f32.mrf.mxu0
        %v1684 = vadd.f32 0.0, %v1683
        %v1685 = vpop.f32.mrf.mxu0
        %v1686 = vpop.f32.mrf.mxu0
        %v1687 = vadd.f32 0.0, %v1686
        %v1688 = vpop.f32.mrf.mxu0
        %1689 = vmatprep.mubr.bf16.mxu0 0
        %1690 = vmatmul.mubr.bf16.gmra.mxu0 %v1636
        %v1691 = vpop.f32.mrf.mxu0
        %v1692 = vadd.f32 0.0, %v1691
        %v1693 = vpop.f32.mrf.mxu0
        %v1694 = vpop.f32.mrf.mxu0
        %v1695 = vadd.f32 0.0, %v1694
        %v1696 = vpop.f32.mrf.mxu0
        %1697 = vmatprep.mubr.bf16.mxu0 0
        %1698 = vmatmul.mubr.bf16.gmra.mxu0 %v1639
        %v1699 = vpop.f32.mrf.mxu0
        %v1700 = vadd.f32 0.0, %v1699
        %v1701 = vpop.f32.mrf.mxu0
        %v1702 = vpop.f32.mrf.mxu0
        %v1703 = vadd.f32 0.0, %v1702
        %v1704 = vpop.f32.mrf.mxu0
        %1705 = vdwg.mxu0
        %v1714 = vunpack.c.l.b16 %v395
        %v1715 = vunpack.c.l.b16 %v396
        %v1716 = vunpack.c.l.b16 %v397
        %v1717 = vunpack.c.l.b16 %v398
        %v1718 = vunpack.c.l.b16 %v399
        %v1719 = vunpack.c.l.b16 %v400
        %v1720 = vunpack.c.l.b16 %v401
        %v1721 = vunpack.c.l.b16 %v402
        %v1722 = vpack.c.b16 %v1715, %v1714
        %v1723 = vpack.c.b16 %v1717, %v1716
        %v1724 = vpack.c.b16 %v1719, %v1718
        %v1725 = vpack.c.b16 %v1721, %v1720
        %v1727 = vsel %vm464, %v1722, 0
        %v1730 = vsel %vm464, %v1723, 0
        %v1733 = vsel %vm464, %v1724, 0
        %v1736 = vsel %vm464, %v1725, 0
        %1738 = vmatprep.subr.bf16.mxu0 0
        %1739 = vmatpush1.bf16.xpose.msra.mxu0 0
        %1740 = vmatprep.subr.bf16.mxu0 0
        %1741 = vmatpush1.bf16.xpose.msra.mxu0 0
        %1742 = vmatprep.subr.bf16.mxu0 0
        %1743 = vmatpush1.bf16.xpose.msra.mxu0 0
        %1744 = vmatprep.subr.bf16.mxu0 0
        %1745 = vmatpush1.bf16.xpose.msra.mxu0 0
        %1746 = vmatprep.subr.bf16.mxu0 0
        %1747 = vmatpush1.bf16.xpose.msra.mxu0 %v1736
        %1748 = vmatprep.subr.bf16.mxu0 0
        %1749 = vmatpush1.bf16.xpose.msra.mxu0 %v1733
        %1750 = vmatprep.subr.bf16.mxu0 0
        %1751 = vmatpush1.bf16.xpose.msra.mxu0 %v1730
        %1752 = vmatprep.subr.bf16.mxu0 0
        %1753 = vmatpush1.bf16.xpose.msra.mxu0 %v1727
        %1754 = vmatprep.subr.bf16.mxu0 0
        %1755 = vmatpush2.bf16.xpose.msra.mxu0 0
        %1756 = vmatprep.subr.bf16.mxu0 0
        %1757 = vmatpush2.bf16.xpose.msra.mxu0 0
        %1758 = vmatprep.subr.bf16.mxu0 0
        %1759 = vmatpush2.bf16.xpose.msra.mxu0 0
        %1760 = vmatprep.subr.bf16.mxu0 0
        %1761 = vmatpush2.bf16.xpose.msra.mxu0 0
        %1762 = vmatprep.subr.bf16.mxu0 0
        %1763 = vmatpush2.bf16.xpose.msra.mxu0 0
        %1764 = vmatprep.subr.bf16.mxu0 0
        %1765 = vmatpush2.bf16.xpose.msra.mxu0 0
        %1766 = vmatprep.subr.bf16.mxu0 0
        %1767 = vmatpush2.bf16.xpose.msra.mxu0 0
        %1768 = vmatprep.subr.bf16.mxu0 0
        %1769 = vmatpush2.bf16.xpose.msra.mxu0 0
        %1770 = vmatprep.mubr.bf16.mxu0 0
        %1771 = vmatmul.mubr.bf16.gmra.mxu0 %v1727
        %v1772 = vpop.f32.mrf.mxu0
        %v1773 = vadd.f32 0.0, %v1772
        %v1774 = vpop.f32.mrf.mxu0
        %v1775 = vpop.f32.mrf.mxu0
        %v1776 = vadd.f32 0.0, %v1775
        %v1777 = vpop.f32.mrf.mxu0
        %1778 = vmatprep.mubr.bf16.mxu0 0
        %1779 = vmatmul.mubr.bf16.gmra.mxu0 %v1730
        %v1780 = vpop.f32.mrf.mxu0
        %v1781 = vadd.f32 0.0, %v1780
        %v1782 = vpop.f32.mrf.mxu0
        %v1783 = vpop.f32.mrf.mxu0
        %v1784 = vadd.f32 0.0, %v1783
        %v1785 = vpop.f32.mrf.mxu0
        %1786 = vmatprep.mubr.bf16.mxu0 0
        %1787 = vmatmul.mubr.bf16.gmra.mxu0 %v1733
        %v1788 = vpop.f32.mrf.mxu0
        %v1789 = vadd.f32 0.0, %v1788
        %v1790 = vpop.f32.mrf.mxu0
        %v1791 = vpop.f32.mrf.mxu0
        %v1792 = vadd.f32 0.0, %v1791
        %v1793 = vpop.f32.mrf.mxu0
        %1794 = vmatprep.mubr.bf16.mxu0 0
        %1795 = vmatmul.mubr.bf16.gmra.mxu0 %v1736
        %v1796 = vpop.f32.mrf.mxu0
        %v1797 = vadd.f32 0.0, %v1796
        %v1798 = vpop.f32.mrf.mxu0
        %v1799 = vpop.f32.mrf.mxu0
        %v1800 = vadd.f32 0.0, %v1799
        %v1801 = vpop.f32.mrf.mxu0
        %1802 = vdwg.mxu0
        %v1811 = vunpack.c.l.b16 %v403
        %v1812 = vunpack.c.l.b16 %v404
        %v1813 = vunpack.c.l.b16 %v405
        %v1814 = vunpack.c.l.b16 %v406
        %v1815 = vunpack.c.l.b16 %v407
        %v1816 = vunpack.c.l.b16 %v408
        %v1817 = vunpack.c.l.b16 %v409
        %v1818 = vunpack.c.l.b16 %v410
        %v1819 = vpack.c.b16 %v1812, %v1811
        %v1820 = vpack.c.b16 %v1814, %v1813
        %v1821 = vpack.c.b16 %v1816, %v1815
        %v1822 = vpack.c.b16 %v1818, %v1817
        %v1824 = vsel %vm464, %v1819, 0
        %v1827 = vsel %vm464, %v1820, 0
        %v1830 = vsel %vm464, %v1821, 0
        %v1833 = vsel %vm464, %v1822, 0
        %1835 = vmatprep.subr.bf16.mxu0 0
        %1836 = vmatpush1.bf16.xpose.msra.mxu0 0
        %1837 = vmatprep.subr.bf16.mxu0 0
        %1838 = vmatpush1.bf16.xpose.msra.mxu0 0
        %1839 = vmatprep.subr.bf16.mxu0 0
        %1840 = vmatpush1.bf16.xpose.msra.mxu0 0
        %1841 = vmatprep.subr.bf16.mxu0 0
        %1842 = vmatpush1.bf16.xpose.msra.mxu0 0
        %1843 = vmatprep.subr.bf16.mxu0 0
        %1844 = vmatpush1.bf16.xpose.msra.mxu0 %v1833
        %1845 = vmatprep.subr.bf16.mxu0 0
        %1846 = vmatpush1.bf16.xpose.msra.mxu0 %v1830
        %1847 = vmatprep.subr.bf16.mxu0 0
        %1848 = vmatpush1.bf16.xpose.msra.mxu0 %v1827
        %1849 = vmatprep.subr.bf16.mxu0 0
        %1850 = vmatpush1.bf16.xpose.msra.mxu0 %v1824
        %1851 = vmatprep.subr.bf16.mxu0 0
        %1852 = vmatpush2.bf16.xpose.msra.mxu0 0
        %1853 = vmatprep.subr.bf16.mxu0 0
        %1854 = vmatpush2.bf16.xpose.msra.mxu0 0
        %1855 = vmatprep.subr.bf16.mxu0 0
        %1856 = vmatpush2.bf16.xpose.msra.mxu0 0
        %1857 = vmatprep.subr.bf16.mxu0 0
        %1858 = vmatpush2.bf16.xpose.msra.mxu0 0
        %1859 = vmatprep.subr.bf16.mxu0 0
        %1860 = vmatpush2.bf16.xpose.msra.mxu0 0
        %1861 = vmatprep.subr.bf16.mxu0 0
        %1862 = vmatpush2.bf16.xpose.msra.mxu0 0
        %1863 = vmatprep.subr.bf16.mxu0 0
        %1864 = vmatpush2.bf16.xpose.msra.mxu0 0
        %1865 = vmatprep.subr.bf16.mxu0 0
        %1866 = vmatpush2.bf16.xpose.msra.mxu0 0
        %1867 = vmatprep.mubr.bf16.mxu0 0
        %1868 = vmatmul.mubr.bf16.gmra.mxu0 %v1824
        %v1869 = vpop.f32.mrf.mxu0
        %v1870 = vadd.f32 0.0, %v1869
        %v1871 = vpop.f32.mrf.mxu0
        %v1872 = vpop.f32.mrf.mxu0
        %v1873 = vadd.f32 0.0, %v1872
        %v1874 = vpop.f32.mrf.mxu0
        %1875 = vmatprep.mubr.bf16.mxu0 0
        %1876 = vmatmul.mubr.bf16.gmra.mxu0 %v1827
        %v1877 = vpop.f32.mrf.mxu0
        %v1878 = vadd.f32 0.0, %v1877
        %v1879 = vpop.f32.mrf.mxu0
        %v1880 = vpop.f32.mrf.mxu0
        %v1881 = vadd.f32 0.0, %v1880
        %v1882 = vpop.f32.mrf.mxu0
        %1883 = vmatprep.mubr.bf16.mxu0 0
        %1884 = vmatmul.mubr.bf16.gmra.mxu0 %v1830
        %v1885 = vpop.f32.mrf.mxu0
        %v1886 = vadd.f32 0.0, %v1885
        %v1887 = vpop.f32.mrf.mxu0
        %v1888 = vpop.f32.mrf.mxu0
        %v1889 = vadd.f32 0.0, %v1888
        %v1890 = vpop.f32.mrf.mxu0
        %1891 = vmatprep.mubr.bf16.mxu0 0
        %1892 = vmatmul.mubr.bf16.gmra.mxu0 %v1833
        %v1893 = vpop.f32.mrf.mxu0
        %v1894 = vadd.f32 0.0, %v1893
        %v1895 = vpop.f32.mrf.mxu0
        %v1896 = vpop.f32.mrf.mxu0
        %v1897 = vadd.f32 0.0, %v1896
        %v1898 = vpop.f32.mrf.mxu0
        %1899 = vdwg.mxu0
        %v1908 = vunpack.c.l.b16 %v411
        %v1909 = vunpack.c.l.b16 %v412
        %v1910 = vunpack.c.l.b16 %v413
        %v1911 = vunpack.c.l.b16 %v414
        %v1912 = vunpack.c.l.b16 %v415
        %v1913 = vunpack.c.l.b16 %v416
        %v1914 = vunpack.c.l.b16 %v417
        %v1915 = vunpack.c.l.b16 %v418
        %v1916 = vpack.c.b16 %v1909, %v1908
        %v1917 = vpack.c.b16 %v1911, %v1910
        %v1918 = vpack.c.b16 %v1913, %v1912
        %v1919 = vpack.c.b16 %v1915, %v1914
        %v1921 = vsel %vm464, %v1916, 0
        %v1924 = vsel %vm464, %v1917, 0
        %v1927 = vsel %vm464, %v1918, 0
        %v1930 = vsel %vm464, %v1919, 0
        %1932 = vmatprep.subr.bf16.mxu0 0
        %1933 = vmatpush1.bf16.xpose.msra.mxu0 0
        %1934 = vmatprep.subr.bf16.mxu0 0
        %1935 = vmatpush1.bf16.xpose.msra.mxu0 0
        %1936 = vmatprep.subr.bf16.mxu0 0
        %1937 = vmatpush1.bf16.xpose.msra.mxu0 0
        %1938 = vmatprep.subr.bf16.mxu0 0
        %1939 = vmatpush1.bf16.xpose.msra.mxu0 0
        %1940 = vmatprep.subr.bf16.mxu0 0
        %1941 = vmatpush1.bf16.xpose.msra.mxu0 %v1930
        %1942 = vmatprep.subr.bf16.mxu0 0
        %1943 = vmatpush1.bf16.xpose.msra.mxu0 %v1927
        %1944 = vmatprep.subr.bf16.mxu0 0
        %1945 = vmatpush1.bf16.xpose.msra.mxu0 %v1924
        %1946 = vmatprep.subr.bf16.mxu0 0
        %1947 = vmatpush1.bf16.xpose.msra.mxu0 %v1921
        %1948 = vmatprep.subr.bf16.mxu0 0
        %1949 = vmatpush2.bf16.xpose.msra.mxu0 0
        %1950 = vmatprep.subr.bf16.mxu0 0
        %1951 = vmatpush2.bf16.xpose.msra.mxu0 0
        %1952 = vmatprep.subr.bf16.mxu0 0
        %1953 = vmatpush2.bf16.xpose.msra.mxu0 0
        %1954 = vmatprep.subr.bf16.mxu0 0
        %1955 = vmatpush2.bf16.xpose.msra.mxu0 0
        %1956 = vmatprep.subr.bf16.mxu0 0
        %1957 = vmatpush2.bf16.xpose.msra.mxu0 0
        %1958 = vmatprep.subr.bf16.mxu0 0
        %1959 = vmatpush2.bf16.xpose.msra.mxu0 0
        %1960 = vmatprep.subr.bf16.mxu0 0
        %1961 = vmatpush2.bf16.xpose.msra.mxu0 0
        %1962 = vmatprep.subr.bf16.mxu0 0
        %1963 = vmatpush2.bf16.xpose.msra.mxu0 0
        %1964 = vmatprep.mubr.bf16.mxu0 0
        %1965 = vmatmul.mubr.bf16.gmra.mxu0 %v1921
        %v1966 = vpop.f32.mrf.mxu0
        %v1967 = vadd.f32 0.0, %v1966
        %v1968 = vpop.f32.mrf.mxu0
        %v1969 = vpop.f32.mrf.mxu0
        %v1970 = vadd.f32 0.0, %v1969
        %v1971 = vpop.f32.mrf.mxu0
        %1972 = vmatprep.mubr.bf16.mxu0 0
        %1973 = vmatmul.mubr.bf16.gmra.mxu0 %v1924
        %v1974 = vpop.f32.mrf.mxu0
        %v1975 = vadd.f32 0.0, %v1974
        %v1976 = vpop.f32.mrf.mxu0
        %v1977 = vpop.f32.mrf.mxu0
        %v1978 = vadd.f32 0.0, %v1977
        %v1979 = vpop.f32.mrf.mxu0
        %1980 = vmatprep.mubr.bf16.mxu0 0
        %1981 = vmatmul.mubr.bf16.gmra.mxu0 %v1927
        %v1982 = vpop.f32.mrf.mxu0
        %v1983 = vadd.f32 0.0, %v1982
        %v1984 = vpop.f32.mrf.mxu0
        %v1985 = vpop.f32.mrf.mxu0
        %v1986 = vadd.f32 0.0, %v1985
        %v1987 = vpop.f32.mrf.mxu0
        %1988 = vmatprep.mubr.bf16.mxu0 0
        %1989 = vmatmul.mubr.bf16.gmra.mxu0 %v1930
        %v1990 = vpop.f32.mrf.mxu0
        %v1991 = vadd.f32 0.0, %v1990
        %v1992 = vpop.f32.mrf.mxu0
        %v1993 = vpop.f32.mrf.mxu0
        %v1994 = vadd.f32 0.0, %v1993
        %v1995 = vpop.f32.mrf.mxu0
        %1996 = vdwg.mxu0
        %v1997 = vlaneseq
        %v1998 = vshrl.u32 %v1997, 7
        %v1999 = vadd.s32 %v1998, 8
        %v2000 = vadd.s32 %v1998, 16
        %v2001 = vadd.s32 %v1998, 24
        %v2002 = vadd.s32 %v1998, 32
        %v2003 = vadd.s32 %v1998, 40
        %v2004 = vadd.s32 %v1998, 48
        %v2005 = vadd.s32 %v1998, 56
        %vm2006 = vcmp.eq.s32.totalorder %v1998, %v420
        %vm2007 = vcmp.eq.s32.totalorder %v1999, %v420
        %vm2008 = vcmp.eq.s32.totalorder %v2000, %v420
        %vm2009 = vcmp.eq.s32.totalorder %v2001, %v420
        %vm2010 = vcmp.eq.s32.totalorder %v2002, %v420
        %vm2011 = vcmp.eq.s32.totalorder %v2003, %v420
        %vm2012 = vcmp.eq.s32.totalorder %v2004, %v420
        %vm2013 = vcmp.eq.s32.totalorder %v2005, %v420
        %v2014 = vsel %vm2006, 1, 0
        %v2015 = vsel %vm2007, 1, 0
        %v2016 = vsel %vm2008, 1, 0
        %v2017 = vsel %vm2009, 1, 0
        %v2018 = vsel %vm2010, 1, 0
        %v2019 = vsel %vm2011, 1, 0
        %v2020 = vsel %vm2012, 1, 0
        %v2021 = vsel %vm2013, 1, 0
        %v2022 = vcvt.s32.f32 %v2014
        %v2023 = vcvt.s32.f32 %v2015
        %v2024 = vcvt.s32.f32 %v2016
        %v2025 = vcvt.s32.f32 %v2017
        %v2026 = vcvt.s32.f32 %v2018
        %v2027 = vcvt.s32.f32 %v2019
        %v2028 = vcvt.s32.f32 %v2020
        %v2029 = vcvt.s32.f32 %v2021
        %v2030 = vsub.f32 %v512, %v2022
        %v2031 = vsub.f32 %v515, %v2023
        %v2032 = vsub.f32 %v520, %v2024
        %v2033 = vsub.f32 %v523, %v2025
        %v2034 = vsub.f32 %v528, %v2026
        %v2035 = vsub.f32 %v531, %v2027
        %v2036 = vsub.f32 %v536, %v2028
        %v2037 = vsub.f32 %v539, %v2029
        %v2038 = vsub.f32 %v609, %v2022
        %v2039 = vsub.f32 %v612, %v2023
        %v2040 = vsub.f32 %v617, %v2024
        %v2041 = vsub.f32 %v620, %v2025
        %v2042 = vsub.f32 %v625, %v2026
        %v2043 = vsub.f32 %v628, %v2027
        %v2044 = vsub.f32 %v633, %v2028
        %v2045 = vsub.f32 %v636, %v2029
        %v2046 = vsub.f32 %v706, %v2022
        %v2047 = vsub.f32 %v709, %v2023
        %v2048 = vsub.f32 %v714, %v2024
        %v2049 = vsub.f32 %v717, %v2025
        %v2050 = vsub.f32 %v722, %v2026
        %v2051 = vsub.f32 %v725, %v2027
        %v2052 = vsub.f32 %v730, %v2028
        %v2053 = vsub.f32 %v733, %v2029
        %v2054 = vsub.f32 %v803, %v2022
        %v2055 = vsub.f32 %v806, %v2023
        %v2056 = vsub.f32 %v811, %v2024
        %v2057 = vsub.f32 %v814, %v2025
        %v2058 = vsub.f32 %v819, %v2026
        %v2059 = vsub.f32 %v822, %v2027
        %v2060 = vsub.f32 %v827, %v2028
        %v2061 = vsub.f32 %v830, %v2029
        %v2062 = vsub.f32 %v900, %v2022
        %v2063 = vsub.f32 %v903, %v2023
        %v2064 = vsub.f32 %v908, %v2024
        %v2065 = vsub.f32 %v911, %v2025
        %v2066 = vsub.f32 %v916, %v2026
        %v2067 = vsub.f32 %v919, %v2027
        %v2068 = vsub.f32 %v924, %v2028
        %v2069 = vsub.f32 %v927, %v2029
        %v2070 = vsub.f32 %v997, %v2022
        %v2071 = vsub.f32 %v1000, %v2023
        %v2072 = vsub.f32 %v1005, %v2024
        %v2073 = vsub.f32 %v1008, %v2025
        %v2074 = vsub.f32 %v1013, %v2026
        %v2075 = vsub.f32 %v1016, %v2027
        %v2076 = vsub.f32 %v1021, %v2028
        %v2077 = vsub.f32 %v1024, %v2029
        %v2078 = vsub.f32 %v1094, %v2022
        %v2079 = vsub.f32 %v1097, %v2023
        %v2080 = vsub.f32 %v1102, %v2024
        %v2081 = vsub.f32 %v1105, %v2025
        %v2082 = vsub.f32 %v1110, %v2026
        %v2083 = vsub.f32 %v1113, %v2027
        %v2084 = vsub.f32 %v1118, %v2028
        %v2085 = vsub.f32 %v1121, %v2029
        %v2086 = vsub.f32 %v1191, %v2022
        %v2087 = vsub.f32 %v1194, %v2023
        %v2088 = vsub.f32 %v1199, %v2024
        %v2089 = vsub.f32 %v1202, %v2025
        %v2090 = vsub.f32 %v1207, %v2026
        %v2091 = vsub.f32 %v1210, %v2027
        %v2092 = vsub.f32 %v1215, %v2028
        %v2093 = vsub.f32 %v1218, %v2029
        %v2094 = vsub.f32 %v1288, %v2022
        %v2095 = vsub.f32 %v1291, %v2023
        %v2096 = vsub.f32 %v1296, %v2024
        %v2097 = vsub.f32 %v1299, %v2025
        %v2098 = vsub.f32 %v1304, %v2026
        %v2099 = vsub.f32 %v1307, %v2027
        %v2100 = vsub.f32 %v1312, %v2028
        %v2101 = vsub.f32 %v1315, %v2029
        %v2102 = vsub.f32 %v1385, %v2022
        %v2103 = vsub.f32 %v1388, %v2023
        %v2104 = vsub.f32 %v1393, %v2024
        %v2105 = vsub.f32 %v1396, %v2025
        %v2106 = vsub.f32 %v1401, %v2026
        %v2107 = vsub.f32 %v1404, %v2027
        %v2108 = vsub.f32 %v1409, %v2028
        %v2109 = vsub.f32 %v1412, %v2029
        %v2110 = vsub.f32 %v1482, %v2022
        %v2111 = vsub.f32 %v1485, %v2023
        %v2112 = vsub.f32 %v1490, %v2024
        %v2113 = vsub.f32 %v1493, %v2025
        %v2114 = vsub.f32 %v1498, %v2026
        %v2115 = vsub.f32 %v1501, %v2027
        %v2116 = vsub.f32 %v1506, %v2028
        %v2117 = vsub.f32 %v1509, %v2029
        %v2118 = vsub.f32 %v1579, %v2022
        %v2119 = vsub.f32 %v1582, %v2023
        %v2120 = vsub.f32 %v1587, %v2024
        %v2121 = vsub.f32 %v1590, %v2025
        %v2122 = vsub.f32 %v1595, %v2026
        %v2123 = vsub.f32 %v1598, %v2027
        %v2124 = vsub.f32 %v1603, %v2028
        %v2125 = vsub.f32 %v1606, %v2029
        %v2126 = vsub.f32 %v1676, %v2022
        %v2127 = vsub.f32 %v1679, %v2023
        %v2128 = vsub.f32 %v1684, %v2024
        %v2129 = vsub.f32 %v1687, %v2025
        %v2130 = vsub.f32 %v1692, %v2026
        %v2131 = vsub.f32 %v1695, %v2027
        %v2132 = vsub.f32 %v1700, %v2028
        %v2133 = vsub.f32 %v1703, %v2029
        %v2134 = vsub.f32 %v1773, %v2022
        %v2135 = vsub.f32 %v1776, %v2023
        %v2136 = vsub.f32 %v1781, %v2024
        %v2137 = vsub.f32 %v1784, %v2025
        %v2138 = vsub.f32 %v1789, %v2026
        %v2139 = vsub.f32 %v1792, %v2027
        %v2140 = vsub.f32 %v1797, %v2028
        %v2141 = vsub.f32 %v1800, %v2029
        %v2142 = vsub.f32 %v1870, %v2022
        %v2143 = vsub.f32 %v1873, %v2023
        %v2144 = vsub.f32 %v1878, %v2024
        %v2145 = vsub.f32 %v1881, %v2025
        %v2146 = vsub.f32 %v1886, %v2026
        %v2147 = vsub.f32 %v1889, %v2027
        %v2148 = vsub.f32 %v1894, %v2028
        %v2149 = vsub.f32 %v1897, %v2029
        %v2150 = vsub.f32 %v1967, %v2022
        %v2151 = vsub.f32 %v1970, %v2023
        %v2152 = vsub.f32 %v1975, %v2024
        %v2153 = vsub.f32 %v1978, %v2025
        %v2154 = vsub.f32 %v1983, %v2026
        %v2155 = vsub.f32 %v1986, %v2027
        %v2156 = vsub.f32 %v1991, %v2028
        %v2157 = vsub.f32 %v1994, %v2029
        %v2158 = vmul.f32 %v2030, %v2030
        %v2159 = vmul.f32 %v2031, %v2031
        %v2160 = vmul.f32 %v2032, %v2032
        %v2161 = vmul.f32 %v2033, %v2033
        %v2162 = vmul.f32 %v2034, %v2034
        %v2163 = vmul.f32 %v2035, %v2035
        %v2164 = vmul.f32 %v2036, %v2036
        %v2165 = vmul.f32 %v2037, %v2037
        %v2166 = vmul.f32 %v2038, %v2038
        %v2167 = vmul.f32 %v2039, %v2039
        %v2168 = vmul.f32 %v2040, %v2040
        %v2169 = vmul.f32 %v2041, %v2041
        %v2170 = vmul.f32 %v2042, %v2042
        %v2171 = vmul.f32 %v2043, %v2043
        %v2172 = vmul.f32 %v2044, %v2044
        %v2173 = vmul.f32 %v2045, %v2045
        %v2174 = vmul.f32 %v2046, %v2046
        %v2175 = vmul.f32 %v2047, %v2047
        %v2176 = vmul.f32 %v2048, %v2048
        %v2177 = vmul.f32 %v2049, %v2049
        %v2178 = vmul.f32 %v2050, %v2050
        %v2179 = vmul.f32 %v2051, %v2051
        %v2180 = vmul.f32 %v2052, %v2052
        %v2181 = vmul.f32 %v2053, %v2053
        %v2182 = vmul.f32 %v2054, %v2054
        %v2183 = vmul.f32 %v2055, %v2055
        %v2184 = vmul.f32 %v2056, %v2056
        %v2185 = vmul.f32 %v2057, %v2057
        %v2186 = vmul.f32 %v2058, %v2058
        %v2187 = vmul.f32 %v2059, %v2059
        %v2188 = vmul.f32 %v2060, %v2060
        %v2189 = vmul.f32 %v2061, %v2061
        %v2190 = vmul.f32 %v2062, %v2062
        %v2191 = vmul.f32 %v2063, %v2063
        %v2192 = vmul.f32 %v2064, %v2064
        %v2193 = vmul.f32 %v2065, %v2065
        %v2194 = vmul.f32 %v2066, %v2066
        %v2195 = vmul.f32 %v2067, %v2067
        %v2196 = vmul.f32 %v2068, %v2068
        %v2197 = vmul.f32 %v2069, %v2069
        %v2198 = vmul.f32 %v2070, %v2070
        %v2199 = vmul.f32 %v2071, %v2071
        %v2200 = vmul.f32 %v2072, %v2072
        %v2201 = vmul.f32 %v2073, %v2073
        %v2202 = vmul.f32 %v2074, %v2074
        %v2203 = vmul.f32 %v2075, %v2075
        %v2204 = vmul.f32 %v2076, %v2076
        %v2205 = vmul.f32 %v2077, %v2077
        %v2206 = vmul.f32 %v2078, %v2078
        %v2207 = vmul.f32 %v2079, %v2079
        %v2208 = vmul.f32 %v2080, %v2080
        %v2209 = vmul.f32 %v2081, %v2081
        %v2210 = vmul.f32 %v2082, %v2082
        %v2211 = vmul.f32 %v2083, %v2083
        %v2212 = vmul.f32 %v2084, %v2084
        %v2213 = vmul.f32 %v2085, %v2085
        %v2214 = vmul.f32 %v2086, %v2086
        %v2215 = vmul.f32 %v2087, %v2087
        %v2216 = vmul.f32 %v2088, %v2088
        %v2217 = vmul.f32 %v2089, %v2089
        %v2218 = vmul.f32 %v2090, %v2090
        %v2219 = vmul.f32 %v2091, %v2091
        %v2220 = vmul.f32 %v2092, %v2092
        %v2221 = vmul.f32 %v2093, %v2093
        %v2222 = vmul.f32 %v2094, %v2094
        %v2223 = vmul.f32 %v2095, %v2095
        %v2224 = vmul.f32 %v2096, %v2096
        %v2225 = vmul.f32 %v2097, %v2097
        %v2226 = vmul.f32 %v2098, %v2098
        %v2227 = vmul.f32 %v2099, %v2099
        %v2228 = vmul.f32 %v2100, %v2100
        %v2229 = vmul.f32 %v2101, %v2101
        %v2230 = vmul.f32 %v2102, %v2102
        %v2231 = vmul.f32 %v2103, %v2103
        %v2232 = vmul.f32 %v2104, %v2104
        %v2233 = vmul.f32 %v2105, %v2105
        %v2234 = vmul.f32 %v2106, %v2106
        %v2235 = vmul.f32 %v2107, %v2107
        %v2236 = vmul.f32 %v2108, %v2108
        %v2237 = vmul.f32 %v2109, %v2109
        %v2238 = vmul.f32 %v2110, %v2110
        %v2239 = vmul.f32 %v2111, %v2111
        %v2240 = vmul.f32 %v2112, %v2112
        %v2241 = vmul.f32 %v2113, %v2113
        %v2242 = vmul.f32 %v2114, %v2114
        %v2243 = vmul.f32 %v2115, %v2115
        %v2244 = vmul.f32 %v2116, %v2116
        %v2245 = vmul.f32 %v2117, %v2117
        %v2246 = vmul.f32 %v2118, %v2118
        %v2247 = vmul.f32 %v2119, %v2119
        %v2248 = vmul.f32 %v2120, %v2120
        %v2249 = vmul.f32 %v2121, %v2121
        %v2250 = vmul.f32 %v2122, %v2122
        %v2251 = vmul.f32 %v2123, %v2123
        %v2252 = vmul.f32 %v2124, %v2124
        %v2253 = vmul.f32 %v2125, %v2125
        %v2254 = vmul.f32 %v2126, %v2126
        %v2255 = vmul.f32 %v2127, %v2127
        %v2256 = vmul.f32 %v2128, %v2128
        %v2257 = vmul.f32 %v2129, %v2129
        %v2258 = vmul.f32 %v2130, %v2130
        %v2259 = vmul.f32 %v2131, %v2131
        %v2260 = vmul.f32 %v2132, %v2132
        %v2261 = vmul.f32 %v2133, %v2133
        %v2262 = vmul.f32 %v2134, %v2134
        %v2263 = vmul.f32 %v2135, %v2135
        %v2264 = vmul.f32 %v2136, %v2136
        %v2265 = vmul.f32 %v2137, %v2137
        %v2266 = vmul.f32 %v2138, %v2138
        %v2267 = vmul.f32 %v2139, %v2139
        %v2268 = vmul.f32 %v2140, %v2140
        %v2269 = vmul.f32 %v2141, %v2141
        %v2270 = vmul.f32 %v2142, %v2142
        %v2271 = vmul.f32 %v2143, %v2143
        %v2272 = vmul.f32 %v2144, %v2144
        %v2273 = vmul.f32 %v2145, %v2145
        %v2274 = vmul.f32 %v2146, %v2146
        %v2275 = vmul.f32 %v2147, %v2147
        %v2276 = vmul.f32 %v2148, %v2148
        %v2277 = vmul.f32 %v2149, %v2149
        %v2278 = vmul.f32 %v2150, %v2150
        %v2279 = vmul.f32 %v2151, %v2151
        %v2280 = vmul.f32 %v2152, %v2152
        %v2281 = vmul.f32 %v2153, %v2153
        %v2282 = vmul.f32 %v2154, %v2154
        %v2283 = vmul.f32 %v2155, %v2155
        %v2284 = vmul.f32 %v2156, %v2156
        %v2285 = vmul.f32 %v2157, %v2157
        %v2286 = vsel %vm464, %v2158, 0.0
        %2287 = vadd.xlane.f32.xlu0 %v2286
        %v2288 = vpop.xlane.xlu0 %2287
        %v2289 = vsel %vm464, %v2159, 0.0
        %2290 = vadd.xlane.f32.xlu0 %v2289
        %v2291 = vpop.xlane.xlu0 %2290
        %v2292 = vsel %vm464, %v2160, 0.0
        %2293 = vadd.xlane.f32.xlu0 %v2292
        %v2294 = vpop.xlane.xlu0 %2293
        %v2295 = vsel %vm464, %v2161, 0.0
        %2296 = vadd.xlane.f32.xlu0 %v2295
        %v2297 = vpop.xlane.xlu0 %2296
        %v2298 = vsel %vm464, %v2162, 0.0
        %2299 = vadd.xlane.f32.xlu0 %v2298
        %v2300 = vpop.xlane.xlu0 %2299
        %v2301 = vsel %vm464, %v2163, 0.0
        %2302 = vadd.xlane.f32.xlu0 %v2301
        %v2303 = vpop.xlane.xlu0 %2302
        %v2304 = vsel %vm464, %v2164, 0.0
        %2305 = vadd.xlane.f32.xlu0 %v2304
        %v2306 = vpop.xlane.xlu0 %2305
        %v2307 = vsel %vm464, %v2165, 0.0
        %2308 = vadd.xlane.f32.xlu0 %v2307
        %v2309 = vpop.xlane.xlu0 %2308
        %v2310 = vsel %vm464, %v2166, 0.0
        %2311 = vadd.xlane.f32.xlu0 %v2310
        %v2312 = vpop.xlane.xlu0 %2311
        %v2313 = vsel %vm464, %v2167, 0.0
        %2314 = vadd.xlane.f32.xlu0 %v2313
        %v2315 = vpop.xlane.xlu0 %2314
        %v2316 = vsel %vm464, %v2168, 0.0
        %2317 = vadd.xlane.f32.xlu0 %v2316
        %v2318 = vpop.xlane.xlu0 %2317
        %v2319 = vsel %vm464, %v2169, 0.0
        %2320 = vadd.xlane.f32.xlu0 %v2319
        %v2321 = vpop.xlane.xlu0 %2320
        %v2322 = vsel %vm464, %v2170, 0.0
        %2323 = vadd.xlane.f32.xlu0 %v2322
        %v2324 = vpop.xlane.xlu0 %2323
        %v2325 = vsel %vm464, %v2171, 0.0
        %2326 = vadd.xlane.f32.xlu0 %v2325
        %v2327 = vpop.xlane.xlu0 %2326
        %v2328 = vsel %vm464, %v2172, 0.0
        %2329 = vadd.xlane.f32.xlu0 %v2328
        %v2330 = vpop.xlane.xlu0 %2329
        %v2331 = vsel %vm464, %v2173, 0.0
        %2332 = vadd.xlane.f32.xlu0 %v2331
        %v2333 = vpop.xlane.xlu0 %2332
        %v2334 = vsel %vm464, %v2174, 0.0
        %2335 = vadd.xlane.f32.xlu0 %v2334
        %v2336 = vpop.xlane.xlu0 %2335
        %v2337 = vsel %vm464, %v2175, 0.0
        %2338 = vadd.xlane.f32.xlu0 %v2337
        %v2339 = vpop.xlane.xlu0 %2338
        %v2340 = vsel %vm464, %v2176, 0.0
        %2341 = vadd.xlane.f32.xlu0 %v2340
        %v2342 = vpop.xlane.xlu0 %2341
        %v2343 = vsel %vm464, %v2177, 0.0
        %2344 = vadd.xlane.f32.xlu0 %v2343
        %v2345 = vpop.xlane.xlu0 %2344
        %v2346 = vsel %vm464, %v2178, 0.0
        %2347 = vadd.xlane.f32.xlu0 %v2346
        %v2348 = vpop.xlane.xlu0 %2347
        %v2349 = vsel %vm464, %v2179, 0.0
        %2350 = vadd.xlane.f32.xlu0 %v2349
        %v2351 = vpop.xlane.xlu0 %2350
        %v2352 = vsel %vm464, %v2180, 0.0
        %2353 = vadd.xlane.f32.xlu0 %v2352
        %v2354 = vpop.xlane.xlu0 %2353
        %v2355 = vsel %vm464, %v2181, 0.0
        %2356 = vadd.xlane.f32.xlu0 %v2355
        %v2357 = vpop.xlane.xlu0 %2356
        %v2358 = vsel %vm464, %v2182, 0.0
        %2359 = vadd.xlane.f32.xlu0 %v2358
        %v2360 = vpop.xlane.xlu0 %2359
        %v2361 = vsel %vm464, %v2183, 0.0
        %2362 = vadd.xlane.f32.xlu0 %v2361
        %v2363 = vpop.xlane.xlu0 %2362
        %v2364 = vsel %vm464, %v2184, 0.0
        %2365 = vadd.xlane.f32.xlu0 %v2364
        %v2366 = vpop.xlane.xlu0 %2365
        %v2367 = vsel %vm464, %v2185, 0.0
        %2368 = vadd.xlane.f32.xlu0 %v2367
        %v2369 = vpop.xlane.xlu0 %2368
        %v2370 = vsel %vm464, %v2186, 0.0
        %2371 = vadd.xlane.f32.xlu0 %v2370
        %v2372 = vpop.xlane.xlu0 %2371
        %v2373 = vsel %vm464, %v2187, 0.0
        %2374 = vadd.xlane.f32.xlu0 %v2373
        %v2375 = vpop.xlane.xlu0 %2374
        %v2376 = vsel %vm464, %v2188, 0.0
        %2377 = vadd.xlane.f32.xlu0 %v2376
        %v2378 = vpop.xlane.xlu0 %2377
        %v2379 = vsel %vm464, %v2189, 0.0
        %2380 = vadd.xlane.f32.xlu0 %v2379
        %v2381 = vpop.xlane.xlu0 %2380
        %v2382 = vsel %vm464, %v2190, 0.0
        %2383 = vadd.xlane.f32.xlu0 %v2382
        %v2384 = vpop.xlane.xlu0 %2383
        %v2385 = vsel %vm464, %v2191, 0.0
        %2386 = vadd.xlane.f32.xlu0 %v2385
        %v2387 = vpop.xlane.xlu0 %2386
        %v2388 = vsel %vm464, %v2192, 0.0
        %2389 = vadd.xlane.f32.xlu0 %v2388
        %v2390 = vpop.xlane.xlu0 %2389
        %v2391 = vsel %vm464, %v2193, 0.0
        %2392 = vadd.xlane.f32.xlu0 %v2391
        %v2393 = vpop.xlane.xlu0 %2392
        %v2394 = vsel %vm464, %v2194, 0.0
        %2395 = vadd.xlane.f32.xlu0 %v2394
        %v2396 = vpop.xlane.xlu0 %2395
        %v2397 = vsel %vm464, %v2195, 0.0
        %2398 = vadd.xlane.f32.xlu0 %v2397
        %v2399 = vpop.xlane.xlu0 %2398
        %v2400 = vsel %vm464, %v2196, 0.0
        %2401 = vadd.xlane.f32.xlu0 %v2400
        %v2402 = vpop.xlane.xlu0 %2401
        %v2403 = vsel %vm464, %v2197, 0.0
        %2404 = vadd.xlane.f32.xlu0 %v2403
        %v2405 = vpop.xlane.xlu0 %2404
        %v2406 = vsel %vm464, %v2198, 0.0
        %2407 = vadd.xlane.f32.xlu0 %v2406
        %v2408 = vpop.xlane.xlu0 %2407
        %v2409 = vsel %vm464, %v2199, 0.0
        %2410 = vadd.xlane.f32.xlu0 %v2409
        %v2411 = vpop.xlane.xlu0 %2410
        %v2412 = vsel %vm464, %v2200, 0.0
        %2413 = vadd.xlane.f32.xlu0 %v2412
        %v2414 = vpop.xlane.xlu0 %2413
        %v2415 = vsel %vm464, %v2201, 0.0
        %2416 = vadd.xlane.f32.xlu0 %v2415
        %v2417 = vpop.xlane.xlu0 %2416
        %v2418 = vsel %vm464, %v2202, 0.0
        %2419 = vadd.xlane.f32.xlu0 %v2418
        %v2420 = vpop.xlane.xlu0 %2419
        %v2421 = vsel %vm464, %v2203, 0.0
        %2422 = vadd.xlane.f32.xlu0 %v2421
        %v2423 = vpop.xlane.xlu0 %2422
        %v2424 = vsel %vm464, %v2204, 0.0
        %2425 = vadd.xlane.f32.xlu0 %v2424
        %v2426 = vpop.xlane.xlu0 %2425
        %v2427 = vsel %vm464, %v2205, 0.0
        %2428 = vadd.xlane.f32.xlu0 %v2427
        %v2429 = vpop.xlane.xlu0 %2428
        %v2430 = vsel %vm464, %v2206, 0.0
        %2431 = vadd.xlane.f32.xlu0 %v2430
        %v2432 = vpop.xlane.xlu0 %2431
        %v2433 = vsel %vm464, %v2207, 0.0
        %2434 = vadd.xlane.f32.xlu0 %v2433
        %v2435 = vpop.xlane.xlu0 %2434
        %v2436 = vsel %vm464, %v2208, 0.0
        %2437 = vadd.xlane.f32.xlu0 %v2436
        %v2438 = vpop.xlane.xlu0 %2437
        %v2439 = vsel %vm464, %v2209, 0.0
        %2440 = vadd.xlane.f32.xlu0 %v2439
        %v2441 = vpop.xlane.xlu0 %2440
        %v2442 = vsel %vm464, %v2210, 0.0
        %2443 = vadd.xlane.f32.xlu0 %v2442
        %v2444 = vpop.xlane.xlu0 %2443
        %v2445 = vsel %vm464, %v2211, 0.0
        %2446 = vadd.xlane.f32.xlu0 %v2445
        %v2447 = vpop.xlane.xlu0 %2446
        %v2448 = vsel %vm464, %v2212, 0.0
        %2449 = vadd.xlane.f32.xlu0 %v2448
        %v2450 = vpop.xlane.xlu0 %2449
        %v2451 = vsel %vm464, %v2213, 0.0
        %2452 = vadd.xlane.f32.xlu0 %v2451
        %v2453 = vpop.xlane.xlu0 %2452
        %v2454 = vsel %vm464, %v2214, 0.0
        %2455 = vadd.xlane.f32.xlu0 %v2454
        %v2456 = vpop.xlane.xlu0 %2455
        %v2457 = vsel %vm464, %v2215, 0.0
        %2458 = vadd.xlane.f32.xlu0 %v2457
        %v2459 = vpop.xlane.xlu0 %2458
        %v2460 = vsel %vm464, %v2216, 0.0
        %2461 = vadd.xlane.f32.xlu0 %v2460
        %v2462 = vpop.xlane.xlu0 %2461
        %v2463 = vsel %vm464, %v2217, 0.0
        %2464 = vadd.xlane.f32.xlu0 %v2463
        %v2465 = vpop.xlane.xlu0 %2464
        %v2466 = vsel %vm464, %v2218, 0.0
        %2467 = vadd.xlane.f32.xlu0 %v2466
        %v2468 = vpop.xlane.xlu0 %2467
        %v2469 = vsel %vm464, %v2219, 0.0
        %2470 = vadd.xlane.f32.xlu0 %v2469
        %v2471 = vpop.xlane.xlu0 %2470
        %v2472 = vsel %vm464, %v2220, 0.0
        %2473 = vadd.xlane.f32.xlu0 %v2472
        %v2474 = vpop.xlane.xlu0 %2473
        %v2475 = vsel %vm464, %v2221, 0.0
        %2476 = vadd.xlane.f32.xlu0 %v2475
        %v2477 = vpop.xlane.xlu0 %2476
        %v2478 = vsel %vm464, %v2222, 0.0
        %2479 = vadd.xlane.f32.xlu0 %v2478
        %v2480 = vpop.xlane.xlu0 %2479
        %v2481 = vsel %vm464, %v2223, 0.0
        %2482 = vadd.xlane.f32.xlu0 %v2481
        %v2483 = vpop.xlane.xlu0 %2482
        %v2484 = vsel %vm464, %v2224, 0.0
        %2485 = vadd.xlane.f32.xlu0 %v2484
        %v2486 = vpop.xlane.xlu0 %2485
        %v2487 = vsel %vm464, %v2225, 0.0
        %2488 = vadd.xlane.f32.xlu0 %v2487
        %v2489 = vpop.xlane.xlu0 %2488
        %v2490 = vsel %vm464, %v2226, 0.0
        %2491 = vadd.xlane.f32.xlu0 %v2490
        %v2492 = vpop.xlane.xlu0 %2491
        %v2493 = vsel %vm464, %v2227, 0.0
        %2494 = vadd.xlane.f32.xlu0 %v2493
        %v2495 = vpop.xlane.xlu0 %2494
        %v2496 = vsel %vm464, %v2228, 0.0
        %2497 = vadd.xlane.f32.xlu0 %v2496
        %v2498 = vpop.xlane.xlu0 %2497
        %v2499 = vsel %vm464, %v2229, 0.0
        %2500 = vadd.xlane.f32.xlu0 %v2499
        %v2501 = vpop.xlane.xlu0 %2500
        %v2502 = vsel %vm464, %v2230, 0.0
        %2503 = vadd.xlane.f32.xlu0 %v2502
        %v2504 = vpop.xlane.xlu0 %2503
        %v2505 = vsel %vm464, %v2231, 0.0
        %2506 = vadd.xlane.f32.xlu0 %v2505
        %v2507 = vpop.xlane.xlu0 %2506
        %v2508 = vsel %vm464, %v2232, 0.0
        %2509 = vadd.xlane.f32.xlu0 %v2508
        %v2510 = vpop.xlane.xlu0 %2509
        %v2511 = vsel %vm464, %v2233, 0.0
        %2512 = vadd.xlane.f32.xlu0 %v2511
        %v2513 = vpop.xlane.xlu0 %2512
        %v2514 = vsel %vm464, %v2234, 0.0
        %2515 = vadd.xlane.f32.xlu0 %v2514
        %v2516 = vpop.xlane.xlu0 %2515
        %v2517 = vsel %vm464, %v2235, 0.0
        %2518 = vadd.xlane.f32.xlu0 %v2517
        %v2519 = vpop.xlane.xlu0 %2518
        %v2520 = vsel %vm464, %v2236, 0.0
        %2521 = vadd.xlane.f32.xlu0 %v2520
        %v2522 = vpop.xlane.xlu0 %2521
        %v2523 = vsel %vm464, %v2237, 0.0
        %2524 = vadd.xlane.f32.xlu0 %v2523
        %v2525 = vpop.xlane.xlu0 %2524
        %v2526 = vsel %vm464, %v2238, 0.0
        %2527 = vadd.xlane.f32.xlu0 %v2526
        %v2528 = vpop.xlane.xlu0 %2527
        %v2529 = vsel %vm464, %v2239, 0.0
        %2530 = vadd.xlane.f32.xlu0 %v2529
        %v2531 = vpop.xlane.xlu0 %2530
        %v2532 = vsel %vm464, %v2240, 0.0
        %2533 = vadd.xlane.f32.xlu0 %v2532
        %v2534 = vpop.xlane.xlu0 %2533
        %v2535 = vsel %vm464, %v2241, 0.0
        %2536 = vadd.xlane.f32.xlu0 %v2535
        %v2537 = vpop.xlane.xlu0 %2536
        %v2538 = vsel %vm464, %v2242, 0.0
        %2539 = vadd.xlane.f32.xlu0 %v2538
        %v2540 = vpop.xlane.xlu0 %2539
        %v2541 = vsel %vm464, %v2243, 0.0
        %2542 = vadd.xlane.f32.xlu0 %v2541
        %v2543 = vpop.xlane.xlu0 %2542
        %v2544 = vsel %vm464, %v2244, 0.0
        %2545 = vadd.xlane.f32.xlu0 %v2544
        %v2546 = vpop.xlane.xlu0 %2545
        %v2547 = vsel %vm464, %v2245, 0.0
        %2548 = vadd.xlane.f32.xlu0 %v2547
        %v2549 = vpop.xlane.xlu0 %2548
        %v2550 = vsel %vm464, %v2246, 0.0
        %2551 = vadd.xlane.f32.xlu0 %v2550
        %v2552 = vpop.xlane.xlu0 %2551
        %v2553 = vsel %vm464, %v2247, 0.0
        %2554 = vadd.xlane.f32.xlu0 %v2553
        %v2555 = vpop.xlane.xlu0 %2554
        %v2556 = vsel %vm464, %v2248, 0.0
        %2557 = vadd.xlane.f32.xlu0 %v2556
        %v2558 = vpop.xlane.xlu0 %2557
        %v2559 = vsel %vm464, %v2249, 0.0
        %2560 = vadd.xlane.f32.xlu0 %v2559
        %v2561 = vpop.xlane.xlu0 %2560
        %v2562 = vsel %vm464, %v2250, 0.0
        %2563 = vadd.xlane.f32.xlu0 %v2562
        %v2564 = vpop.xlane.xlu0 %2563
        %v2565 = vsel %vm464, %v2251, 0.0
        %2566 = vadd.xlane.f32.xlu0 %v2565
        %v2567 = vpop.xlane.xlu0 %2566
        %v2568 = vsel %vm464, %v2252, 0.0
        %2569 = vadd.xlane.f32.xlu0 %v2568
        %v2570 = vpop.xlane.xlu0 %2569
        %v2571 = vsel %vm464, %v2253, 0.0
        %2572 = vadd.xlane.f32.xlu0 %v2571
        %v2573 = vpop.xlane.xlu0 %2572
        %v2574 = vsel %vm464, %v2254, 0.0
        %2575 = vadd.xlane.f32.xlu0 %v2574
        %v2576 = vpop.xlane.xlu0 %2575
        %v2577 = vsel %vm464, %v2255, 0.0
        %2578 = vadd.xlane.f32.xlu0 %v2577
        %v2579 = vpop.xlane.xlu0 %2578
        %v2580 = vsel %vm464, %v2256, 0.0
        %2581 = vadd.xlane.f32.xlu0 %v2580
        %v2582 = vpop.xlane.xlu0 %2581
        %v2583 = vsel %vm464, %v2257, 0.0
        %2584 = vadd.xlane.f32.xlu0 %v2583
        %v2585 = vpop.xlane.xlu0 %2584
        %v2586 = vsel %vm464, %v2258, 0.0
        %2587 = vadd.xlane.f32.xlu0 %v2586
        %v2588 = vpop.xlane.xlu0 %2587
        %v2589 = vsel %vm464, %v2259, 0.0
        %2590 = vadd.xlane.f32.xlu0 %v2589
        %v2591 = vpop.xlane.xlu0 %2590
        %v2592 = vsel %vm464, %v2260, 0.0
        %2593 = vadd.xlane.f32.xlu0 %v2592
        %v2594 = vpop.xlane.xlu0 %2593
        %v2595 = vsel %vm464, %v2261, 0.0
        %2596 = vadd.xlane.f32.xlu0 %v2595
        %v2597 = vpop.xlane.xlu0 %2596
        %v2598 = vsel %vm464, %v2262, 0.0
        %2599 = vadd.xlane.f32.xlu0 %v2598
        %v2600 = vpop.xlane.xlu0 %2599
        %v2601 = vsel %vm464, %v2263, 0.0
        %2602 = vadd.xlane.f32.xlu0 %v2601
        %v2603 = vpop.xlane.xlu0 %2602
        %v2604 = vsel %vm464, %v2264, 0.0
        %2605 = vadd.xlane.f32.xlu0 %v2604
        %v2606 = vpop.xlane.xlu0 %2605
        %v2607 = vsel %vm464, %v2265, 0.0
        %2608 = vadd.xlane.f32.xlu0 %v2607
        %v2609 = vpop.xlane.xlu0 %2608
        %v2610 = vsel %vm464, %v2266, 0.0
        %2611 = vadd.xlane.f32.xlu0 %v2610
        %v2612 = vpop.xlane.xlu0 %2611
        %v2613 = vsel %vm464, %v2267, 0.0
        %2614 = vadd.xlane.f32.xlu0 %v2613
        %v2615 = vpop.xlane.xlu0 %2614
        %v2616 = vsel %vm464, %v2268, 0.0
        %2617 = vadd.xlane.f32.xlu0 %v2616
        %v2618 = vpop.xlane.xlu0 %2617
        %v2619 = vsel %vm464, %v2269, 0.0
        %2620 = vadd.xlane.f32.xlu0 %v2619
        %v2621 = vpop.xlane.xlu0 %2620
        %v2622 = vsel %vm464, %v2270, 0.0
        %2623 = vadd.xlane.f32.xlu0 %v2622
        %v2624 = vpop.xlane.xlu0 %2623
        %v2625 = vsel %vm464, %v2271, 0.0
        %2626 = vadd.xlane.f32.xlu0 %v2625
        %v2627 = vpop.xlane.xlu0 %2626
        %v2628 = vsel %vm464, %v2272, 0.0
        %2629 = vadd.xlane.f32.xlu0 %v2628
        %v2630 = vpop.xlane.xlu0 %2629
        %v2631 = vsel %vm464, %v2273, 0.0
        %2632 = vadd.xlane.f32.xlu0 %v2631
        %v2633 = vpop.xlane.xlu0 %2632
        %v2634 = vsel %vm464, %v2274, 0.0
        %2635 = vadd.xlane.f32.xlu0 %v2634
        %v2636 = vpop.xlane.xlu0 %2635
        %v2637 = vsel %vm464, %v2275, 0.0
        %2638 = vadd.xlane.f32.xlu0 %v2637
        %v2639 = vpop.xlane.xlu0 %2638
        %v2640 = vsel %vm464, %v2276, 0.0
        %2641 = vadd.xlane.f32.xlu0 %v2640
        %v2642 = vpop.xlane.xlu0 %2641
        %v2643 = vsel %vm464, %v2277, 0.0
        %2644 = vadd.xlane.f32.xlu0 %v2643
        %v2645 = vpop.xlane.xlu0 %2644
        %v2646 = vsel %vm464, %v2278, 0.0
        %2647 = vadd.xlane.f32.xlu0 %v2646
        %v2648 = vpop.xlane.xlu0 %2647
        %v2649 = vsel %vm464, %v2279, 0.0
        %2650 = vadd.xlane.f32.xlu0 %v2649
        %v2651 = vpop.xlane.xlu0 %2650
        %v2652 = vsel %vm464, %v2280, 0.0
        %2653 = vadd.xlane.f32.xlu0 %v2652
        %v2654 = vpop.xlane.xlu0 %2653
        %v2655 = vsel %vm464, %v2281, 0.0
        %2656 = vadd.xlane.f32.xlu0 %v2655
        %v2657 = vpop.xlane.xlu0 %2656
        %v2658 = vsel %vm464, %v2282, 0.0
        %2659 = vadd.xlane.f32.xlu0 %v2658
        %v2660 = vpop.xlane.xlu0 %2659
        %v2661 = vsel %vm464, %v2283, 0.0
        %2662 = vadd.xlane.f32.xlu0 %v2661
        %v2663 = vpop.xlane.xlu0 %2662
        %v2664 = vsel %vm464, %v2284, 0.0
        %2665 = vadd.xlane.f32.xlu0 %v2664
        %v2666 = vpop.xlane.xlu0 %2665
        %v2667 = vsel %vm464, %v2285, 0.0
        %2668 = vadd.xlane.f32.xlu0 %v2667
        %v2669 = vpop.xlane.xlu0 %2668
        %v2798 = vlaneseq
        %v2799 = vshrl.u32 %v2798, 7
        %v2800 = vsub.s32 %v420, %v2799
        %v2801 = vrot.slane %v2288, %v2800
        %v2802 = vadd.s32 %v420, 4294967288
        %v2803 = vlaneseq
        %v2804 = vshrl.u32 %v2803, 7
        %v2805 = vsub.s32 %v2802, %v2804
        %v2806 = vrot.slane %v2291, %v2805
        %vm2807 = vcmask 130112
        %v2808 = vsel %vm2807, %v2806, %v2801
        %v2809 = vadd.s32 %v420, 4294967280
        %v2810 = vlaneseq
        %v2811 = vshrl.u32 %v2810, 7
        %v2812 = vsub.s32 %v2809, %v2811
        %v2813 = vrot.slane %v2294, %v2812
        %vm2814 = vcmask 195712
        %v2815 = vsel %vm2814, %v2813, %v2808
        %v2816 = vadd.s32 %v420, 4294967272
        %v2817 = vlaneseq
        %v2818 = vshrl.u32 %v2817, 7
        %v2819 = vsub.s32 %v2816, %v2818
        %v2820 = vrot.slane %v2297, %v2819
        %vm2821 = vcmask 261312
        %v2822 = vsel %vm2821, %v2820, %v2815
        %v2823 = vadd.s32 %v420, 4294967264
        %v2824 = vlaneseq
        %v2825 = vshrl.u32 %v2824, 7
        %v2826 = vsub.s32 %v2823, %v2825
        %v2827 = vrot.slane %v2300, %v2826
        %vm2828 = vcmask 326912
        %v2829 = vsel %vm2828, %v2827, %v2822
        %v2830 = vadd.s32 %v420, 4294967256
        %v2831 = vlaneseq
        %v2832 = vshrl.u32 %v2831, 7
        %v2833 = vsub.s32 %v2830, %v2832
        %v2834 = vrot.slane %v2303, %v2833
        %vm2835 = vcmask 392512
        %v2836 = vsel %vm2835, %v2834, %v2829
        %v2837 = vadd.s32 %v420, 4294967248
        %v2838 = vlaneseq
        %v2839 = vshrl.u32 %v2838, 7
        %v2840 = vsub.s32 %v2837, %v2839
        %v2841 = vrot.slane %v2306, %v2840
        %vm2842 = vcmask 458112
        %v2843 = vsel %vm2842, %v2841, %v2836
        %v2844 = vadd.s32 %v420, 4294967240
        %v2845 = vlaneseq
        %v2846 = vshrl.u32 %v2845, 7
        %v2847 = vsub.s32 %v2844, %v2846
        %v2848 = vrot.slane %v2309, %v2847
        %vm2849 = vcmask 523712
        %v2850 = vsel %vm2849, %v2848, %v2843
        %v2851 = vlaneseq
        %v2852 = vshrl.u32 %v2851, 7
        %v2853 = vsub.s32 %v420, %v2852
        %v2854 = vrot.slane %v2312, %v2853
        %v2855 = vlaneseq
        %v2856 = vshrl.u32 %v2855, 7
        %v2857 = vsub.s32 %v2802, %v2856
        %v2858 = vrot.slane %v2315, %v2857
        %v2859 = vsel %vm2807, %v2858, %v2854
        %v2860 = vlaneseq
        %v2861 = vshrl.u32 %v2860, 7
        %v2862 = vsub.s32 %v2809, %v2861
        %v2863 = vrot.slane %v2318, %v2862
        %v2864 = vsel %vm2814, %v2863, %v2859
        %v2865 = vlaneseq
        %v2866 = vshrl.u32 %v2865, 7
        %v2867 = vsub.s32 %v2816, %v2866
        %v2868 = vrot.slane %v2321, %v2867
        %v2869 = vsel %vm2821, %v2868, %v2864
        %v2870 = vlaneseq
        %v2871 = vshrl.u32 %v2870, 7
        %v2872 = vsub.s32 %v2823, %v2871
        %v2873 = vrot.slane %v2324, %v2872
        %v2874 = vsel %vm2828, %v2873, %v2869
        %v2875 = vlaneseq
        %v2876 = vshrl.u32 %v2875, 7
        %v2877 = vsub.s32 %v2830, %v2876
        %v2878 = vrot.slane %v2327, %v2877
        %v2879 = vsel %vm2835, %v2878, %v2874
        %v2880 = vlaneseq
        %v2881 = vshrl.u32 %v2880, 7
        %v2882 = vsub.s32 %v2837, %v2881
        %v2883 = vrot.slane %v2330, %v2882
        %v2884 = vsel %vm2842, %v2883, %v2879
        %v2885 = vlaneseq
        %v2886 = vshrl.u32 %v2885, 7
        %v2887 = vsub.s32 %v2844, %v2886
        %v2888 = vrot.slane %v2333, %v2887
        %v2889 = vsel %vm2849, %v2888, %v2884
        %v2890 = vlaneseq
        %v2891 = vshrl.u32 %v2890, 7
        %v2892 = vsub.s32 %v420, %v2891
        %v2893 = vrot.slane %v2336, %v2892
        %v2894 = vlaneseq
        %v2895 = vshrl.u32 %v2894, 7
        %v2896 = vsub.s32 %v2802, %v2895
        %v2897 = vrot.slane %v2339, %v2896
        %v2898 = vsel %vm2807, %v2897, %v2893
        %v2899 = vlaneseq
        %v2900 = vshrl.u32 %v2899, 7
        %v2901 = vsub.s32 %v2809, %v2900
        %v2902 = vrot.slane %v2342, %v2901
        %v2903 = vsel %vm2814, %v2902, %v2898
        %v2904 = vlaneseq
        %v2905 = vshrl.u32 %v2904, 7
        %v2906 = vsub.s32 %v2816, %v2905
        %v2907 = vrot.slane %v2345, %v2906
        %v2908 = vsel %vm2821, %v2907, %v2903
        %v2909 = vlaneseq
        %v2910 = vshrl.u32 %v2909, 7
        %v2911 = vsub.s32 %v2823, %v2910
        %v2912 = vrot.slane %v2348, %v2911
        %v2913 = vsel %vm2828, %v2912, %v2908
        %v2914 = vlaneseq
        %v2915 = vshrl.u32 %v2914, 7
        %v2916 = vsub.s32 %v2830, %v2915
        %v2917 = vrot.slane %v2351, %v2916
        %v2918 = vsel %vm2835, %v2917, %v2913
        %v2919 = vlaneseq
        %v2920 = vshrl.u32 %v2919, 7
        %v2921 = vsub.s32 %v2837, %v2920
        %v2922 = vrot.slane %v2354, %v2921
        %v2923 = vsel %vm2842, %v2922, %v2918
        %v2924 = vlaneseq
        %v2925 = vshrl.u32 %v2924, 7
        %v2926 = vsub.s32 %v2844, %v2925
        %v2927 = vrot.slane %v2357, %v2926
        %v2928 = vsel %vm2849, %v2927, %v2923
        %v2929 = vlaneseq
        %v2930 = vshrl.u32 %v2929, 7
        %v2931 = vsub.s32 %v420, %v2930
        %v2932 = vrot.slane %v2360, %v2931
        %v2933 = vlaneseq
        %v2934 = vshrl.u32 %v2933, 7
        %v2935 = vsub.s32 %v2802, %v2934
        %v2936 = vrot.slane %v2363, %v2935
        %v2937 = vsel %vm2807, %v2936, %v2932
        %v2938 = vlaneseq
        %v2939 = vshrl.u32 %v2938, 7
        %v2940 = vsub.s32 %v2809, %v2939
        %v2941 = vrot.slane %v2366, %v2940
        %v2942 = vsel %vm2814, %v2941, %v2937
        %v2943 = vlaneseq
        %v2944 = vshrl.u32 %v2943, 7
        %v2945 = vsub.s32 %v2816, %v2944
        %v2946 = vrot.slane %v2369, %v2945
        %v2947 = vsel %vm2821, %v2946, %v2942
        %v2948 = vlaneseq
        %v2949 = vshrl.u32 %v2948, 7
        %v2950 = vsub.s32 %v2823, %v2949
        %v2951 = vrot.slane %v2372, %v2950
        %v2952 = vsel %vm2828, %v2951, %v2947
        %v2953 = vlaneseq
        %v2954 = vshrl.u32 %v2953, 7
        %v2955 = vsub.s32 %v2830, %v2954
        %v2956 = vrot.slane %v2375, %v2955
        %v2957 = vsel %vm2835, %v2956, %v2952
        %v2958 = vlaneseq
        %v2959 = vshrl.u32 %v2958, 7
        %v2960 = vsub.s32 %v2837, %v2959
        %v2961 = vrot.slane %v2378, %v2960
        %v2962 = vsel %vm2842, %v2961, %v2957
        %v2963 = vlaneseq
        %v2964 = vshrl.u32 %v2963, 7
        %v2965 = vsub.s32 %v2844, %v2964
        %v2966 = vrot.slane %v2381, %v2965
        %v2967 = vsel %vm2849, %v2966, %v2962
        %v2968 = vlaneseq
        %v2969 = vshrl.u32 %v2968, 7
        %v2970 = vsub.s32 %v420, %v2969
        %v2971 = vrot.slane %v2384, %v2970
        %v2972 = vlaneseq
        %v2973 = vshrl.u32 %v2972, 7
        %v2974 = vsub.s32 %v2802, %v2973
        %v2975 = vrot.slane %v2387, %v2974
        %v2976 = vsel %vm2807, %v2975, %v2971
        %v2977 = vlaneseq
        %v2978 = vshrl.u32 %v2977, 7
        %v2979 = vsub.s32 %v2809, %v2978
        %v2980 = vrot.slane %v2390, %v2979
        %v2981 = vsel %vm2814, %v2980, %v2976
        %v2982 = vlaneseq
        %v2983 = vshrl.u32 %v2982, 7
        %v2984 = vsub.s32 %v2816, %v2983
        %v2985 = vrot.slane %v2393, %v2984
        %v2986 = vsel %vm2821, %v2985, %v2981
        %v2987 = vlaneseq
        %v2988 = vshrl.u32 %v2987, 7
        %v2989 = vsub.s32 %v2823, %v2988
        %v2990 = vrot.slane %v2396, %v2989
        %v2991 = vsel %vm2828, %v2990, %v2986
        %v2992 = vlaneseq
        %v2993 = vshrl.u32 %v2992, 7
        %v2994 = vsub.s32 %v2830, %v2993
        %v2995 = vrot.slane %v2399, %v2994
        %v2996 = vsel %vm2835, %v2995, %v2991
        %v2997 = vlaneseq
        %v2998 = vshrl.u32 %v2997, 7
        %v2999 = vsub.s32 %v2837, %v2998
        %v3000 = vrot.slane %v2402, %v2999
        %v3001 = vsel %vm2842, %v3000, %v2996
        %v3002 = vlaneseq
        %v3003 = vshrl.u32 %v3002, 7
        %v3004 = vsub.s32 %v2844, %v3003
        %v3005 = vrot.slane %v2405, %v3004
        %v3006 = vsel %vm2849, %v3005, %v3001
        %v3007 = vlaneseq
        %v3008 = vshrl.u32 %v3007, 7
        %v3009 = vsub.s32 %v420, %v3008
        %v3010 = vrot.slane %v2408, %v3009
        %v3011 = vlaneseq
        %v3012 = vshrl.u32 %v3011, 7
        %v3013 = vsub.s32 %v2802, %v3012
        %v3014 = vrot.slane %v2411, %v3013
        %v3015 = vsel %vm2807, %v3014, %v3010
        %v3016 = vlaneseq
        %v3017 = vshrl.u32 %v3016, 7
        %v3018 = vsub.s32 %v2809, %v3017
        %v3019 = vrot.slane %v2414, %v3018
        %v3020 = vsel %vm2814, %v3019, %v3015
        %v3021 = vlaneseq
        %v3022 = vshrl.u32 %v3021, 7
        %v3023 = vsub.s32 %v2816, %v3022
        %v3024 = vrot.slane %v2417, %v3023
        %v3025 = vsel %vm2821, %v3024, %v3020
        %v3026 = vlaneseq
        %v3027 = vshrl.u32 %v3026, 7
        %v3028 = vsub.s32 %v2823, %v3027
        %v3029 = vrot.slane %v2420, %v3028
        %v3030 = vsel %vm2828, %v3029, %v3025
        %v3031 = vlaneseq
        %v3032 = vshrl.u32 %v3031, 7
        %v3033 = vsub.s32 %v2830, %v3032
        %v3034 = vrot.slane %v2423, %v3033
        %v3035 = vsel %vm2835, %v3034, %v3030
        %v3036 = vlaneseq
        %v3037 = vshrl.u32 %v3036, 7
        %v3038 = vsub.s32 %v2837, %v3037
        %v3039 = vrot.slane %v2426, %v3038
        %v3040 = vsel %vm2842, %v3039, %v3035
        %v3041 = vlaneseq
        %v3042 = vshrl.u32 %v3041, 7
        %v3043 = vsub.s32 %v2844, %v3042
        %v3044 = vrot.slane %v2429, %v3043
        %v3045 = vsel %vm2849, %v3044, %v3040
        %v3046 = vlaneseq
        %v3047 = vshrl.u32 %v3046, 7
        %v3048 = vsub.s32 %v420, %v3047
        %v3049 = vrot.slane %v2432, %v3048
        %v3050 = vlaneseq
        %v3051 = vshrl.u32 %v3050, 7
        %v3052 = vsub.s32 %v2802, %v3051
        %v3053 = vrot.slane %v2435, %v3052
        %v3054 = vsel %vm2807, %v3053, %v3049
        %v3055 = vlaneseq
        %v3056 = vshrl.u32 %v3055, 7
        %v3057 = vsub.s32 %v2809, %v3056
        %v3058 = vrot.slane %v2438, %v3057
        %v3059 = vsel %vm2814, %v3058, %v3054
        %v3060 = vlaneseq
        %v3061 = vshrl.u32 %v3060, 7
        %v3062 = vsub.s32 %v2816, %v3061
        %v3063 = vrot.slane %v2441, %v3062
        %v3064 = vsel %vm2821, %v3063, %v3059
        %v3065 = vlaneseq
        %v3066 = vshrl.u32 %v3065, 7
        %v3067 = vsub.s32 %v2823, %v3066
        %v3068 = vrot.slane %v2444, %v3067
        %v3069 = vsel %vm2828, %v3068, %v3064
        %v3070 = vlaneseq
        %v3071 = vshrl.u32 %v3070, 7
        %v3072 = vsub.s32 %v2830, %v3071
        %v3073 = vrot.slane %v2447, %v3072
        %v3074 = vsel %vm2835, %v3073, %v3069
        %v3075 = vlaneseq
        %v3076 = vshrl.u32 %v3075, 7
        %v3077 = vsub.s32 %v2837, %v3076
        %v3078 = vrot.slane %v2450, %v3077
        %v3079 = vsel %vm2842, %v3078, %v3074
        %v3080 = vlaneseq
        %v3081 = vshrl.u32 %v3080, 7
        %v3082 = vsub.s32 %v2844, %v3081
        %v3083 = vrot.slane %v2453, %v3082
        %v3084 = vsel %vm2849, %v3083, %v3079
        %v3085 = vlaneseq
        %v3086 = vshrl.u32 %v3085, 7
        %v3087 = vsub.s32 %v420, %v3086
        %v3088 = vrot.slane %v2456, %v3087
        %v3089 = vlaneseq
        %v3090 = vshrl.u32 %v3089, 7
        %v3091 = vsub.s32 %v2802, %v3090
        %v3092 = vrot.slane %v2459, %v3091
        %v3093 = vsel %vm2807, %v3092, %v3088
        %v3094 = vlaneseq
        %v3095 = vshrl.u32 %v3094, 7
        %v3096 = vsub.s32 %v2809, %v3095
        %v3097 = vrot.slane %v2462, %v3096
        %v3098 = vsel %vm2814, %v3097, %v3093
        %v3099 = vlaneseq
        %v3100 = vshrl.u32 %v3099, 7
        %v3101 = vsub.s32 %v2816, %v3100
        %v3102 = vrot.slane %v2465, %v3101
        %v3103 = vsel %vm2821, %v3102, %v3098
        %v3104 = vlaneseq
        %v3105 = vshrl.u32 %v3104, 7
        %v3106 = vsub.s32 %v2823, %v3105
        %v3107 = vrot.slane %v2468, %v3106
        %v3108 = vsel %vm2828, %v3107, %v3103
        %v3109 = vlaneseq
        %v3110 = vshrl.u32 %v3109, 7
        %v3111 = vsub.s32 %v2830, %v3110
        %v3112 = vrot.slane %v2471, %v3111
        %v3113 = vsel %vm2835, %v3112, %v3108
        %v3114 = vlaneseq
        %v3115 = vshrl.u32 %v3114, 7
        %v3116 = vsub.s32 %v2837, %v3115
        %v3117 = vrot.slane %v2474, %v3116
        %v3118 = vsel %vm2842, %v3117, %v3113
        %v3119 = vlaneseq
        %v3120 = vshrl.u32 %v3119, 7
        %v3121 = vsub.s32 %v2844, %v3120
        %v3122 = vrot.slane %v2477, %v3121
        %v3123 = vsel %vm2849, %v3122, %v3118
        %v3124 = vlaneseq
        %v3125 = vshrl.u32 %v3124, 7
        %v3126 = vsub.s32 %v420, %v3125
        %v3127 = vrot.slane %v2480, %v3126
        %v3128 = vlaneseq
        %v3129 = vshrl.u32 %v3128, 7
        %v3130 = vsub.s32 %v2802, %v3129
        %v3131 = vrot.slane %v2483, %v3130
        %v3132 = vsel %vm2807, %v3131, %v3127
        %v3133 = vlaneseq
        %v3134 = vshrl.u32 %v3133, 7
        %v3135 = vsub.s32 %v2809, %v3134
        %v3136 = vrot.slane %v2486, %v3135
        %v3137 = vsel %vm2814, %v3136, %v3132
        %v3138 = vlaneseq
        %v3139 = vshrl.u32 %v3138, 7
        %v3140 = vsub.s32 %v2816, %v3139
        %v3141 = vrot.slane %v2489, %v3140
        %v3142 = vsel %vm2821, %v3141, %v3137
        %v3143 = vlaneseq
        %v3144 = vshrl.u32 %v3143, 7
        %v3145 = vsub.s32 %v2823, %v3144
        %v3146 = vrot.slane %v2492, %v3145
        %v3147 = vsel %vm2828, %v3146, %v3142
        %v3148 = vlaneseq
        %v3149 = vshrl.u32 %v3148, 7
        %v3150 = vsub.s32 %v2830, %v3149
        %v3151 = vrot.slane %v2495, %v3150
        %v3152 = vsel %vm2835, %v3151, %v3147
        %v3153 = vlaneseq
        %v3154 = vshrl.u32 %v3153, 7
        %v3155 = vsub.s32 %v2837, %v3154
        %v3156 = vrot.slane %v2498, %v3155
        %v3157 = vsel %vm2842, %v3156, %v3152
        %v3158 = vlaneseq
        %v3159 = vshrl.u32 %v3158, 7
        %v3160 = vsub.s32 %v2844, %v3159
        %v3161 = vrot.slane %v2501, %v3160
        %v3162 = vsel %vm2849, %v3161, %v3157
        %v3163 = vlaneseq
        %v3164 = vshrl.u32 %v3163, 7
        %v3165 = vsub.s32 %v420, %v3164
        %v3166 = vrot.slane %v2504, %v3165
        %v3167 = vlaneseq
        %v3168 = vshrl.u32 %v3167, 7
        %v3169 = vsub.s32 %v2802, %v3168
        %v3170 = vrot.slane %v2507, %v3169
        %v3171 = vsel %vm2807, %v3170, %v3166
        %v3172 = vlaneseq
        %v3173 = vshrl.u32 %v3172, 7
        %v3174 = vsub.s32 %v2809, %v3173
        %v3175 = vrot.slane %v2510, %v3174
        %v3176 = vsel %vm2814, %v3175, %v3171
        %v3177 = vlaneseq
        %v3178 = vshrl.u32 %v3177, 7
        %v3179 = vsub.s32 %v2816, %v3178
        %v3180 = vrot.slane %v2513, %v3179
        %v3181 = vsel %vm2821, %v3180, %v3176
        %v3182 = vlaneseq
        %v3183 = vshrl.u32 %v3182, 7
        %v3184 = vsub.s32 %v2823, %v3183
        %v3185 = vrot.slane %v2516, %v3184
        %v3186 = vsel %vm2828, %v3185, %v3181
        %v3187 = vlaneseq
        %v3188 = vshrl.u32 %v3187, 7
        %v3189 = vsub.s32 %v2830, %v3188
        %v3190 = vrot.slane %v2519, %v3189
        %v3191 = vsel %vm2835, %v3190, %v3186
        %v3192 = vlaneseq
        %v3193 = vshrl.u32 %v3192, 7
        %v3194 = vsub.s32 %v2837, %v3193
        %v3195 = vrot.slane %v2522, %v3194
        %v3196 = vsel %vm2842, %v3195, %v3191
        %v3197 = vlaneseq
        %v3198 = vshrl.u32 %v3197, 7
        %v3199 = vsub.s32 %v2844, %v3198
        %v3200 = vrot.slane %v2525, %v3199
        %v3201 = vsel %vm2849, %v3200, %v3196
        %v3202 = vlaneseq
        %v3203 = vshrl.u32 %v3202, 7
        %v3204 = vsub.s32 %v420, %v3203
        %v3205 = vrot.slane %v2528, %v3204
        %v3206 = vlaneseq
        %v3207 = vshrl.u32 %v3206, 7
        %v3208 = vsub.s32 %v2802, %v3207
        %v3209 = vrot.slane %v2531, %v3208
        %v3210 = vsel %vm2807, %v3209, %v3205
        %v3211 = vlaneseq
        %v3212 = vshrl.u32 %v3211, 7
        %v3213 = vsub.s32 %v2809, %v3212
        %v3214 = vrot.slane %v2534, %v3213
        %v3215 = vsel %vm2814, %v3214, %v3210
        %v3216 = vlaneseq
        %v3217 = vshrl.u32 %v3216, 7
        %v3218 = vsub.s32 %v2816, %v3217
        %v3219 = vrot.slane %v2537, %v3218
        %v3220 = vsel %vm2821, %v3219, %v3215
        %v3221 = vlaneseq
        %v3222 = vshrl.u32 %v3221, 7
        %v3223 = vsub.s32 %v2823, %v3222
        %v3224 = vrot.slane %v2540, %v3223
        %v3225 = vsel %vm2828, %v3224, %v3220
        %v3226 = vlaneseq
        %v3227 = vshrl.u32 %v3226, 7
        %v3228 = vsub.s32 %v2830, %v3227
        %v3229 = vrot.slane %v2543, %v3228
        %v3230 = vsel %vm2835, %v3229, %v3225
        %v3231 = vlaneseq
        %v3232 = vshrl.u32 %v3231, 7
        %v3233 = vsub.s32 %v2837, %v3232
        %v3234 = vrot.slane %v2546, %v3233
        %v3235 = vsel %vm2842, %v3234, %v3230
        %v3236 = vlaneseq
        %v3237 = vshrl.u32 %v3236, 7
        %v3238 = vsub.s32 %v2844, %v3237
        %v3239 = vrot.slane %v2549, %v3238
        %v3240 = vsel %vm2849, %v3239, %v3235
        %v3241 = vlaneseq
        %v3242 = vshrl.u32 %v3241, 7
        %v3243 = vsub.s32 %v420, %v3242
        %v3244 = vrot.slane %v2552, %v3243
        %v3245 = vlaneseq
        %v3246 = vshrl.u32 %v3245, 7
        %v3247 = vsub.s32 %v2802, %v3246
        %v3248 = vrot.slane %v2555, %v3247
        %v3249 = vsel %vm2807, %v3248, %v3244
        %v3250 = vlaneseq
        %v3251 = vshrl.u32 %v3250, 7
        %v3252 = vsub.s32 %v2809, %v3251
        %v3253 = vrot.slane %v2558, %v3252
        %v3254 = vsel %vm2814, %v3253, %v3249
        %v3255 = vlaneseq
        %v3256 = vshrl.u32 %v3255, 7
        %v3257 = vsub.s32 %v2816, %v3256
        %v3258 = vrot.slane %v2561, %v3257
        %v3259 = vsel %vm2821, %v3258, %v3254
        %v3260 = vlaneseq
        %v3261 = vshrl.u32 %v3260, 7
        %v3262 = vsub.s32 %v2823, %v3261
        %v3263 = vrot.slane %v2564, %v3262
        %v3264 = vsel %vm2828, %v3263, %v3259
        %v3265 = vlaneseq
        %v3266 = vshrl.u32 %v3265, 7
        %v3267 = vsub.s32 %v2830, %v3266
        %v3268 = vrot.slane %v2567, %v3267
        %v3269 = vsel %vm2835, %v3268, %v3264
        %v3270 = vlaneseq
        %v3271 = vshrl.u32 %v3270, 7
        %v3272 = vsub.s32 %v2837, %v3271
        %v3273 = vrot.slane %v2570, %v3272
        %v3274 = vsel %vm2842, %v3273, %v3269
        %v3275 = vlaneseq
        %v3276 = vshrl.u32 %v3275, 7
        %v3277 = vsub.s32 %v2844, %v3276
        %v3278 = vrot.slane %v2573, %v3277
        %v3279 = vsel %vm2849, %v3278, %v3274
        %v3280 = vlaneseq
        %v3281 = vshrl.u32 %v3280, 7
        %v3282 = vsub.s32 %v420, %v3281
        %v3283 = vrot.slane %v2576, %v3282
        %v3284 = vlaneseq
        %v3285 = vshrl.u32 %v3284, 7
        %v3286 = vsub.s32 %v2802, %v3285
        %v3287 = vrot.slane %v2579, %v3286
        %v3288 = vsel %vm2807, %v3287, %v3283
        %v3289 = vlaneseq
        %v3290 = vshrl.u32 %v3289, 7
        %v3291 = vsub.s32 %v2809, %v3290
        %v3292 = vrot.slane %v2582, %v3291
        %v3293 = vsel %vm2814, %v3292, %v3288
        %v3294 = vlaneseq
        %v3295 = vshrl.u32 %v3294, 7
        %v3296 = vsub.s32 %v2816, %v3295
        %v3297 = vrot.slane %v2585, %v3296
        %v3298 = vsel %vm2821, %v3297, %v3293
        %v3299 = vlaneseq
        %v3300 = vshrl.u32 %v3299, 7
        %v3301 = vsub.s32 %v2823, %v3300
        %v3302 = vrot.slane %v2588, %v3301
        %v3303 = vsel %vm2828, %v3302, %v3298
        %v3304 = vlaneseq
        %v3305 = vshrl.u32 %v3304, 7
        %v3306 = vsub.s32 %v2830, %v3305
        %v3307 = vrot.slane %v2591, %v3306
        %v3308 = vsel %vm2835, %v3307, %v3303
        %v3309 = vlaneseq
        %v3310 = vshrl.u32 %v3309, 7
        %v3311 = vsub.s32 %v2837, %v3310
        %v3312 = vrot.slane %v2594, %v3311
        %v3313 = vsel %vm2842, %v3312, %v3308
        %v3314 = vlaneseq
        %v3315 = vshrl.u32 %v3314, 7
        %v3316 = vsub.s32 %v2844, %v3315
        %v3317 = vrot.slane %v2597, %v3316
        %v3318 = vsel %vm2849, %v3317, %v3313
        %v3319 = vlaneseq
        %v3320 = vshrl.u32 %v3319, 7
        %v3321 = vsub.s32 %v420, %v3320
        %v3322 = vrot.slane %v2600, %v3321
        %v3323 = vlaneseq
        %v3324 = vshrl.u32 %v3323, 7
        %v3325 = vsub.s32 %v2802, %v3324
        %v3326 = vrot.slane %v2603, %v3325
        %v3327 = vsel %vm2807, %v3326, %v3322
        %v3328 = vlaneseq
        %v3329 = vshrl.u32 %v3328, 7
        %v3330 = vsub.s32 %v2809, %v3329
        %v3331 = vrot.slane %v2606, %v3330
        %v3332 = vsel %vm2814, %v3331, %v3327
        %v3333 = vlaneseq
        %v3334 = vshrl.u32 %v3333, 7
        %v3335 = vsub.s32 %v2816, %v3334
        %v3336 = vrot.slane %v2609, %v3335
        %v3337 = vsel %vm2821, %v3336, %v3332
        %v3338 = vlaneseq
        %v3339 = vshrl.u32 %v3338, 7
        %v3340 = vsub.s32 %v2823, %v3339
        %v3341 = vrot.slane %v2612, %v3340
        %v3342 = vsel %vm2828, %v3341, %v3337
        %v3343 = vlaneseq
        %v3344 = vshrl.u32 %v3343, 7
        %v3345 = vsub.s32 %v2830, %v3344
        %v3346 = vrot.slane %v2615, %v3345
        %v3347 = vsel %vm2835, %v3346, %v3342
        %v3348 = vlaneseq
        %v3349 = vshrl.u32 %v3348, 7
        %v3350 = vsub.s32 %v2837, %v3349
        %v3351 = vrot.slane %v2618, %v3350
        %v3352 = vsel %vm2842, %v3351, %v3347
        %v3353 = vlaneseq
        %v3354 = vshrl.u32 %v3353, 7
        %v3355 = vsub.s32 %v2844, %v3354
        %v3356 = vrot.slane %v2621, %v3355
        %v3357 = vsel %vm2849, %v3356, %v3352
        %v3358 = vlaneseq
        %v3359 = vshrl.u32 %v3358, 7
        %v3360 = vsub.s32 %v420, %v3359
        %v3361 = vrot.slane %v2624, %v3360
        %v3362 = vlaneseq
        %v3363 = vshrl.u32 %v3362, 7
        %v3364 = vsub.s32 %v2802, %v3363
        %v3365 = vrot.slane %v2627, %v3364
        %v3366 = vsel %vm2807, %v3365, %v3361
        %v3367 = vlaneseq
        %v3368 = vshrl.u32 %v3367, 7
        %v3369 = vsub.s32 %v2809, %v3368
        %v3370 = vrot.slane %v2630, %v3369
        %v3371 = vsel %vm2814, %v3370, %v3366
        %v3372 = vlaneseq
        %v3373 = vshrl.u32 %v3372, 7
        %v3374 = vsub.s32 %v2816, %v3373
        %v3375 = vrot.slane %v2633, %v3374
        %v3376 = vsel %vm2821, %v3375, %v3371
        %v3377 = vlaneseq
        %v3378 = vshrl.u32 %v3377, 7
        %v3379 = vsub.s32 %v2823, %v3378
        %v3380 = vrot.slane %v2636, %v3379
        %v3381 = vsel %vm2828, %v3380, %v3376
        %v3382 = vlaneseq
        %v3383 = vshrl.u32 %v3382, 7
        %v3384 = vsub.s32 %v2830, %v3383
        %v3385 = vrot.slane %v2639, %v3384
        %v3386 = vsel %vm2835, %v3385, %v3381
        %v3387 = vlaneseq
        %v3388 = vshrl.u32 %v3387, 7
        %v3389 = vsub.s32 %v2837, %v3388
        %v3390 = vrot.slane %v2642, %v3389
        %v3391 = vsel %vm2842, %v3390, %v3386
        %v3392 = vlaneseq
        %v3393 = vshrl.u32 %v3392, 7
        %v3394 = vsub.s32 %v2844, %v3393
        %v3395 = vrot.slane %v2645, %v3394
        %v3396 = vsel %vm2849, %v3395, %v3391
        %v3397 = vlaneseq
        %v3398 = vshrl.u32 %v3397, 7
        %v3399 = vsub.s32 %v420, %v3398
        %v3400 = vrot.slane %v2648, %v3399
        %v3401 = vlaneseq
        %v3402 = vshrl.u32 %v3401, 7
        %v3403 = vsub.s32 %v2802, %v3402
        %v3404 = vrot.slane %v2651, %v3403
        %v3405 = vsel %vm2807, %v3404, %v3400
        %v3406 = vlaneseq
        %v3407 = vshrl.u32 %v3406, 7
        %v3408 = vsub.s32 %v2809, %v3407
        %v3409 = vrot.slane %v2654, %v3408
        %v3410 = vsel %vm2814, %v3409, %v3405
        %v3411 = vlaneseq
        %v3412 = vshrl.u32 %v3411, 7
        %v3413 = vsub.s32 %v2816, %v3412
        %v3414 = vrot.slane %v2657, %v3413
        %v3415 = vsel %vm2821, %v3414, %v3410
        %v3416 = vlaneseq
        %v3417 = vshrl.u32 %v3416, 7
        %v3418 = vsub.s32 %v2823, %v3417
        %v3419 = vrot.slane %v2660, %v3418
        %v3420 = vsel %vm2828, %v3419, %v3415
        %v3421 = vlaneseq
        %v3422 = vshrl.u32 %v3421, 7
        %v3423 = vsub.s32 %v2830, %v3422
        %v3424 = vrot.slane %v2663, %v3423
        %v3425 = vsel %vm2835, %v3424, %v3420
        %v3426 = vlaneseq
        %v3427 = vshrl.u32 %v3426, 7
        %v3428 = vsub.s32 %v2837, %v3427
        %v3429 = vrot.slane %v2666, %v3428
        %v3430 = vsel %vm2842, %v3429, %v3425
        %v3431 = vlaneseq
        %v3432 = vshrl.u32 %v3431, 7
        %v3433 = vsub.s32 %v2844, %v3432
        %v3434 = vrot.slane %v2669, %v3433
        %v3435 = vsel %vm2849, %v3434, %v3430
        %vm3436 = vcmask 1041409
        %v3437 = vsel %vm3436, %v2889, %v2850
        %vm3438 = vcmask 1042434
        %v3439 = vsel %vm3438, %v2928, %v3437
        %vm3440 = vcmask 1043459
        %v3441 = vsel %vm3440, %v2967, %v3439
        %vm3442 = vcmask 1044484
        %v3443 = vsel %vm3442, %v3006, %v3441
        %vm3444 = vcmask 1045509
        %v3445 = vsel %vm3444, %v3045, %v3443
        %vm3446 = vcmask 1046534
        %v3447 = vsel %vm3446, %v3084, %v3445
        %vm3448 = vcmask 1047559
        %v3449 = vsel %vm3448, %v3123, %v3447
        %v3450 = vsel %vm3436, %v3201, %v3162
        %v3451 = vsel %vm3438, %v3240, %v3450
        %v3452 = vsel %vm3440, %v3279, %v3451
        %v3453 = vsel %vm3442, %v3318, %v3452
        %v3454 = vsel %vm3444, %v3357, %v3453
        %v3455 = vsel %vm3446, %v3396, %v3454
        %v3456 = vsel %vm3448, %v3435, %v3455
        %v3459 = vsel %vm464, %v3449, 0.0
        %3460 = vadd.xlane.f32.xlu0 %v3459
        %v3461 = vpop.xlane.xlu0 %3460
        %v3462 = vsel %vm464, %v3456, 0.0
        %3463 = vadd.xlane.f32.xlu0 %v3462
        %v3464 = vpop.xlane.xlu0 %3463
        %v3465 = vrsqrt.pop %v3461
        %v3466 = vmul.f32 %v3461, %v3465
        %vm3467 = vcmp.eq.f32.partialorder %v3461, inf
        %v3468 = vsel %vm3467, %v3461, %v3466
        %vm3469 = vcmp.eq.f32.partialorder %v3461, 0.0
        %v3470 = vand.u32 %v3461, 2147483648
        %v3471 = vsel %vm3469, %v3470, %v3468
        %v3472 = vrsqrt.pop %v3464
        %v3473 = vmul.f32 %v3464, %v3472
        %vm3474 = vcmp.eq.f32.partialorder %v3464, inf
        %v3475 = vsel %vm3474, %v3464, %v3473
        %vm3476 = vcmp.eq.f32.partialorder %v3464, 0.0
        %v3477 = vand.u32 %v3464, 2147483648
        %v3478 = vsel %vm3476, %v3477, %v3475
        %v3479 = vmul.f32 %v3471, 0.001
        %v3480 = vmul.f32 %v3478, 0.001
        %v3481 = vadd.f32 %v442, %v3479
        %v3482 = vadd.f32 %v443, %v3480
        %s3483 = smul.u32 %s17, 16
        %v3484 = vstv %s3483
        %v3485 = vadd.s32 %v3484, %v1998
        %v3486 = vadd.s32 %v3484, %v1999
        %vm3487 = vcmp.lt.s32.totalorder %v3485, 20
        %vm3488 = vcmp.lt.s32.totalorder %v3486, 20
        %v3489 = vsel %vm3487, %v3481, 0.0
        %v3490 = vsel %vm3488, %v3482, 0.0
        %v3491 = vadd.f32 %v3489, %v3490
        %v3492 = vrot.slane %v3491, 4
        %v3493 = vadd.f32 %v3491, %v3492
        %v3494 = vrot.slane %v3493, 2
        %v3495 = vadd.f32 %v3493, %v3494
        %v3496 = vrot.slane %v3495, 1
        %v3497 = vadd.f32 %v3495, %v3496
        %vm3498 = vcmask 0
        %3499 = vst.msk [vmem:[%s285] sm:$0x1] %vm3498, %v3497
        %p3500 = scmp.lt.s32.totalorder %s17, 1
        %s3501 = scalar_select %p3500, %s17, 1
        %s3502 = scalar_lea.vmem %s3, %s3501
        // Predicated region
        $region37: #{tpu_custom_call.1} parent=31 // pred_check
          %p3503 = pneg %p113
        $region38: #{tpu_custom_call.1} parent=31 // pred_check_branch
          %3505 = sbr.rel (%p3503) target = $region40
        $region39: #{tpu_custom_call.1} parent=31 // pred_region
          _
        $region40: #{tpu_custom_call.1} parent=31 // pred_fallthru
          _
      $region32: #{tpu_custom_call.1} parent=5 // pred_fallthru
        _
      %p3506 = scmp.le.s32.totalorder 2, %s12
      // Predicated region
      $region41: #{tpu_custom_call.1} parent=5 // pred_check
        %p3507 = pneg %p3506
      $region42: #{tpu_custom_call.1} parent=5 // pred_check_branch
        %3509 = sbr.rel (%p3507) target = $region44
      $region43: #{tpu_custom_call.1} parent=5 // pred_region
        %s3510 = ssub.s32 %s12, 2
        // Predicated region
        $region45: #{tpu_custom_call.1} parent=43 // pred_check
          %p3511 = pneg %p119
        $region46: #{tpu_custom_call.1} parent=43 // pred_check_branch
          %3513 = sbr.rel (%p3511) target = $region48
        $region47: #{tpu_custom_call.1} parent=43 // pred_region
          %p3514 = scmp.lt.s32.totalorder %s18, 1
          %s3515 = scalar_select %p3514, %s18, 1
          %s3516 = scalar_lea.vmem %s3, %s3515
        $region48: #{tpu_custom_call.1} parent=43 // pred_fallthru
          _
      $region44: #{tpu_custom_call.1} parent=5 // pred_fallthru
        _
    $region6: #{tpu_custom_call.1} parent=1 // loop_footer
      %s16 = sadd.s32 1, %s12
    $region7: #{tpu_custom_call.1} parent=1 // loop_footer_branch
      %11 = sbr.rel target = $region3
    $region8: #{tpu_custom_call.1} parent=1 // loop_exit
      _
    %3517 = vsyncpa [#allocation3], 1
    %s3518 = scalar_lea.sflag [#allocation3], 1
    %3519 = vsyncpa %s3518, 1

</llo_original>
